<compile_context>
chip_gen: v7x
topology: tpu7x:2x2x1
jax: 0.10.0
libtpu: 0.0.40
codegen_flags: <defaults>
</compile_context>

<pallas_src>
from functools import partial

import jax
import jax.numpy as jnp
from jax.experimental import pallas as pl
from jax.experimental.pallas import tpu as pltpu


def _round_up(v, m):
    return (v + m - 1) // m * m


def _conv3x3_scale_kernel(x_ref, halo_ref, w_ref, b_ref, o_ref, xbuf, *,
                          wp, sub_rows, ct):
    """One row-slab of the fused conv3x3 + scale.

    x_ref:    (TRW, C_in)        bf16   main slab (tr padded image rows, flattened)
    halo_ref: (4*wp, C_in)       bf16   next 4 padded image rows (vertical halo)
    w_ref:    (9, C_in, Cout_p)  bf16   per-tap weights, scale already folded in
    b_ref:    (1, Cout_p)        f32    bias * scale
    o_ref:    (TRW, Cout_p)      out dtype
    xbuf:     (TRW + 4*wp, C_in) f32    staging scratch (main + halo, contiguous)
    """
    trw = x_ref.shape[0]
    halo_rows = halo_ref.shape[0]
    cout_p = o_ref.shape[1]

    # Stage this block's padded rows (plus the 4-row halo) contiguously in VMEM.
    # f32 staging keeps the 9 odd-offset tap slices below as plain, always
    # supported sublane slices.
    # TODO(synk): switch xbuf to bf16 (dropping the up/down casts) once packed
    # sublane-offset slicing is confirmed on the target Mosaic toolchain.
    xbuf[0:trw, :] = x_ref[...].astype(jnp.float32)
    xbuf[trw:trw + halo_rows, :] = halo_ref[...].astype(jnp.float32)

    # 3x3 conv == 9 shifted matmuls over the flattened padded rows (row stride
    # wp keeps the padding columns, so tap (di, dj) is a shift of di*wp + dj).
    offs = tuple(di * wp + dj for di in range(3) for dj in range(3))

    # Register-accumulated taps: for each (cout tile, row sub-tile) the bias and
    # the nine dots form a single value expression -> no accumulator RMW through
    # VMEM, one store per output sub-tile.
    # TODO(synk): stack the three di taps into one K=3*C_in matmul (3 dots
    # instead of 9) to improve MXU K-fill on v6e/v7x for the small-channel layers.
    for co in range(0, cout_p, ct):
        wt = [w_ref[t, :, co:co + ct] for t in range(9)]
        b_row = b_ref[0:1, co:co + ct]
        for base in range(0, trw, sub_rows):
            off0 = base + offs[0]
            acc = b_row + jnp.dot(
                xbuf[off0:off0 + sub_rows, :].astype(jnp.bfloat16), wt[0],
                preferred_element_type=jnp.float32)
            for t in range(1, 9):
                off = base + offs[t]
                acc = acc + jnp.dot(
                    xbuf[off:off + sub_rows, :].astype(jnp.bfloat16), wt[t],
                    preferred_element_type=jnp.float32)
            o_ref[base:base + sub_rows, co:co + ct] = acc.astype(o_ref.dtype)


def scale_conv2d_forward(x, weight, bias, scale):
    """y = Conv2d(x; weight, bias, stride=1, pad=1) * scale.  NCHW in / NCHW out."""
    n, c_in, h, w = x.shape
    c_out, c_in2, kh, kw = weight.shape
    assert (kh, kw) == (3, 3) and c_in2 == c_in, "realized for 3x3/stride1/pad1 conv"
    # TODO(synk): dedicated path (channel padding / tap stacking) for the
    # first conv layer where c_in == 3 (K=3 badly underfills the MXU).

    wp = _round_up(w + 2, 4)                 # padded row length (conv pad=1), 4-aligned
    cout_p = _round_up(c_out, 128)           # lane-dense output
    halo_img = 4                             # halo rows; 4*wp >= 2*wp + 2 always holds

    # --- VMEM-aware row-block sizing ----------------------------------------
    # Per-step footprint: 2x main input (bf16) + 2x output (f32) + xbuf (f32)
    # scale with tr; halo, weights and bias are fixed.  Target <= 40 MiB so
    # v7x (64 MiB physical VMEM) keeps headroom; v5e/v6e have 128 MiB.
    per_img_row = wp * (2 * c_in * 2 + 2 * cout_p * 4 + c_in * 4)
    fixed = (2 * halo_img * wp * c_in * 2        # halo blocks (bf16, double buffered)
             + 2 * 9 * c_in * cout_p * 2         # resident weights (bf16, x2 buffers)
             + 2 * cout_p * 4                    # bias
             + halo_img * wp * c_in * 4)         # halo part of the staging scratch
    budget = 40 * 1024 * 1024
    tr = max(4, min((budget - fixed) // per_img_row, 1 << 16) // 4 * 4)
    tr = min(tr, _round_up(h, 4))
    h_pad = _round_up(h, tr)
    n_rb = h_pad // tr
    trw = tr * wp
    halo = halo_img * wp

    # Output-channel tile and row sub-tile so each 9-tap accumulation fits vregs.
    ct = 256 if cout_p % 256 == 0 else 128
    divs = [d for d in range(8, trw + 1, 8) if trw % d == 0]
    good = [d for d in divs if d * ct * 4 <= 64 * 1024 and trw // d <= 32]
    if good:
        sub_rows = max(good)                 # largest tile that stays in registers
    else:
        ok = [d for d in divs if trw // d <= 32]   # bound unrolling; may spill a bit
        sub_rows = min(ok) if ok else trw

    vmem_need = fixed + tr * per_img_row
    vmem_limit = int(min(max(vmem_need * 5 // 4, 32 * 1024 * 1024), 64 * 1024 * 1024))

    # --- host-side layout plumbing (single fused transpose+pad+cast pass) ----
    # TODO(synk): keep activations NHWC / bf16 / pre-padded between layers so
    # this pass and the final transpose disappear in a full network.
    x_nhwc = jnp.transpose(x, (0, 2, 3, 1))                       # (N, H, W, Cin)
    xp = jnp.pad(x_nhwc, ((0, 0), (1, h_pad - h + halo_img - 1),
                          (1, wp - w - 1), (0, 0)))
    xp = xp.reshape(n, (h_pad + halo_img) * wp, c_in).astype(jnp.bfloat16)

    # Fold the Scale buffer into the weights and bias (constant registered buffer).
    w_taps = jnp.transpose(weight, (2, 3, 1, 0)).reshape(9, c_in, c_out)
    w_taps = (w_taps * scale).astype(jnp.bfloat16)
    w_taps = jnp.pad(w_taps, ((0, 0), (0, 0), (0, cout_p - c_out)))
    b_row = jnp.pad((bias * scale).astype(jnp.float32).reshape(1, c_out),
                    ((0, 0), (0, cout_p - c_out)))

    kernel = partial(_conv3x3_scale_kernel, wp=wp, sub_rows=sub_rows, ct=ct)

    out = pl.pallas_call(
        kernel,
        out_shape=jax.ShapeDtypeStruct((n, h_pad * wp, cout_p), x.dtype),
        grid_spec=pltpu.PrefetchScalarGridSpec(
            num_scalar_prefetch=0,
            grid=(n, n_rb),
            in_specs=[
                # main slab: tr padded image rows of image b, row-block r
                pl.BlockSpec((None, trw, c_in), lambda b, r: (b, r, 0)),
                # halo slab: the next 4 padded image rows (same array, shifted blocks)
                pl.BlockSpec((None, halo, c_in),
                             lambda b, r: (b, (r + 1) * (tr // halo_img), 0)),
                # all 9 taps resident (constant index map -> no re-DMA)
                # TODO(synk): pipeline_mode=pl.Buffered(1) here to drop the second
                # weight buffer on v7x once verified on the target toolchain.
                pl.BlockSpec((9, c_in, cout_p), lambda b, r: (0, 0, 0)),
                pl.BlockSpec((1, cout_p), lambda b, r: (0, 0)),
            ],
            out_specs=pl.BlockSpec((None, trw, cout_p), lambda b, r: (b, r, 0)),
            scratch_shapes=[
                pltpu.VMEM((trw + halo, c_in), jnp.float32),   # staging (main + halo)
            ],
        ),
        compiler_params=pltpu.CompilerParams(
            dimension_semantics=("parallel", "parallel"),
            vmem_limit_bytes=vmem_limit),
    )(xp, xp, w_taps, b_row)

    # Drop the padded columns/rows/channels, return NCHW to match the module.
    y = out.reshape(n, h_pad, wp, cout_p)[:, :h, :w, :c_out]
    # TODO(synk): emit NHWC (and optionally bf16) if the consuming layer accepts it.
    return jnp.transpose(y, (0, 3, 1, 2))


def _reference(x, weight, bias, scale):
    y = jax.lax.conv_general_dilated(
        x, weight, window_strides=(1, 1), padding=((1, 1), (1, 1)),
        dimension_numbers=("NCHW", "OIHW", "NCHW"))
    return (y + bias.reshape(1, -1, 1, 1)) * scale


if __name__ == "__main__":
    key = jax.random.PRNGKey(0)
    kx, kw_, kb = jax.random.split(key, 3)

    N, C_IN, H, W = 2, 4, 16, 16
    C_OUT = 8
    SCALE = 0.5  # the registered-buffer value

    x = jax.random.normal(kx, (N, C_IN, H, W), jnp.float32)
    weight = jax.random.normal(kw_, (C_OUT, C_IN, 3, 3), jnp.float32) * 0.1
    bias = jax.random.normal(kb, (C_OUT,), jnp.float32) * 0.1

    y = scale_conv2d_forward(x, weight, bias, SCALE)
    y = jax.block_until_ready(y)

    y_ref = _reference(x, weight, bias, SCALE)
    assert y.shape == (N, C_OUT, H, W)
    max_err = float(jnp.max(jnp.abs(y - y_ref)))
    assert jnp.allclose(y, y_ref, atol=5e-2, rtol=5e-2), \
        f"mismatch vs reference (max abs err {max_err})"

    print("KERNEL_OK")
</pallas_src>

<mosaic_0001>
module attributes {stable_mosaic.version = 11 : i64} {
  func.func @_conv3x3_scale_kernel(%arg0: i32, %arg1: i32, %arg2: memref<1x320x4xbf16, #tpu.memory_space<vmem>>, %arg3: memref<1x80x4xbf16, #tpu.memory_space<vmem>>, %arg4: memref<9x4x128xbf16, #tpu.memory_space<vmem>>, %arg5: memref<1x128xf32, #tpu.memory_space<vmem>>, %arg6: memref<1x320x128xf32, #tpu.memory_space<vmem>>, %arg7: memref<400x4xf32, #tpu.memory_space<vmem>>) attributes {dimension_semantics = [#tpu.dimension_semantics<parallel>, #tpu.dimension_semantics<parallel>], iteration_bounds = array<i64: 2, 1>, scalar_prefetch = 0 : i64, scratch_operands = 1 : i64, tpu.core_type = #tpu.core_type<tc>, window_params = [{transform_indices = @transform_0, window_bounds = array<i64: 1, 320, 4>}, {transform_indices = @transform_1, window_bounds = array<i64: 1, 80, 4>}, {pipeline_mode = #tpu.pipeline_mode<synchronous>, transform_indices = @transform_2, window_bounds = array<i64: 9, 4, 128>}, {pipeline_mode = #tpu.pipeline_mode<synchronous>, transform_indices = @transform_3, window_bounds = array<i64: 1, 128>}, {transform_indices = @transform_4, window_bounds = array<i64: 1, 320, 128>}]} {
    %c0 = arith.constant 0 : index
    %c0_0 = arith.constant 0 : index
    %c0_1 = arith.constant 0 : index
    %0 = vector.load %arg2[%c0, %c0_0, %c0_1] : memref<1x320x4xbf16, #tpu.memory_space<vmem>>, vector<1x320x4xbf16>
    %1 = vector.shape_cast %0 : vector<1x320x4xbf16> to vector<320x4xbf16>
    %2 = arith.extf %1 : vector<320x4xbf16> to vector<320x4xf32>
    %c0_2 = arith.constant 0 : index
    %c0_3 = arith.constant 0 : index
    %3 = vector.load %arg7[%c0_2, %c0_3] : memref<400x4xf32, #tpu.memory_space<vmem>>, vector<320x4xf32>
    tpu.vector_store %arg7[%c0_2, %c0_3], %2 {strides = array<i32>} : memref<400x4xf32, #tpu.memory_space<vmem>>, vector<320x4xf32>,
    %c0_4 = arith.constant 0 : index
    %c0_5 = arith.constant 0 : index
    %c0_6 = arith.constant 0 : index
    %4 = vector.load %arg3[%c0_4, %c0_5, %c0_6] : memref<1x80x4xbf16, #tpu.memory_space<vmem>>, vector<1x80x4xbf16>
    %5 = vector.shape_cast %4 : vector<1x80x4xbf16> to vector<80x4xbf16>
    %6 = arith.extf %5 : vector<80x4xbf16> to vector<80x4xf32>
    %c320 = arith.constant 320 : index
    %c0_7 = arith.constant 0 : index
    %7 = vector.load %arg7[%c320, %c0_7] : memref<400x4xf32, #tpu.memory_space<vmem>>, vector<80x4xf32>
    tpu.vector_store %arg7[%c320, %c0_7], %6 {strides = array<i32>} : memref<400x4xf32, #tpu.memory_space<vmem>>, vector<80x4xf32>,
    %c0_8 = arith.constant 0 : index
    %c0_9 = arith.constant 0 : index
    %c0_10 = arith.constant 0 : index
    %8 = vector.load %arg4[%c0_8, %c0_9, %c0_10] : memref<9x4x128xbf16, #tpu.memory_space<vmem>>, vector<1x4x128xbf16>
    %9 = vector.shape_cast %8 : vector<1x4x128xbf16> to vector<4x128xbf16>
    %c1 = arith.constant 1 : index
    %c0_11 = arith.constant 0 : index
    %c0_12 = arith.constant 0 : index
    %10 = vector.load %arg4[%c1, %c0_11, %c0_12] : memref<9x4x128xbf16, #tpu.memory_space<vmem>>, vector<1x4x128xbf16>
    %11 = vector.shape_cast %10 : vector<1x4x128xbf16> to vector<4x128xbf16>
    %c2 = arith.constant 2 : index
    %c0_13 = arith.constant 0 : index
    %c0_14 = arith.constant 0 : index
    %12 = vector.load %arg4[%c2, %c0_13, %c0_14] : memref<9x4x128xbf16, #tpu.memory_space<vmem>>, vector<1x4x128xbf16>
    %13 = vector.shape_cast %12 : vector<1x4x128xbf16> to vector<4x128xbf16>
    %c3 = arith.constant 3 : index
    %c0_15 = arith.constant 0 : index
    %c0_16 = arith.constant 0 : index
    %14 = vector.load %arg4[%c3, %c0_15, %c0_16] : memref<9x4x128xbf16, #tpu.memory_space<vmem>>, vector<1x4x128xbf16>
    %15 = vector.shape_cast %14 : vector<1x4x128xbf16> to vector<4x128xbf16>
    %c4 = arith.constant 4 : index
    %c0_17 = arith.constant 0 : index
    %c0_18 = arith.constant 0 : index
    %16 = vector.load %arg4[%c4, %c0_17, %c0_18] : memref<9x4x128xbf16, #tpu.memory_space<vmem>>, vector<1x4x128xbf16>
    %17 = vector.shape_cast %16 : vector<1x4x128xbf16> to vector<4x128xbf16>
    %c5 = arith.constant 5 : index
    %c0_19 = arith.constant 0 : index
    %c0_20 = arith.constant 0 : index
    %18 = vector.load %arg4[%c5, %c0_19, %c0_20] : memref<9x4x128xbf16, #tpu.memory_space<vmem>>, vector<1x4x128xbf16>
    %19 = vector.shape_cast %18 : vector<1x4x128xbf16> to vector<4x128xbf16>
    %c6 = arith.constant 6 : index
    %c0_21 = arith.constant 0 : index
    %c0_22 = arith.constant 0 : index
    %20 = vector.load %arg4[%c6, %c0_21, %c0_22] : memref<9x4x128xbf16, #tpu.memory_space<vmem>>, vector<1x4x128xbf16>
    %21 = vector.shape_cast %20 : vector<1x4x128xbf16> to vector<4x128xbf16>
    %c7 = arith.constant 7 : index
    %c0_23 = arith.constant 0 : index
    %c0_24 = arith.constant 0 : index
    %22 = vector.load %arg4[%c7, %c0_23, %c0_24] : memref<9x4x128xbf16, #tpu.memory_space<vmem>>, vector<1x4x128xbf16>
    %23 = vector.shape_cast %22 : vector<1x4x128xbf16> to vector<4x128xbf16>
    %c8 = arith.constant 8 : index
    %c0_25 = arith.constant 0 : index
    %c0_26 = arith.constant 0 : index
    %24 = vector.load %arg4[%c8, %c0_25, %c0_26] : memref<9x4x128xbf16, #tpu.memory_space<vmem>>, vector<1x4x128xbf16>
    %25 = vector.shape_cast %24 : vector<1x4x128xbf16> to vector<4x128xbf16>
    %c0_27 = arith.constant 0 : index
    %c0_28 = arith.constant 0 : index
    %26 = vector.load %arg5[%c0_27, %c0_28] : memref<1x128xf32, #tpu.memory_space<vmem>>, vector<1x128xf32>
    %c0_29 = arith.constant 0 : index
    %c0_30 = arith.constant 0 : index
    %27 = vector.load %arg7[%c0_29, %c0_30] : memref<400x4xf32, #tpu.memory_space<vmem>>, vector<80x4xf32>
    %28 = arith.truncf %27 : vector<80x4xf32> to vector<80x4xbf16>
    %cst = arith.constant dense<0.000000e+00> : vector<80x128xf32>
    %29 = tpu.matmul %28, %9, %cst {dimension_numbers = #tpu.dot_dimension_numbers<[1], [0], [0], [1], [0, 0, 1, 1], [], []>} : vector<80x4xbf16>, vector<4x128xbf16>, vector<80x128xf32> -> vector<80x128xf32>
    %30 = vector.broadcast %26 : vector<1x128xf32> to vector<80x128xf32>
    %31 = arith.addf %30, %29 : vector<80x128xf32>
    %c1_31 = arith.constant 1 : index
    %c0_32 = arith.constant 0 : index
    %32 = vector.load %arg7[%c1_31, %c0_32] : memref<400x4xf32, #tpu.memory_space<vmem>>, vector<80x4xf32>
    %33 = arith.truncf %32 : vector<80x4xf32> to vector<80x4xbf16>
    %cst_33 = arith.constant dense<0.000000e+00> : vector<80x128xf32>
    %34 = tpu.matmul %33, %11, %cst_33 {dimension_numbers = #tpu.dot_dimension_numbers<[1], [0], [0], [1], [0, 0, 1, 1], [], []>} : vector<80x4xbf16>, vector<4x128xbf16>, vector<80x128xf32> -> vector<80x128xf32>
    %35 = arith.addf %31, %34 : vector<80x128xf32>
    %c2_34 = arith.constant 2 : index
    %c0_35 = arith.constant 0 : index
    %36 = vector.load %arg7[%c2_34, %c0_35] : memref<400x4xf32, #tpu.memory_space<vmem>>, vector<80x4xf32>
    %37 = arith.truncf %36 : vector<80x4xf32> to vector<80x4xbf16>
    %cst_36 = arith.constant dense<0.000000e+00> : vector<80x128xf32>
    %38 = tpu.matmul %37, %13, %cst_36 {dimension_numbers = #tpu.dot_dimension_numbers<[1], [0], [0], [1], [0, 0, 1, 1], [], []>} : vector<80x4xbf16>, vector<4x128xbf16>, vector<80x128xf32> -> vector<80x128xf32>
    %39 = arith.addf %35, %38 : vector<80x128xf32>
    %c20 = arith.constant 20 : index
    %c0_37 = arith.constant 0 : index
    %40 = vector.load %arg7[%c20, %c0_37] : memref<400x4xf32, #tpu.memory_space<vmem>>, vector<80x4xf32>
    %41 = arith.truncf %40 : vector<80x4xf32> to vector<80x4xbf16>
    %cst_38 = arith.constant dense<0.000000e+00> : vector<80x128xf32>
    %42 = tpu.matmul %41, %15, %cst_38 {dimension_numbers = #tpu.dot_dimension_numbers<[1], [0], [0], [1], [0, 0, 1, 1], [], []>} : vector<80x4xbf16>, vector<4x128xbf16>, vector<80x128xf32> -> vector<80x128xf32>
    %43 = arith.addf %39, %42 : vector<80x128xf32>
    %c21 = arith.constant 21 : index
    %c0_39 = arith.constant 0 : index
    %44 = vector.load %arg7[%c21, %c0_39] : memref<400x4xf32, #tpu.memory_space<vmem>>, vector<80x4xf32>
    %45 = arith.truncf %44 : vector<80x4xf32> to vector<80x4xbf16>
    %cst_40 = arith.constant dense<0.000000e+00> : vector<80x128xf32>
    %46 = tpu.matmul %45, %17, %cst_40 {dimension_numbers = #tpu.dot_dimension_numbers<[1], [0], [0], [1], [0, 0, 1, 1], [], []>} : vector<80x4xbf16>, vector<4x128xbf16>, vector<80x128xf32> -> vector<80x128xf32>
    %47 = arith.addf %43, %46 : vector<80x128xf32>
    %c22 = arith.constant 22 : index
    %c0_41 = arith.constant 0 : index
    %48 = vector.load %arg7[%c22, %c0_41] : memref<400x4xf32, #tpu.memory_space<vmem>>, vector<80x4xf32>
    %49 = arith.truncf %48 : vector<80x4xf32> to vector<80x4xbf16>
    %cst_42 = arith.constant dense<0.000000e+00> : vector<80x128xf32>
    %50 = tpu.matmul %49, %19, %cst_42 {dimension_numbers = #tpu.dot_dimension_numbers<[1], [0], [0], [1], [0, 0, 1, 1], [], []>} : vector<80x4xbf16>, vector<4x128xbf16>, vector<80x128xf32> -> vector<80x128xf32>
    %51 = arith.addf %47, %50 : vector<80x128xf32>
    %c40 = arith.constant 40 : index
    %c0_43 = arith.constant 0 : index
    %52 = vector.load %arg7[%c40, %c0_43] : memref<400x4xf32, #tpu.memory_space<vmem>>, vector<80x4xf32>
    %53 = arith.truncf %52 : vector<80x4xf32> to vector<80x4xbf16>
    %cst_44 = arith.constant dense<0.000000e+00> : vector<80x128xf32>
    %54 = tpu.matmul %53, %21, %cst_44 {dimension_numbers = #tpu.dot_dimension_numbers<[1], [0], [0], [1], [0, 0, 1, 1], [], []>} : vector<80x4xbf16>, vector<4x128xbf16>, vector<80x128xf32> -> vector<80x128xf32>
    %55 = arith.addf %51, %54 : vector<80x128xf32>
    %c41 = arith.constant 41 : index
    %c0_45 = arith.constant 0 : index
    %56 = vector.load %arg7[%c41, %c0_45] : memref<400x4xf32, #tpu.memory_space<vmem>>, vector<80x4xf32>
    %57 = arith.truncf %56 : vector<80x4xf32> to vector<80x4xbf16>
    %cst_46 = arith.constant dense<0.000000e+00> : vector<80x128xf32>
    %58 = tpu.matmul %57, %23, %cst_46 {dimension_numbers = #tpu.dot_dimension_numbers<[1], [0], [0], [1], [0, 0, 1, 1], [], []>} : vector<80x4xbf16>, vector<4x128xbf16>, vector<80x128xf32> -> vector<80x128xf32>
    %59 = arith.addf %55, %58 : vector<80x128xf32>
    %c42 = arith.constant 42 : index
    %c0_47 = arith.constant 0 : index
    %60 = vector.load %arg7[%c42, %c0_47] : memref<400x4xf32, #tpu.memory_space<vmem>>, vector<80x4xf32>
    %61 = arith.truncf %60 : vector<80x4xf32> to vector<80x4xbf16>
    %cst_48 = arith.constant dense<0.000000e+00> : vector<80x128xf32>
    %62 = tpu.matmul %61, %25, %cst_48 {dimension_numbers = #tpu.dot_dimension_numbers<[1], [0], [0], [1], [0, 0, 1, 1], [], []>} : vector<80x4xbf16>, vector<4x128xbf16>, vector<80x128xf32> -> vector<80x128xf32>
    %63 = arith.addf %59, %62 : vector<80x128xf32>
    %c0_49 = arith.constant 0 : index
    %c0_50 = arith.constant 0 : index
    %c0_51 = arith.constant 0 : index
    %64 = vector.load %arg6[%c0_49, %c0_50, %c0_51] : memref<1x320x128xf32, #tpu.memory_space<vmem>>, vector<1x80x128xf32>
    %65 = vector.shape_cast %64 : vector<1x80x128xf32> to vector<80x128xf32>
    %66 = vector.shape_cast %63 : vector<80x128xf32> to vector<1x80x128xf32>
    tpu.vector_store %arg6[%c0_49, %c0_50, %c0_51], %66 {strides = array<i32>} : memref<1x320x128xf32, #tpu.memory_space<vmem>>, vector<1x80x128xf32>,
    %c80 = arith.constant 80 : index
    %c0_52 = arith.constant 0 : index
    %67 = vector.load %arg7[%c80, %c0_52] : memref<400x4xf32, #tpu.memory_space<vmem>>, vector<80x4xf32>
    %68 = arith.truncf %67 : vector<80x4xf32> to vector<80x4xbf16>
    %cst_53 = arith.constant dense<0.000000e+00> : vector<80x128xf32>
    %69 = tpu.matmul %68, %9, %cst_53 {dimension_numbers = #tpu.dot_dimension_numbers<[1], [0], [0], [1], [0, 0, 1, 1], [], []>} : vector<80x4xbf16>, vector<4x128xbf16>, vector<80x128xf32> -> vector<80x128xf32>
    %70 = vector.broadcast %26 : vector<1x128xf32> to vector<80x128xf32>
    %71 = arith.addf %70, %69 : vector<80x128xf32>
    %c81 = arith.constant 81 : index
    %c0_54 = arith.constant 0 : index
    %72 = vector.load %arg7[%c81, %c0_54] : memref<400x4xf32, #tpu.memory_space<vmem>>, vector<80x4xf32>
    %73 = arith.truncf %72 : vector<80x4xf32> to vector<80x4xbf16>
    %cst_55 = arith.constant dense<0.000000e+00> : vector<80x128xf32>
    %74 = tpu.matmul %73, %11, %cst_55 {dimension_numbers = #tpu.dot_dimension_numbers<[1], [0], [0], [1], [0, 0, 1, 1], [], []>} : vector<80x4xbf16>, vector<4x128xbf16>, vector<80x128xf32> -> vector<80x128xf32>
    %75 = arith.addf %71, %74 : vector<80x128xf32>
    %c82 = arith.constant 82 : index
    %c0_56 = arith.constant 0 : index
    %76 = vector.load %arg7[%c82, %c0_56] : memref<400x4xf32, #tpu.memory_space<vmem>>, vector<80x4xf32>
    %77 = arith.truncf %76 : vector<80x4xf32> to vector<80x4xbf16>
    %cst_57 = arith.constant dense<0.000000e+00> : vector<80x128xf32>
    %78 = tpu.matmul %77, %13, %cst_57 {dimension_numbers = #tpu.dot_dimension_numbers<[1], [0], [0], [1], [0, 0, 1, 1], [], []>} : vector<80x4xbf16>, vector<4x128xbf16>, vector<80x128xf32> -> vector<80x128xf32>
    %79 = arith.addf %75, %78 : vector<80x128xf32>
    %c100 = arith.constant 100 : index
    %c0_58 = arith.constant 0 : index
    %80 = vector.load %arg7[%c100, %c0_58] : memref<400x4xf32, #tpu.memory_space<vmem>>, vector<80x4xf32>
    %81 = arith.truncf %80 : vector<80x4xf32> to vector<80x4xbf16>
    %cst_59 = arith.constant dense<0.000000e+00> : vector<80x128xf32>
    %82 = tpu.matmul %81, %15, %cst_59 {dimension_numbers = #tpu.dot_dimension_numbers<[1], [0], [0], [1], [0, 0, 1, 1], [], []>} : vector<80x4xbf16>, vector<4x128xbf16>, vector<80x128xf32> -> vector<80x128xf32>
    %83 = arith.addf %79, %82 : vector<80x128xf32>
    %c101 = arith.constant 101 : index
    %c0_60 = arith.constant 0 : index
    %84 = vector.load %arg7[%c101, %c0_60] : memref<400x4xf32, #tpu.memory_space<vmem>>, vector<80x4xf32>
    %85 = arith.truncf %84 : vector<80x4xf32> to vector<80x4xbf16>
    %cst_61 = arith.constant dense<0.000000e+00> : vector<80x128xf32>
    %86 = tpu.matmul %85, %17, %cst_61 {dimension_numbers = #tpu.dot_dimension_numbers<[1], [0], [0], [1], [0, 0, 1, 1], [], []>} : vector<80x4xbf16>, vector<4x128xbf16>, vector<80x128xf32> -> vector<80x128xf32>
    %87 = arith.addf %83, %86 : vector<80x128xf32>
    %c102 = arith.constant 102 : index
    %c0_62 = arith.constant 0 : index
    %88 = vector.load %arg7[%c102, %c0_62] : memref<400x4xf32, #tpu.memory_space<vmem>>, vector<80x4xf32>
    %89 = arith.truncf %88 : vector<80x4xf32> to vector<80x4xbf16>
    %cst_63 = arith.constant dense<0.000000e+00> : vector<80x128xf32>
    %90 = tpu.matmul %89, %19, %cst_63 {dimension_numbers = #tpu.dot_dimension_numbers<[1], [0], [0], [1], [0, 0, 1, 1], [], []>} : vector<80x4xbf16>, vector<4x128xbf16>, vector<80x128xf32> -> vector<80x128xf32>
    %91 = arith.addf %87, %90 : vector<80x128xf32>
    %c120 = arith.constant 120 : index
    %c0_64 = arith.constant 0 : index
    %92 = vector.load %arg7[%c120, %c0_64] : memref<400x4xf32, #tpu.memory_space<vmem>>, vector<80x4xf32>
    %93 = arith.truncf %92 : vector<80x4xf32> to vector<80x4xbf16>
    %cst_65 = arith.constant dense<0.000000e+00> : vector<80x128xf32>
    %94 = tpu.matmul %93, %21, %cst_65 {dimension_numbers = #tpu.dot_dimension_numbers<[1], [0], [0], [1], [0, 0, 1, 1], [], []>} : vector<80x4xbf16>, vector<4x128xbf16>, vector<80x128xf32> -> vector<80x128xf32>
    %95 = arith.addf %91, %94 : vector<80x128xf32>
    %c121 = arith.constant 121 : index
    %c0_66 = arith.constant 0 : index
    %96 = vector.load %arg7[%c121, %c0_66] : memref<400x4xf32, #tpu.memory_space<vmem>>, vector<80x4xf32>
    %97 = arith.truncf %96 : vector<80x4xf32> to vector<80x4xbf16>
    %cst_67 = arith.constant dense<0.000000e+00> : vector<80x128xf32>
    %98 = tpu.matmul %97, %23, %cst_67 {dimension_numbers = #tpu.dot_dimension_numbers<[1], [0], [0], [1], [0, 0, 1, 1], [], []>} : vector<80x4xbf16>, vector<4x128xbf16>, vector<80x128xf32> -> vector<80x128xf32>
    %99 = arith.addf %95, %98 : vector<80x128xf32>
    %c122 = arith.constant 122 : index
    %c0_68 = arith.constant 0 : index
    %100 = vector.load %arg7[%c122, %c0_68] : memref<400x4xf32, #tpu.memory_space<vmem>>, vector<80x4xf32>
    %101 = arith.truncf %100 : vector<80x4xf32> to vector<80x4xbf16>
    %cst_69 = arith.constant dense<0.000000e+00> : vector<80x128xf32>
    %102 = tpu.matmul %101, %25, %cst_69 {dimension_numbers = #tpu.dot_dimension_numbers<[1], [0], [0], [1], [0, 0, 1, 1], [], []>} : vector<80x4xbf16>, vector<4x128xbf16>, vector<80x128xf32> -> vector<80x128xf32>
    %103 = arith.addf %99, %102 : vector<80x128xf32>
    %c0_70 = arith.constant 0 : index
    %c80_71 = arith.constant 80 : index
    %c0_72 = arith.constant 0 : index
    %104 = vector.load %arg6[%c0_70, %c80_71, %c0_72] : memref<1x320x128xf32, #tpu.memory_space<vmem>>, vector<1x80x128xf32>
    %105 = vector.shape_cast %104 : vector<1x80x128xf32> to vector<80x128xf32>
    %106 = vector.shape_cast %103 : vector<80x128xf32> to vector<1x80x128xf32>
    tpu.vector_store %arg6[%c0_70, %c80_71, %c0_72], %106 {strides = array<i32>} : memref<1x320x128xf32, #tpu.memory_space<vmem>>, vector<1x80x128xf32>,
    %c160 = arith.constant 160 : index
    %c0_73 = arith.constant 0 : index
    %107 = vector.load %arg7[%c160, %c0_73] : memref<400x4xf32, #tpu.memory_space<vmem>>, vector<80x4xf32>
    %108 = arith.truncf %107 : vector<80x4xf32> to vector<80x4xbf16>
    %cst_74 = arith.constant dense<0.000000e+00> : vector<80x128xf32>
    %109 = tpu.matmul %108, %9, %cst_74 {dimension_numbers = #tpu.dot_dimension_numbers<[1], [0], [0], [1], [0, 0, 1, 1], [], []>} : vector<80x4xbf16>, vector<4x128xbf16>, vector<80x128xf32> -> vector<80x128xf32>
    %110 = vector.broadcast %26 : vector<1x128xf32> to vector<80x128xf32>
    %111 = arith.addf %110, %109 : vector<80x128xf32>
    %c161 = arith.constant 161 : index
    %c0_75 = arith.constant 0 : index
    %112 = vector.load %arg7[%c161, %c0_75] : memref<400x4xf32, #tpu.memory_space<vmem>>, vector<80x4xf32>
    %113 = arith.truncf %112 : vector<80x4xf32> to vector<80x4xbf16>
    %cst_76 = arith.constant dense<0.000000e+00> : vector<80x128xf32>
    %114 = tpu.matmul %113, %11, %cst_76 {dimension_numbers = #tpu.dot_dimension_numbers<[1], [0], [0], [1], [0, 0, 1, 1], [], []>} : vector<80x4xbf16>, vector<4x128xbf16>, vector<80x128xf32> -> vector<80x128xf32>
    %115 = arith.addf %111, %114 : vector<80x128xf32>
    %c162 = arith.constant 162 : index
    %c0_77 = arith.constant 0 : index
    %116 = vector.load %arg7[%c162, %c0_77] : memref<400x4xf32, #tpu.memory_space<vmem>>, vector<80x4xf32>
    %117 = arith.truncf %116 : vector<80x4xf32> to vector<80x4xbf16>
    %cst_78 = arith.constant dense<0.000000e+00> : vector<80x128xf32>
    %118 = tpu.matmul %117, %13, %cst_78 {dimension_numbers = #tpu.dot_dimension_numbers<[1], [0], [0], [1], [0, 0, 1, 1], [], []>} : vector<80x4xbf16>, vector<4x128xbf16>, vector<80x128xf32> -> vector<80x128xf32>
    %119 = arith.addf %115, %118 : vector<80x128xf32>
    %c180 = arith.constant 180 : index
    %c0_79 = arith.constant 0 : index
    %120 = vector.load %arg7[%c180, %c0_79] : memref<400x4xf32, #tpu.memory_space<vmem>>, vector<80x4xf32>
    %121 = arith.truncf %120 : vector<80x4xf32> to vector<80x4xbf16>
    %cst_80 = arith.constant dense<0.000000e+00> : vector<80x128xf32>
    %122 = tpu.matmul %121, %15, %cst_80 {dimension_numbers = #tpu.dot_dimension_numbers<[1], [0], [0], [1], [0, 0, 1, 1], [], []>} : vector<80x4xbf16>, vector<4x128xbf16>, vector<80x128xf32> -> vector<80x128xf32>
    %123 = arith.addf %119, %122 : vector<80x128xf32>
    %c181 = arith.constant 181 : index
    %c0_81 = arith.constant 0 : index
    %124 = vector.load %arg7[%c181, %c0_81] : memref<400x4xf32, #tpu.memory_space<vmem>>, vector<80x4xf32>
    %125 = arith.truncf %124 : vector<80x4xf32> to vector<80x4xbf16>
    %cst_82 = arith.constant dense<0.000000e+00> : vector<80x128xf32>
    %126 = tpu.matmul %125, %17, %cst_82 {dimension_numbers = #tpu.dot_dimension_numbers<[1], [0], [0], [1], [0, 0, 1, 1], [], []>} : vector<80x4xbf16>, vector<4x128xbf16>, vector<80x128xf32> -> vector<80x128xf32>
    %127 = arith.addf %123, %126 : vector<80x128xf32>
    %c182 = arith.constant 182 : index
    %c0_83 = arith.constant 0 : index
    %128 = vector.load %arg7[%c182, %c0_83] : memref<400x4xf32, #tpu.memory_space<vmem>>, vector<80x4xf32>
    %129 = arith.truncf %128 : vector<80x4xf32> to vector<80x4xbf16>
    %cst_84 = arith.constant dense<0.000000e+00> : vector<80x128xf32>
    %130 = tpu.matmul %129, %19, %cst_84 {dimension_numbers = #tpu.dot_dimension_numbers<[1], [0], [0], [1], [0, 0, 1, 1], [], []>} : vector<80x4xbf16>, vector<4x128xbf16>, vector<80x128xf32> -> vector<80x128xf32>
    %131 = arith.addf %127, %130 : vector<80x128xf32>
    %c200 = arith.constant 200 : index
    %c0_85 = arith.constant 0 : index
    %132 = vector.load %arg7[%c200, %c0_85] : memref<400x4xf32, #tpu.memory_space<vmem>>, vector<80x4xf32>
    %133 = arith.truncf %132 : vector<80x4xf32> to vector<80x4xbf16>
    %cst_86 = arith.constant dense<0.000000e+00> : vector<80x128xf32>
    %134 = tpu.matmul %133, %21, %cst_86 {dimension_numbers = #tpu.dot_dimension_numbers<[1], [0], [0], [1], [0, 0, 1, 1], [], []>} : vector<80x4xbf16>, vector<4x128xbf16>, vector<80x128xf32> -> vector<80x128xf32>
    %135 = arith.addf %131, %134 : vector<80x128xf32>
    %c201 = arith.constant 201 : index
    %c0_87 = arith.constant 0 : index
    %136 = vector.load %arg7[%c201, %c0_87] : memref<400x4xf32, #tpu.memory_space<vmem>>, vector<80x4xf32>
    %137 = arith.truncf %136 : vector<80x4xf32> to vector<80x4xbf16>
    %cst_88 = arith.constant dense<0.000000e+00> : vector<80x128xf32>
    %138 = tpu.matmul %137, %23, %cst_88 {dimension_numbers = #tpu.dot_dimension_numbers<[1], [0], [0], [1], [0, 0, 1, 1], [], []>} : vector<80x4xbf16>, vector<4x128xbf16>, vector<80x128xf32> -> vector<80x128xf32>
    %139 = arith.addf %135, %138 : vector<80x128xf32>
    %c202 = arith.constant 202 : index
    %c0_89 = arith.constant 0 : index
    %140 = vector.load %arg7[%c202, %c0_89] : memref<400x4xf32, #tpu.memory_space<vmem>>, vector<80x4xf32>
    %141 = arith.truncf %140 : vector<80x4xf32> to vector<80x4xbf16>
    %cst_90 = arith.constant dense<0.000000e+00> : vector<80x128xf32>
    %142 = tpu.matmul %141, %25, %cst_90 {dimension_numbers = #tpu.dot_dimension_numbers<[1], [0], [0], [1], [0, 0, 1, 1], [], []>} : vector<80x4xbf16>, vector<4x128xbf16>, vector<80x128xf32> -> vector<80x128xf32>
    %143 = arith.addf %139, %142 : vector<80x128xf32>
    %c0_91 = arith.constant 0 : index
    %c160_92 = arith.constant 160 : index
    %c0_93 = arith.constant 0 : index
    %144 = vector.load %arg6[%c0_91, %c160_92, %c0_93] : memref<1x320x128xf32, #tpu.memory_space<vmem>>, vector<1x80x128xf32>
    %145 = vector.shape_cast %144 : vector<1x80x128xf32> to vector<80x128xf32>
    %146 = vector.shape_cast %143 : vector<80x128xf32> to vector<1x80x128xf32>
    tpu.vector_store %arg6[%c0_91, %c160_92, %c0_93], %146 {strides = array<i32>} : memref<1x320x128xf32, #tpu.memory_space<vmem>>, vector<1x80x128xf32>,
    %c240 = arith.constant 240 : index
    %c0_94 = arith.constant 0 : index
    %147 = vector.load %arg7[%c240, %c0_94] : memref<400x4xf32, #tpu.memory_space<vmem>>, vector<80x4xf32>
    %148 = arith.truncf %147 : vector<80x4xf32> to vector<80x4xbf16>
    %cst_95 = arith.constant dense<0.000000e+00> : vector<80x128xf32>
    %149 = tpu.matmul %148, %9, %cst_95 {dimension_numbers = #tpu.dot_dimension_numbers<[1], [0], [0], [1], [0, 0, 1, 1], [], []>} : vector<80x4xbf16>, vector<4x128xbf16>, vector<80x128xf32> -> vector<80x128xf32>
    %150 = vector.broadcast %26 : vector<1x128xf32> to vector<80x128xf32>
    %151 = arith.addf %150, %149 : vector<80x128xf32>
    %c241 = arith.constant 241 : index
    %c0_96 = arith.constant 0 : index
    %152 = vector.load %arg7[%c241, %c0_96] : memref<400x4xf32, #tpu.memory_space<vmem>>, vector<80x4xf32>
    %153 = arith.truncf %152 : vector<80x4xf32> to vector<80x4xbf16>
    %cst_97 = arith.constant dense<0.000000e+00> : vector<80x128xf32>
    %154 = tpu.matmul %153, %11, %cst_97 {dimension_numbers = #tpu.dot_dimension_numbers<[1], [0], [0], [1], [0, 0, 1, 1], [], []>} : vector<80x4xbf16>, vector<4x128xbf16>, vector<80x128xf32> -> vector<80x128xf32>
    %155 = arith.addf %151, %154 : vector<80x128xf32>
    %c242 = arith.constant 242 : index
    %c0_98 = arith.constant 0 : index
    %156 = vector.load %arg7[%c242, %c0_98] : memref<400x4xf32, #tpu.memory_space<vmem>>, vector<80x4xf32>
    %157 = arith.truncf %156 : vector<80x4xf32> to vector<80x4xbf16>
    %cst_99 = arith.constant dense<0.000000e+00> : vector<80x128xf32>
    %158 = tpu.matmul %157, %13, %cst_99 {dimension_numbers = #tpu.dot_dimension_numbers<[1], [0], [0], [1], [0, 0, 1, 1], [], []>} : vector<80x4xbf16>, vector<4x128xbf16>, vector<80x128xf32> -> vector<80x128xf32>
    %159 = arith.addf %155, %158 : vector<80x128xf32>
    %c260 = arith.constant 260 : index
    %c0_100 = arith.constant 0 : index
    %160 = vector.load %arg7[%c260, %c0_100] : memref<400x4xf32, #tpu.memory_space<vmem>>, vector<80x4xf32>
    %161 = arith.truncf %160 : vector<80x4xf32> to vector<80x4xbf16>
    %cst_101 = arith.constant dense<0.000000e+00> : vector<80x128xf32>
    %162 = tpu.matmul %161, %15, %cst_101 {dimension_numbers = #tpu.dot_dimension_numbers<[1], [0], [0], [1], [0, 0, 1, 1], [], []>} : vector<80x4xbf16>, vector<4x128xbf16>, vector<80x128xf32> -> vector<80x128xf32>
    %163 = arith.addf %159, %162 : vector<80x128xf32>
    %c261 = arith.constant 261 : index
    %c0_102 = arith.constant 0 : index
    %164 = vector.load %arg7[%c261, %c0_102] : memref<400x4xf32, #tpu.memory_space<vmem>>, vector<80x4xf32>
    %165 = arith.truncf %164 : vector<80x4xf32> to vector<80x4xbf16>
    %cst_103 = arith.constant dense<0.000000e+00> : vector<80x128xf32>
    %166 = tpu.matmul %165, %17, %cst_103 {dimension_numbers = #tpu.dot_dimension_numbers<[1], [0], [0], [1], [0, 0, 1, 1], [], []>} : vector<80x4xbf16>, vector<4x128xbf16>, vector<80x128xf32> -> vector<80x128xf32>
    %167 = arith.addf %163, %166 : vector<80x128xf32>
    %c262 = arith.constant 262 : index
    %c0_104 = arith.constant 0 : index
    %168 = vector.load %arg7[%c262, %c0_104] : memref<400x4xf32, #tpu.memory_space<vmem>>, vector<80x4xf32>
    %169 = arith.truncf %168 : vector<80x4xf32> to vector<80x4xbf16>
    %cst_105 = arith.constant dense<0.000000e+00> : vector<80x128xf32>
    %170 = tpu.matmul %169, %19, %cst_105 {dimension_numbers = #tpu.dot_dimension_numbers<[1], [0], [0], [1], [0, 0, 1, 1], [], []>} : vector<80x4xbf16>, vector<4x128xbf16>, vector<80x128xf32> -> vector<80x128xf32>
    %171 = arith.addf %167, %170 : vector<80x128xf32>
    %c280 = arith.constant 280 : index
    %c0_106 = arith.constant 0 : index
    %172 = vector.load %arg7[%c280, %c0_106] : memref<400x4xf32, #tpu.memory_space<vmem>>, vector<80x4xf32>
    %173 = arith.truncf %172 : vector<80x4xf32> to vector<80x4xbf16>
    %cst_107 = arith.constant dense<0.000000e+00> : vector<80x128xf32>
    %174 = tpu.matmul %173, %21, %cst_107 {dimension_numbers = #tpu.dot_dimension_numbers<[1], [0], [0], [1], [0, 0, 1, 1], [], []>} : vector<80x4xbf16>, vector<4x128xbf16>, vector<80x128xf32> -> vector<80x128xf32>
    %175 = arith.addf %171, %174 : vector<80x128xf32>
    %c281 = arith.constant 281 : index
    %c0_108 = arith.constant 0 : index
    %176 = vector.load %arg7[%c281, %c0_108] : memref<400x4xf32, #tpu.memory_space<vmem>>, vector<80x4xf32>
    %177 = arith.truncf %176 : vector<80x4xf32> to vector<80x4xbf16>
    %cst_109 = arith.constant dense<0.000000e+00> : vector<80x128xf32>
    %178 = tpu.matmul %177, %23, %cst_109 {dimension_numbers = #tpu.dot_dimension_numbers<[1], [0], [0], [1], [0, 0, 1, 1], [], []>} : vector<80x4xbf16>, vector<4x128xbf16>, vector<80x128xf32> -> vector<80x128xf32>
    %179 = arith.addf %175, %178 : vector<80x128xf32>
    %c282 = arith.constant 282 : index
    %c0_110 = arith.constant 0 : index
    %180 = vector.load %arg7[%c282, %c0_110] : memref<400x4xf32, #tpu.memory_space<vmem>>, vector<80x4xf32>
    %181 = arith.truncf %180 : vector<80x4xf32> to vector<80x4xbf16>
    %cst_111 = arith.constant dense<0.000000e+00> : vector<80x128xf32>
    %182 = tpu.matmul %181, %25, %cst_111 {dimension_numbers = #tpu.dot_dimension_numbers<[1], [0], [0], [1], [0, 0, 1, 1], [], []>} : vector<80x4xbf16>, vector<4x128xbf16>, vector<80x128xf32> -> vector<80x128xf32>
    %183 = arith.addf %179, %182 : vector<80x128xf32>
    %c0_112 = arith.constant 0 : index
    %c240_113 = arith.constant 240 : index
    %c0_114 = arith.constant 0 : index
    %184 = vector.load %arg6[%c0_112, %c240_113, %c0_114] : memref<1x320x128xf32, #tpu.memory_space<vmem>>, vector<1x80x128xf32>
    %185 = vector.shape_cast %184 : vector<1x80x128xf32> to vector<80x128xf32>
    %186 = vector.shape_cast %183 : vector<80x128xf32> to vector<1x80x128xf32>
    tpu.vector_store %arg6[%c0_112, %c240_113, %c0_114], %186 {strides = array<i32>} : memref<1x320x128xf32, #tpu.memory_space<vmem>>, vector<1x80x128xf32>,
    return
  }
  func.func @transform_0(%arg0: i32, %arg1: i32) -> (i32, i32, i32) {
    %c0_i32 = arith.constant 0 : i32
    %c0_i32_0 = arith.constant 0 : i32
    return %arg0, %arg1, %c0_i32 : i32, i32, i32
  }
  func.func @transform_1(%arg0: i32, %arg1: i32) -> (i32, i32, i32) {
    %c1_i32 = arith.constant 1 : i32
    %0 = arith.addi %arg1, %c1_i32 : i32
    %c4_i32 = arith.constant 4 : i32
    %1 = arith.muli %0, %c4_i32 : i32
    %c0_i32 = arith.constant 0 : i32
    %c0_i32_0 = arith.constant 0 : i32
    return %arg0, %1, %c0_i32 : i32, i32, i32
  }
  func.func @transform_2(%arg0: i32, %arg1: i32) -> (i32, i32, i32) {
    %c0_i32 = arith.constant 0 : i32
    %c0_i32_0 = arith.constant 0 : i32
    %c0_i32_1 = arith.constant 0 : i32
    %c0_i32_2 = arith.constant 0 : i32
    return %c0_i32, %c0_i32_0, %c0_i32_1 : i32, i32, i32
  }
  func.func @transform_3(%arg0: i32, %arg1: i32) -> (i32, i32) {
    %c0_i32 = arith.constant 0 : i32
    %c0_i32_0 = arith.constant 0 : i32
    %c0_i32_1 = arith.constant 0 : i32
    return %c0_i32, %c0_i32_0 : i32, i32
  }
  func.func @transform_4(%arg0: i32, %arg1: i32) -> (i32, i32, i32) {
    %c0_i32 = arith.constant 0 : i32
    %c0_i32_0 = arith.constant 0 : i32
    return %arg0, %arg1, %c0_i32 : i32, i32, i32
  }
}

</mosaic_0001>

<llo_original>
// kernel: tpu_custom_call.1
$region0: #{tpu_custom_call.1}
  #allocation0 [shape = 'u32[]', space=smem, size = 0x4, offset = 0x4, fixed_abs, tag = 'smem constant byte address 0x4 - core index']
  #allocation1 [shape = 'u32[144,128]{1,0:T(1,128)}', space=vmem, size = 0x12000, scoped, tag = 'internal scratch']
  #allocation2 [shape = 'f32[400,4]{1,0:T(8,128)}', space=vmem, size = 0x32000, scoped, tag = 'scratch operand']
  %s0 = inlined_call_operand.vmem [shape: bf16[2,400,4], index: 0, kind: input, shape index: {}]
  %s1 = inlined_call_operand.vmem [shape: bf16[2,400,4], index: 1, kind: input, shape index: {}]
  %s2 = inlined_call_operand.vmem [shape: bf16[9,4,128], index: 2, kind: input, shape index: {}]
  %s3 = inlined_call_operand.vmem [shape: f32[1,128], index: 3, kind: input, shape index: {}]
  %s4 = inlined_call_operand.hbm [shape: f32[2,320,128], index: 4, kind: output, shape index: {}]
  %s5 = sld [smem:[#allocation0]]
  $region49: #{tpu_custom_call.1} parent=0
    _
  %s7 = ssub.s32 1, %s5
  %s8 = scalar_select 0, %s7, %s5
  $region1: #{tpu_custom_call.1} parent=0
    #allocation3 [shape = 'u8[327680]{0}', space=vmem, size = 0x50000, scoped, tag = 'output window, operand 0']
    #allocation4 [shape = 's32[2]{0}', space=sflag, size = 0x8, scoped, tag = 'scoped memory for tpu_custom_call.1']
    %9 = vsyncpa [#allocation4], 0
    %s10 = scalar_lea.sflag [#allocation4], 1
    %11 = vsyncpa %s10, 0
    loop: start=0, step=1, limit=4
    $region2: #{tpu_custom_call.1} parent=1 // loop_pre_header
      _
    $region3: #{tpu_custom_call.1} parent=1 // loop_header
      %s13 = sphi 0, %s17
      %p14 = scmp.ge.s32.totalorder %s13, 4
      %s20 = sphi 0, %s32
      %s21 = sphi 0, %s28
      %s22 = sphi 0, %s20
      %s23 = sphi 0, %s21
      %s24 = sphi 0, %s22
      %s25 = sphi 0, %s23
      %s37 = sphi 0, %s39
      %s40 = sphi 0, %s37
      %s41 = sphi 0, %s40
      %s57 = sphi 0, %s41
      %s69 = sphi 0, %s71
      %s72 = sphi 0, %s69
      %s73 = sphi 0, %s72
      %s89 = sphi 0, %s73
      %s93 = sphi 0, %s93
      %s95 = sphi 0, %s93
      %s96 = sphi 0, %s95
      %s110 = sphi 0, %s96
      %s114 = sphi 0, %s114
      %s116 = sphi 0, %s114
      %s117 = sphi 0, %s116
      %s131 = sphi 0, %s117
      %s139 = sphi 0, %s141
      %s142 = sphi 0, %s139
      %s143 = sphi 0, %s142
      %s159 = sphi 0, %s143
    $region4: #{tpu_custom_call.1} parent=1 // loop_header_branch
      %16 = sbr.rel (%p14) target = $region8
    $region5: #{tpu_custom_call.1} parent=1 // loop_body
      %s18 = ssub.s32 %s13, 1
      %s19 = ssub.s32 %s13, 2
      %s26 = sadd.s32 1, %s21
      %p27 = scmp.ge.s32.totalorder %s26, 1
      %s28 = scalar_select %p27, 0, %s26
      %s29 = sadd.s32 1, %s20
      %s30 = scalar_select %p27, %s29, %s20
      %p31 = scmp.ge.s32.totalorder %s30, 2
      %s32 = scalar_select %p31, 0, %s30
      %s33 = ssub.s32 %s20, %s32
      %s34 = ssub.s32 %s21, %s28
      %s35 = sor.u32 %s33, %s34
      %p36 = scmp.eq.s32.totalorder %s35, 0
      %s38 = sadd.s32 %s37, 1
      %s39 = scalar_select %p36, %s37, %s38
      %p42 = pneg %p36
      %p43 = scmp.eq.s32.totalorder %s13, 1
      %p44 = por %p42, %p43
      %p45 = scmp.ne.s32.totalorder %s37, %s40
      %p46 = scmp.eq.s32.totalorder %s13, 0
      %p47 = por %p45, %p46
      %p48 = scmp.ne.s32.totalorder %s37, %s40
      %p49 = scmp.eq.s32.totalorder %s18, 1
      %p50 = por %p48, %p49
      %p51 = scmp.ne.s32.totalorder %s40, %s41
      %p52 = scmp.eq.s32.totalorder %s18, 0
      %p53 = por %p51, %p52
      %p54 = scmp.ne.s32.totalorder %s40, %s41
      %p55 = scmp.eq.s32.totalorder %s19, 1
      %p56 = por %p54, %p55
      %p58 = scmp.ne.s32.totalorder %s41, %s57
      %p59 = scmp.eq.s32.totalorder %s19, 0
      %p60 = por %p58, %p59
      %s61 = sadd.s32 %s21, 1
      %s62 = smul.u32 %s61, 4
      %s63 = sadd.s32 %s28, 1
      %s64 = smul.u32 %s63, 4
      %s65 = ssub.s32 %s20, %s32
      %s66 = ssub.s32 %s62, %s64
      %s67 = sor.u32 %s65, %s66
      %p68 = scmp.eq.s32.totalorder %s67, 0
      %s70 = sadd.s32 %s69, 1
      %s71 = scalar_select %p68, %s69, %s70
      %p74 = pneg %p68
      %p75 = scmp.eq.s32.totalorder %s13, 1
      %p76 = por %p74, %p75
      %p77 = scmp.ne.s32.totalorder %s69, %s72
      %p78 = scmp.eq.s32.totalorder %s13, 0
      %p79 = por %p77, %p78
      %p80 = scmp.ne.s32.totalorder %s69, %s72
      %p81 = scmp.eq.s32.totalorder %s18, 1
      %p82 = por %p80, %p81
      %p83 = scmp.ne.s32.totalorder %s72, %s73
      %p84 = scmp.eq.s32.totalorder %s18, 0
      %p85 = por %p83, %p84
      %p86 = scmp.ne.s32.totalorder %s72, %s73
      %p87 = scmp.eq.s32.totalorder %s19, 1
      %p88 = por %p86, %p87
      %p90 = scmp.ne.s32.totalorder %s73, %s89
      %p91 = scmp.eq.s32.totalorder %s19, 0
      %p92 = por %p90, %p91
      %s94 = sadd.s32 %s93, 1
      %p97 = scmp.eq.s32.totalorder %s13, 1
      %p98 = scmp.ne.s32.totalorder %s93, %s95
      %p99 = scmp.eq.s32.totalorder %s13, 0
      %p100 = por %p98, %p99
      %p101 = scmp.ne.s32.totalorder %s93, %s95
      %p102 = scmp.eq.s32.totalorder %s18, 1
      %p103 = por %p101, %p102
      %p104 = scmp.ne.s32.totalorder %s95, %s96
      %p105 = scmp.eq.s32.totalorder %s18, 0
      %p106 = por %p104, %p105
      %p107 = scmp.ne.s32.totalorder %s95, %s96
      %p108 = scmp.eq.s32.totalorder %s19, 1
      %p109 = por %p107, %p108
      %p111 = scmp.ne.s32.totalorder %s96, %s110
      %p112 = scmp.eq.s32.totalorder %s19, 0
      %p113 = por %p111, %p112
      %s115 = sadd.s32 %s114, 1
      %p118 = scmp.eq.s32.totalorder %s13, 1
      %p119 = scmp.ne.s32.totalorder %s114, %s116
      %p120 = scmp.eq.s32.totalorder %s13, 0
      %p121 = por %p119, %p120
      %p122 = scmp.ne.s32.totalorder %s114, %s116
      %p123 = scmp.eq.s32.totalorder %s18, 1
      %p124 = por %p122, %p123
      %p125 = scmp.ne.s32.totalorder %s116, %s117
      %p126 = scmp.eq.s32.totalorder %s18, 0
      %p127 = por %p125, %p126
      %p128 = scmp.ne.s32.totalorder %s116, %s117
      %p129 = scmp.eq.s32.totalorder %s19, 1
      %p130 = por %p128, %p129
      %p132 = scmp.ne.s32.totalorder %s117, %s131
      %p133 = scmp.eq.s32.totalorder %s19, 0
      %p134 = por %p132, %p133
      %s135 = ssub.s32 %s20, %s32
      %s136 = ssub.s32 %s21, %s28
      %s137 = sor.u32 %s135, %s136
      %p138 = scmp.eq.s32.totalorder %s137, 0
      %s140 = sadd.s32 %s139, 1
      %s141 = scalar_select %p138, %s139, %s140
      %p144 = pneg %p138
      %p145 = scmp.eq.s32.totalorder %s13, 1
      %p146 = por %p144, %p145
      %p147 = scmp.ne.s32.totalorder %s139, %s142
      %p148 = scmp.eq.s32.totalorder %s13, 0
      %p149 = por %p147, %p148
      %p150 = scmp.ne.s32.totalorder %s139, %s142
      %p151 = scmp.eq.s32.totalorder %s18, 1
      %p152 = por %p150, %p151
      %p153 = scmp.ne.s32.totalorder %s142, %s143
      %p154 = scmp.eq.s32.totalorder %s18, 0
      %p155 = por %p153, %p154
      %p156 = scmp.ne.s32.totalorder %s142, %s143
      %p157 = scmp.eq.s32.totalorder %s19, 1
      %p158 = por %p156, %p157
      %p160 = scmp.ne.s32.totalorder %s143, %s159
      %p161 = scmp.eq.s32.totalorder %s19, 0
      %p162 = por %p160, %p161
      %p163 = scmp.le.s32.totalorder 1, %s13
      %p164 = scmp.lt.s32.totalorder %s13, 3
      %p165 = pnand %p163, %p164
      %p166 = pneg %p165
      // Predicated region
      $region9: #{tpu_custom_call.1} parent=5 // pred_check
        _
      $region10: #{tpu_custom_call.1} parent=5 // pred_check_branch
        %168 = sbr.rel (%p165) target = $region12
      $region11: #{tpu_custom_call.1} parent=5 // pred_region
        %s169 = ssub.s32 %s13, 1
        // Predicated region
        $region13: #{tpu_custom_call.1} parent=11 // pred_check
          %p170 = pneg %p106
        $region14: #{tpu_custom_call.1} parent=11 // pred_check_branch
          %172 = sbr.rel (%p170) target = $region16
        $region15: #{tpu_custom_call.1} parent=11 // pred_region
          _
        $region16: #{tpu_custom_call.1} parent=11 // pred_fallthru
          _
        // Predicated region
        $region17: #{tpu_custom_call.1} parent=11 // pred_check
          %p173 = pneg %p127
        $region18: #{tpu_custom_call.1} parent=11 // pred_check_branch
          %175 = sbr.rel (%p173) target = $region20
        $region19: #{tpu_custom_call.1} parent=11 // pred_region
          _
        $region20: #{tpu_custom_call.1} parent=11 // pred_fallthru
          _
      $region12: #{tpu_custom_call.1} parent=5 // pred_fallthru
        _
      %p176 = scmp.lt.s32.totalorder %s13, 2
      // Predicated region
      $region21: #{tpu_custom_call.1} parent=5 // pred_check
        %p177 = pneg %p176
      $region22: #{tpu_custom_call.1} parent=5 // pred_check_branch
        %179 = sbr.rel (%p177) target = $region24
      $region23: #{tpu_custom_call.1} parent=5 // pred_region
        // Predicated region
        $region25: #{tpu_custom_call.1} parent=23 // pred_check
          %p180 = pneg %p47
        $region26: #{tpu_custom_call.1} parent=23 // pred_check_branch
          %182 = sbr.rel (%p180) target = $region28
        $region27: #{tpu_custom_call.1} parent=23 // pred_region
          %s183 = smul.u32 40, %s21
          %s184 = ssub.s32 50, %s183
          %p185 = scmp.lt.s32.totalorder %s184, 40
          %s186 = scalar_select %p185, %s184, 40
          %s187 = smul.u32 64, %s186
          %p188 = scmp.lt.s32.totalorder %s20, 1
          %s189 = scalar_select %p188, %s20, 1
          %p190 = scmp.lt.s32.totalorder %s183, 49
          %s191 = scalar_select %p190, %s183, 49
          %s192 = smul.addr %s189, 50
          %s193 = sadd.s32 %s191, %s192
          %s194 = smul.addr %s193, 4
          %s195 = scalar_lea.vmem %s0, %s194
          %s196 = smul.u32 40, %s21
          %s197 = ssub.s32 50, %s196
          %p198 = scmp.lt.s32.totalorder %s197, 40
          %s199 = scalar_select %p198, %s197, 40
          %s200 = smul.u32 64, %s199
        $region28: #{tpu_custom_call.1} parent=23 // pred_fallthru
          _
        // Predicated region
        $region29: #{tpu_custom_call.1} parent=23 // pred_check
          %p201 = pneg %p79
        $region30: #{tpu_custom_call.1} parent=23 // pred_check_branch
          %203 = sbr.rel (%p201) target = $region32
        $region31: #{tpu_custom_call.1} parent=23 // pred_region
          %s204 = sadd.s32 %s21, 1
          %s205 = smul.u32 %s204, 4
          %s206 = smul.u32 10, %s205
          %p207 = scmp.lt.s32.totalorder %s20, 1
          %s208 = scalar_select %p207, %s20, 1
          %p209 = scmp.lt.s32.totalorder %s206, 49
          %s210 = scalar_select %p209, %s206, 49
          %s211 = smul.addr %s208, 50
          %s212 = sadd.s32 %s210, %s211
          %s213 = smul.addr %s212, 4
          %s214 = scalar_lea.vmem %s1, %s213
          %s215 = sadd.s32 %s21, 1
          %s216 = smul.u32 %s215, 4
          %s217 = smul.u32 10, %s216
        $region32: #{tpu_custom_call.1} parent=23 // pred_fallthru
          _
      $region24: #{tpu_custom_call.1} parent=5 // pred_fallthru
        _
      %p218 = scmp.le.s32.totalorder 1, %s13
      %p219 = scmp.lt.s32.totalorder %s13, 3
      %p220 = pnand %p218, %p219
      %p221 = pneg %p220
      // Predicated region
      $region33: #{tpu_custom_call.1} parent=5 // pred_check
        _
      $region34: #{tpu_custom_call.1} parent=5 // pred_check_branch
        %223 = sbr.rel (%p220) target = $region36
      $region35: #{tpu_custom_call.1} parent=5 // pred_region
        %s224 = ssub.s32 %s13, 1
        %s225 = smul.u32 40, %s23
        %s226 = ssub.s32 50, %s225
        %p227 = scmp.lt.s32.totalorder %s226, 40
        %s228 = scalar_select %p227, %s226, 40
        %s229 = smul.u32 64, %s228
        %p230 = scmp.lt.s32.totalorder %s22, 1
        %s231 = scalar_select %p230, %s22, 1
        %p232 = scmp.lt.s32.totalorder %s225, 49
        %s233 = scalar_select %p232, %s225, 49
        %s234 = smul.addr %s231, 50
        %s235 = sadd.s32 %s233, %s234
        %s236 = smul.addr %s235, 4
        %s237 = scalar_lea.vmem %s0, %s236
        %p238 = pneg %p53
        %p239 = pneg %p50
        %s240 = sadd.s32 %s23, 1
        %s241 = smul.u32 %s240, 4
        %s242 = smul.u32 10, %s241
        %p243 = scmp.lt.s32.totalorder %s22, 1
        %s244 = scalar_select %p243, %s22, 1
        %p245 = scmp.lt.s32.totalorder %s242, 49
        %s246 = scalar_select %p245, %s242, 49
        %s247 = smul.addr %s244, 50
        %s248 = sadd.s32 %s246, %s247
        %s249 = smul.addr %s248, 4
        %s250 = scalar_lea.vmem %s1, %s249
        %p251 = pneg %p85
        %p252 = pneg %p82
        %p253 = pneg %p106
        %p254 = pneg %p103
        %p255 = pneg %p127
        %p256 = pneg %p124
        %p257 = pneg %p155
        %p258 = pneg %p152
        %s259 = sand.u32 %s142, 1
        %s260 = scalar_lea.sflag [#allocation4], %s259
        %s261 = sand.u32 %s142, 1
        %s262 = smul.addr %s261, 320
        %s263 = scalar_lea.vmem [#allocation3], %s262
        %s264 = smul.u32 40, %s23
        %s265 = ssub.s32 50, %s264
        %p266 = scmp.lt.s32.totalorder %s265, 40
        %s267 = scalar_select %p266, %s265, 40
        %s268 = smul.u32 64, %s267
        %p269 = scmp.lt.s32.totalorder %s22, 1
        %s270 = scalar_select %p269, %s22, 1
        %p271 = scmp.lt.s32.totalorder %s264, 49
        %s272 = scalar_select %p271, %s264, 49
        %s273 = smul.addr %s270, 50
        %s274 = sadd.s32 %s272, %s273
        %s275 = smul.addr %s274, 4
        %s276 = scalar_lea.vmem %s0, %s275
        %s277 = smul.u32 40, %s23
        %s278 = ssub.s32 50, %s277
        %p279 = scmp.lt.s32.totalorder %s278, 40
        %s280 = scalar_select %p279, %s278, 40
        %s281 = smul.u32 64, %s280
        %s282 = sadd.s32 %s23, 1
        %s283 = smul.u32 %s282, 4
        %s284 = smul.u32 10, %s283
        %p285 = scmp.lt.s32.totalorder %s22, 1
        %s286 = scalar_select %p285, %s22, 1
        %p287 = scmp.lt.s32.totalorder %s284, 49
        %s288 = scalar_select %p287, %s284, 49
        %s289 = smul.addr %s286, 50
        %s290 = sadd.s32 %s288, %s289
        %s291 = smul.addr %s290, 4
        %s292 = scalar_lea.vmem %s1, %s291
        %s293 = sadd.s32 %s23, 1
        %s294 = smul.u32 %s293, 4
        %s295 = smul.u32 10, %s294
        %s296 = smul.u32 40, %s23
        %v298 = vld [vmem:[%s276] sm:$0xf]
        %v299 = vld [vmem:[%s276 + $0x4] sm:$0xf]
        %v300 = vld [vmem:[%s276 + $0x8] sm:$0xf]
        %v301 = vld [vmem:[%s276 + $0xc] sm:$0xf]
        %v302 = vld [vmem:[%s276 + $0x10] sm:$0xf]
        %v303 = vld [vmem:[%s276 + $0x14] sm:$0xf]
        %v304 = vld [vmem:[%s276 + $0x18] sm:$0xf]
        %v305 = vld [vmem:[%s276 + $0x1c] sm:$0xf]
        %v306 = vld [vmem:[%s276 + $0x20] sm:$0xf]
        %v307 = vld [vmem:[%s276 + $0x24] sm:$0xf]
        %v308 = vld [vmem:[%s276 + $0x28] sm:$0xf]
        %v309 = vld [vmem:[%s276 + $0x2c] sm:$0xf]
        %v310 = vld [vmem:[%s276 + $0x30] sm:$0xf]
        %v311 = vld [vmem:[%s276 + $0x34] sm:$0xf]
        %v312 = vld [vmem:[%s276 + $0x38] sm:$0xf]
        %v313 = vld [vmem:[%s276 + $0x3c] sm:$0xf]
        %v314 = vld [vmem:[%s276 + $0x40] sm:$0xf]
        %v315 = vld [vmem:[%s276 + $0x44] sm:$0xf]
        %v316 = vld [vmem:[%s276 + $0x48] sm:$0xf]
        %v317 = vld [vmem:[%s276 + $0x4c] sm:$0xf]
        %v318 = vld [vmem:[%s276 + $0x50] sm:$0xf]
        %v319 = vld [vmem:[%s276 + $0x54] sm:$0xf]
        %v320 = vld [vmem:[%s276 + $0x58] sm:$0xf]
        %v321 = vld [vmem:[%s276 + $0x5c] sm:$0xf]
        %v322 = vld [vmem:[%s276 + $0x60] sm:$0xf]
        %v323 = vld [vmem:[%s276 + $0x64] sm:$0xf]
        %v324 = vld [vmem:[%s276 + $0x68] sm:$0xf]
        %v325 = vld [vmem:[%s276 + $0x6c] sm:$0xf]
        %v326 = vld [vmem:[%s276 + $0x70] sm:$0xf]
        %v327 = vld [vmem:[%s276 + $0x74] sm:$0xf]
        %v328 = vld [vmem:[%s276 + $0x78] sm:$0xf]
        %v329 = vld [vmem:[%s276 + $0x7c] sm:$0xf]
        %v330 = vld [vmem:[%s276 + $0x80] sm:$0xf]
        %v331 = vld [vmem:[%s276 + $0x84] sm:$0xf]
        %v332 = vld [vmem:[%s276 + $0x88] sm:$0xf]
        %v333 = vld [vmem:[%s276 + $0x8c] sm:$0xf]
        %v334 = vld [vmem:[%s276 + $0x90] sm:$0xf]
        %v335 = vld [vmem:[%s276 + $0x94] sm:$0xf]
        %v336 = vld [vmem:[%s276 + $0x98] sm:$0xf]
        %v337 = vld [vmem:[%s276 + $0x9c] sm:$0xf]
        %v338 = vunpack.c.l.bf16 %v298
        %v339 = vunpack.c.l.bf16 %v299
        %v340 = vunpack.c.l.bf16 %v300
        %v341 = vunpack.c.l.bf16 %v301
        %v342 = vunpack.c.l.bf16 %v302
        %v343 = vunpack.c.l.bf16 %v303
        %v344 = vunpack.c.l.bf16 %v304
        %v345 = vunpack.c.l.bf16 %v305
        %v346 = vunpack.c.l.bf16 %v306
        %v347 = vunpack.c.l.bf16 %v307
        %v348 = vunpack.c.l.bf16 %v308
        %v349 = vunpack.c.l.bf16 %v309
        %v350 = vunpack.c.l.bf16 %v310
        %v351 = vunpack.c.l.bf16 %v311
        %v352 = vunpack.c.l.bf16 %v312
        %v353 = vunpack.c.l.bf16 %v313
        %v354 = vunpack.c.l.bf16 %v314
        %v355 = vunpack.c.l.bf16 %v315
        %v356 = vunpack.c.l.bf16 %v316
        %v357 = vunpack.c.l.bf16 %v317
        %v358 = vunpack.c.l.bf16 %v318
        %v359 = vunpack.c.l.bf16 %v319
        %v360 = vunpack.c.l.bf16 %v320
        %v361 = vunpack.c.l.bf16 %v321
        %v362 = vunpack.c.l.bf16 %v322
        %v363 = vunpack.c.l.bf16 %v323
        %v364 = vunpack.c.l.bf16 %v324
        %v365 = vunpack.c.l.bf16 %v325
        %v366 = vunpack.c.l.bf16 %v326
        %v367 = vunpack.c.l.bf16 %v327
        %v368 = vunpack.c.l.bf16 %v328
        %v369 = vunpack.c.l.bf16 %v329
        %v370 = vunpack.c.l.bf16 %v330
        %v371 = vunpack.c.l.bf16 %v331
        %v372 = vunpack.c.l.bf16 %v332
        %v373 = vunpack.c.l.bf16 %v333
        %v374 = vunpack.c.l.bf16 %v334
        %v375 = vunpack.c.l.bf16 %v335
        %v376 = vunpack.c.l.bf16 %v336
        %v377 = vunpack.c.l.bf16 %v337
        %vm378 = vcmask 31744
        %379 = vst.msk [vmem:[#allocation2] sm:$0xff] %vm378, %v338
        %380 = vst.msk [vmem:[#allocation2 + $0x8] sm:$0xff] %vm378, %v339
        %381 = vst.msk [vmem:[#allocation2 + $0x10] sm:$0xff] %vm378, %v340
        %382 = vst.msk [vmem:[#allocation2 + $0x18] sm:$0xff] %vm378, %v341
        %383 = vst.msk [vmem:[#allocation2 + $0x20] sm:$0xff] %vm378, %v342
        %384 = vst.msk [vmem:[#allocation2 + $0x28] sm:$0xff] %vm378, %v343
        %385 = vst.msk [vmem:[#allocation2 + $0x30] sm:$0xff] %vm378, %v344
        %386 = vst.msk [vmem:[#allocation2 + $0x38] sm:$0xff] %vm378, %v345
        %387 = vst.msk [vmem:[#allocation2 + $0x40] sm:$0xff] %vm378, %v346
        %388 = vst.msk [vmem:[#allocation2 + $0x48] sm:$0xff] %vm378, %v347
        %389 = vst.msk [vmem:[#allocation2 + $0x50] sm:$0xff] %vm378, %v348
        %390 = vst.msk [vmem:[#allocation2 + $0x58] sm:$0xff] %vm378, %v349
        %391 = vst.msk [vmem:[#allocation2 + $0x60] sm:$0xff] %vm378, %v350
        %392 = vst.msk [vmem:[#allocation2 + $0x68] sm:$0xff] %vm378, %v351
        %393 = vst.msk [vmem:[#allocation2 + $0x70] sm:$0xff] %vm378, %v352
        %394 = vst.msk [vmem:[#allocation2 + $0x78] sm:$0xff] %vm378, %v353
        %395 = vst.msk [vmem:[#allocation2 + $0x80] sm:$0xff] %vm378, %v354
        %396 = vst.msk [vmem:[#allocation2 + $0x88] sm:$0xff] %vm378, %v355
        %397 = vst.msk [vmem:[#allocation2 + $0x90] sm:$0xff] %vm378, %v356
        %398 = vst.msk [vmem:[#allocation2 + $0x98] sm:$0xff] %vm378, %v357
        %399 = vst.msk [vmem:[#allocation2 + $0xa0] sm:$0xff] %vm378, %v358
        %400 = vst.msk [vmem:[#allocation2 + $0xa8] sm:$0xff] %vm378, %v359
        %401 = vst.msk [vmem:[#allocation2 + $0xb0] sm:$0xff] %vm378, %v360
        %402 = vst.msk [vmem:[#allocation2 + $0xb8] sm:$0xff] %vm378, %v361
        %403 = vst.msk [vmem:[#allocation2 + $0xc0] sm:$0xff] %vm378, %v362
        %404 = vst.msk [vmem:[#allocation2 + $0xc8] sm:$0xff] %vm378, %v363
        %405 = vst.msk [vmem:[#allocation2 + $0xd0] sm:$0xff] %vm378, %v364
        %406 = vst.msk [vmem:[#allocation2 + $0xd8] sm:$0xff] %vm378, %v365
        %407 = vst.msk [vmem:[#allocation2 + $0xe0] sm:$0xff] %vm378, %v366
        %408 = vst.msk [vmem:[#allocation2 + $0xe8] sm:$0xff] %vm378, %v367
        %409 = vst.msk [vmem:[#allocation2 + $0xf0] sm:$0xff] %vm378, %v368
        %410 = vst.msk [vmem:[#allocation2 + $0xf8] sm:$0xff] %vm378, %v369
        %411 = vst.msk [vmem:[#allocation2 + $0x100] sm:$0xff] %vm378, %v370
        %412 = vst.msk [vmem:[#allocation2 + $0x108] sm:$0xff] %vm378, %v371
        %413 = vst.msk [vmem:[#allocation2 + $0x110] sm:$0xff] %vm378, %v372
        %414 = vst.msk [vmem:[#allocation2 + $0x118] sm:$0xff] %vm378, %v373
        %415 = vst.msk [vmem:[#allocation2 + $0x120] sm:$0xff] %vm378, %v374
        %416 = vst.msk [vmem:[#allocation2 + $0x128] sm:$0xff] %vm378, %v375
        %417 = vst.msk [vmem:[#allocation2 + $0x130] sm:$0xff] %vm378, %v376
        %418 = vst.msk [vmem:[#allocation2 + $0x138] sm:$0xff] %vm378, %v377
        %v419 = vld [vmem:[%s292] sm:$0xf]
        %v420 = vld [vmem:[%s292 + $0x4] sm:$0xf]
        %v421 = vld [vmem:[%s292 + $0x8] sm:$0xf]
        %v422 = vld [vmem:[%s292 + $0xc] sm:$0xf]
        %v423 = vld [vmem:[%s292 + $0x10] sm:$0xf]
        %v424 = vld [vmem:[%s292 + $0x14] sm:$0xf]
        %v425 = vld [vmem:[%s292 + $0x18] sm:$0xf]
        %v426 = vld [vmem:[%s292 + $0x1c] sm:$0xf]
        %v427 = vld [vmem:[%s292 + $0x20] sm:$0xf]
        %v428 = vld [vmem:[%s292 + $0x24] sm:$0xf]
        %v429 = vunpack.c.l.bf16 %v419
        %v430 = vunpack.c.l.bf16 %v420
        %v431 = vunpack.c.l.bf16 %v421
        %v432 = vunpack.c.l.bf16 %v422
        %v433 = vunpack.c.l.bf16 %v423
        %v434 = vunpack.c.l.bf16 %v424
        %v435 = vunpack.c.l.bf16 %v425
        %v436 = vunpack.c.l.bf16 %v426
        %v437 = vunpack.c.l.bf16 %v427
        %v438 = vunpack.c.l.bf16 %v428
        %439 = vst.msk [vmem:[#allocation2 + $0x140] sm:$0xff] %vm378, %v429
        %440 = vst.msk [vmem:[#allocation2 + $0x148] sm:$0xff] %vm378, %v430
        %441 = vst.msk [vmem:[#allocation2 + $0x150] sm:$0xff] %vm378, %v431
        %442 = vst.msk [vmem:[#allocation2 + $0x158] sm:$0xff] %vm378, %v432
        %443 = vst.msk [vmem:[#allocation2 + $0x160] sm:$0xff] %vm378, %v433
        %444 = vst.msk [vmem:[#allocation2 + $0x168] sm:$0xff] %vm378, %v434
        %445 = vst.msk [vmem:[#allocation2 + $0x170] sm:$0xff] %vm378, %v435
        %446 = vst.msk [vmem:[#allocation2 + $0x178] sm:$0xff] %vm378, %v436
        %447 = vst.msk [vmem:[#allocation2 + $0x180] sm:$0xff] %vm378, %v437
        %448 = vst.msk [vmem:[#allocation2 + $0x188] sm:$0xff] %vm378, %v438
        %v449 = vld [vmem:[%s2] sm:$0x3]
        %s450 = scalar_lea.vmem %s2, 2
        %v451 = vld [vmem:[%s450] sm:$0x3]
        %s452 = scalar_lea.vmem %s2, 4
        %v453 = vld [vmem:[%s452] sm:$0x3]
        %s454 = scalar_lea.vmem %s2, 6
        %v455 = vld [vmem:[%s454] sm:$0x3]
        %s456 = scalar_lea.vmem %s2, 8
        %v457 = vld [vmem:[%s456] sm:$0x3]
        %s458 = scalar_lea.vmem %s2, 10
        %v459 = vld [vmem:[%s458] sm:$0x3]
        %s460 = scalar_lea.vmem %s2, 12
        %v461 = vld [vmem:[%s460] sm:$0x3]
        %s462 = scalar_lea.vmem %s2, 14
        %v463 = vld [vmem:[%s462] sm:$0x3]
        %s464 = scalar_lea.vmem %s2, 16
        %v465 = vld [vmem:[%s464] sm:$0x3]
        %v466 = vld [vmem:[%s3] sm:$0x1]
        %v467 = vld [vmem:[#allocation2] sm:$0xff]
        %v468 = vld [vmem:[#allocation2 + $0x8] sm:$0xff]
        %v469 = vld [vmem:[#allocation2 + $0x10] sm:$0xff]
        %v470 = vld [vmem:[#allocation2 + $0x18] sm:$0xff]
        %v471 = vld [vmem:[#allocation2 + $0x20] sm:$0xff]
        %v472 = vld [vmem:[#allocation2 + $0x28] sm:$0xff]
        %v473 = vld [vmem:[#allocation2 + $0x30] sm:$0xff]
        %v474 = vld [vmem:[#allocation2 + $0x38] sm:$0xff]
        %v475 = vld [vmem:[#allocation2 + $0x40] sm:$0xff]
        %v476 = vld [vmem:[#allocation2 + $0x48] sm:$0xff]
        %v477 = vpack.c.bf16 %v468, %v467
        %v478 = vpack.c.bf16 %v470, %v469
        %v479 = vpack.c.bf16 %v472, %v471
        %v480 = vpack.c.bf16 %v474, %v473
        %v481 = vpack.c.bf16 %v476, %v475
        %v483 = vsel %vm378, %v477, 0
        %v486 = vsel %vm378, %v478, 0
        %v489 = vsel %vm378, %v479, 0
        %v492 = vsel %vm378, %v480, 0
        %v495 = vsel %vm378, %v481, 0
        %vm497 = vcmask 1041408
        %v499 = vsel %vm497, %v449, 0
        %501 = vmatprep.subr.bf16.mxu0 0
        %502 = vmatpush1.bf16.msra.mxu0 %v499
        %503 = vmatprep.subr.bf16.mxu0 0
        %504 = vmatpush1.bf16.msra.mxu0 0
        %505 = vmatprep.subr.bf16.mxu0 0
        %506 = vmatpush1.bf16.msra.mxu0 0
        %507 = vmatprep.subr.bf16.mxu0 0
        %508 = vmatpush1.bf16.msra.mxu0 0
        %509 = vmatprep.subr.bf16.mxu0 0
        %510 = vmatpush1.bf16.msra.mxu0 0
        %511 = vmatprep.subr.bf16.mxu0 0
        %512 = vmatpush1.bf16.msra.mxu0 0
        %513 = vmatprep.subr.bf16.mxu0 0
        %514 = vmatpush1.bf16.msra.mxu0 0
        %515 = vmatprep.subr.bf16.mxu0 0
        %516 = vmatpush1.bf16.msra.mxu0 0
        %517 = vmatprep.subr.bf16.mxu0 0
        %518 = vmatpush1.bf16.msra.mxu0 0
        %519 = vmatprep.subr.bf16.mxu0 0
        %520 = vmatpush1.bf16.msra.mxu0 0
        %521 = vmatprep.subr.bf16.mxu0 0
        %522 = vmatpush1.bf16.msra.mxu0 0
        %523 = vmatprep.subr.bf16.mxu0 0
        %524 = vmatpush1.bf16.msra.mxu0 0
        %525 = vmatprep.subr.bf16.mxu0 0
        %526 = vmatpush1.bf16.msra.mxu0 0
        %527 = vmatprep.subr.bf16.mxu0 0
        %528 = vmatpush1.bf16.msra.mxu0 0
        %529 = vmatprep.subr.bf16.mxu0 0
        %530 = vmatpush1.bf16.msra.mxu0 0
        %531 = vmatprep.subr.bf16.mxu0 0
        %532 = vmatpush1.bf16.msra.mxu0 0
        %533 = vmatprep.mubr.bf16.mxu0 0
        %534 = vmatmul.mubr.bf16.gmra.mrb[0].mxu0 %v483
        %v535 = vpop.f32.mrb[0].mxu0
        %v536 = vadd.f32 0.0, %v535
        %v537 = vpop.f32.mrb[0].mxu0
        %v538 = vpop.f32.mrb[0].mxu0
        %v539 = vadd.f32 0.0, %v538
        %v540 = vpop.f32.mrb[0].mxu0
        %541 = vmatprep.mubr.bf16.mxu0 0
        %542 = vmatmul.mubr.bf16.gmra.mrb[0].mxu0 %v486
        %v543 = vpop.f32.mrb[0].mxu0
        %v544 = vadd.f32 0.0, %v543
        %v545 = vpop.f32.mrb[0].mxu0
        %v546 = vpop.f32.mrb[0].mxu0
        %v547 = vadd.f32 0.0, %v546
        %v548 = vpop.f32.mrb[0].mxu0
        %549 = vmatprep.mubr.bf16.mxu0 0
        %550 = vmatmul.mubr.bf16.gmra.mrb[0].mxu0 %v489
        %v551 = vpop.f32.mrb[0].mxu0
        %v552 = vadd.f32 0.0, %v551
        %v553 = vpop.f32.mrb[0].mxu0
        %v554 = vpop.f32.mrb[0].mxu0
        %v555 = vadd.f32 0.0, %v554
        %v556 = vpop.f32.mrb[0].mxu0
        %557 = vmatprep.mubr.bf16.mxu0 0
        %558 = vmatmul.mubr.bf16.gmra.mrb[0].mxu0 %v492
        %v559 = vpop.f32.mrb[0].mxu0
        %v560 = vadd.f32 0.0, %v559
        %v561 = vpop.f32.mrb[0].mxu0
        %v562 = vpop.f32.mrb[0].mxu0
        %v563 = vadd.f32 0.0, %v562
        %v564 = vpop.f32.mrb[0].mxu0
        %565 = vmatprep.mubr.bf16.mxu0 0
        %566 = vmatmul.mubr.bf16.gmra.mrb[0].mxu0 %v495
        %v567 = vpop.f32.mrb[0].mxu0
        %v568 = vadd.f32 0.0, %v567
        %v569 = vpop.f32.mrb[0].mxu0
        %v570 = vpop.f32.mrb[0].mxu0
        %v571 = vadd.f32 0.0, %v570
        %v572 = vpop.f32.mrb[0].mxu0
        %573 = vdwg.mxu0
        %v575 = vlaneseq
        %v576 = vshrl.u32 %v575, 7
        %v577 = vsub.s32 0, %v576
        %v578 = vrot.slane %v466, %v577
        %v580 = vadd.f32 %v578, %v536
        %v581 = vadd.f32 %v578, %v539
        %v582 = vadd.f32 %v578, %v544
        %v583 = vadd.f32 %v578, %v547
        %v584 = vadd.f32 %v578, %v552
        %v585 = vadd.f32 %v578, %v555
        %v586 = vadd.f32 %v578, %v560
        %v587 = vadd.f32 %v578, %v563
        %v588 = vadd.f32 %v578, %v568
        %v589 = vadd.f32 %v578, %v571
        %v590 = vld [vmem:[#allocation2 + $0x1] sm:$0xff]
        %v591 = vld [vmem:[#allocation2 + $0x9] sm:$0xff]
        %v592 = vld [vmem:[#allocation2 + $0x11] sm:$0xff]
        %v593 = vld [vmem:[#allocation2 + $0x19] sm:$0xff]
        %v594 = vld [vmem:[#allocation2 + $0x21] sm:$0xff]
        %v595 = vld [vmem:[#allocation2 + $0x29] sm:$0xff]
        %v596 = vld [vmem:[#allocation2 + $0x31] sm:$0xff]
        %v597 = vld [vmem:[#allocation2 + $0x39] sm:$0xff]
        %v598 = vld [vmem:[#allocation2 + $0x41] sm:$0xff]
        %v599 = vld [vmem:[#allocation2 + $0x49] sm:$0xff]
        %v600 = vpack.c.bf16 %v591, %v590
        %v601 = vpack.c.bf16 %v593, %v592
        %v602 = vpack.c.bf16 %v595, %v594
        %v603 = vpack.c.bf16 %v597, %v596
        %v604 = vpack.c.bf16 %v599, %v598
        %v606 = vsel %vm378, %v600, 0
        %v609 = vsel %vm378, %v601, 0
        %v612 = vsel %vm378, %v602, 0
        %v615 = vsel %vm378, %v603, 0
        %v618 = vsel %vm378, %v604, 0
        %v621 = vsel %vm497, %v451, 0
        %623 = vmatprep.subr.bf16.mxu0 0
        %624 = vmatpush1.bf16.msra.mxu0 %v621
        %625 = vmatprep.subr.bf16.mxu0 0
        %626 = vmatpush1.bf16.msra.mxu0 0
        %627 = vmatprep.subr.bf16.mxu0 0
        %628 = vmatpush1.bf16.msra.mxu0 0
        %629 = vmatprep.subr.bf16.mxu0 0
        %630 = vmatpush1.bf16.msra.mxu0 0
        %631 = vmatprep.subr.bf16.mxu0 0
        %632 = vmatpush1.bf16.msra.mxu0 0
        %633 = vmatprep.subr.bf16.mxu0 0
        %634 = vmatpush1.bf16.msra.mxu0 0
        %635 = vmatprep.subr.bf16.mxu0 0
        %636 = vmatpush1.bf16.msra.mxu0 0
        %637 = vmatprep.subr.bf16.mxu0 0
        %638 = vmatpush1.bf16.msra.mxu0 0
        %639 = vmatprep.subr.bf16.mxu0 0
        %640 = vmatpush1.bf16.msra.mxu0 0
        %641 = vmatprep.subr.bf16.mxu0 0
        %642 = vmatpush1.bf16.msra.mxu0 0
        %643 = vmatprep.subr.bf16.mxu0 0
        %644 = vmatpush1.bf16.msra.mxu0 0
        %645 = vmatprep.subr.bf16.mxu0 0
        %646 = vmatpush1.bf16.msra.mxu0 0
        %647 = vmatprep.subr.bf16.mxu0 0
        %648 = vmatpush1.bf16.msra.mxu0 0
        %649 = vmatprep.subr.bf16.mxu0 0
        %650 = vmatpush1.bf16.msra.mxu0 0
        %651 = vmatprep.subr.bf16.mxu0 0
        %652 = vmatpush1.bf16.msra.mxu0 0
        %653 = vmatprep.subr.bf16.mxu0 0
        %654 = vmatpush1.bf16.msra.mxu0 0
        %655 = vmatprep.mubr.bf16.mxu0 0
        %656 = vmatmul.mubr.bf16.gmra.mrb[0].mxu0 %v606
        %v657 = vpop.f32.mrb[0].mxu0
        %v658 = vadd.f32 0.0, %v657
        %v659 = vpop.f32.mrb[0].mxu0
        %v660 = vpop.f32.mrb[0].mxu0
        %v661 = vadd.f32 0.0, %v660
        %v662 = vpop.f32.mrb[0].mxu0
        %663 = vmatprep.mubr.bf16.mxu0 0
        %664 = vmatmul.mubr.bf16.gmra.mrb[0].mxu0 %v609
        %v665 = vpop.f32.mrb[0].mxu0
        %v666 = vadd.f32 0.0, %v665
        %v667 = vpop.f32.mrb[0].mxu0
        %v668 = vpop.f32.mrb[0].mxu0
        %v669 = vadd.f32 0.0, %v668
        %v670 = vpop.f32.mrb[0].mxu0
        %671 = vmatprep.mubr.bf16.mxu0 0
        %672 = vmatmul.mubr.bf16.gmra.mrb[0].mxu0 %v612
        %v673 = vpop.f32.mrb[0].mxu0
        %v674 = vadd.f32 0.0, %v673
        %v675 = vpop.f32.mrb[0].mxu0
        %v676 = vpop.f32.mrb[0].mxu0
        %v677 = vadd.f32 0.0, %v676
        %v678 = vpop.f32.mrb[0].mxu0
        %679 = vmatprep.mubr.bf16.mxu0 0
        %680 = vmatmul.mubr.bf16.gmra.mrb[0].mxu0 %v615
        %v681 = vpop.f32.mrb[0].mxu0
        %v682 = vadd.f32 0.0, %v681
        %v683 = vpop.f32.mrb[0].mxu0
        %v684 = vpop.f32.mrb[0].mxu0
        %v685 = vadd.f32 0.0, %v684
        %v686 = vpop.f32.mrb[0].mxu0
        %687 = vmatprep.mubr.bf16.mxu0 0
        %688 = vmatmul.mubr.bf16.gmra.mrb[0].mxu0 %v618
        %v689 = vpop.f32.mrb[0].mxu0
        %v690 = vadd.f32 0.0, %v689
        %v691 = vpop.f32.mrb[0].mxu0
        %v692 = vpop.f32.mrb[0].mxu0
        %v693 = vadd.f32 0.0, %v692
        %v694 = vpop.f32.mrb[0].mxu0
        %695 = vdwg.mxu0
        %v696 = vadd.f32 %v580, %v658
        %v697 = vadd.f32 %v581, %v661
        %v698 = vadd.f32 %v582, %v666
        %v699 = vadd.f32 %v583, %v669
        %v700 = vadd.f32 %v584, %v674
        %v701 = vadd.f32 %v585, %v677
        %v702 = vadd.f32 %v586, %v682
        %v703 = vadd.f32 %v587, %v685
        %v704 = vadd.f32 %v588, %v690
        %v705 = vadd.f32 %v589, %v693
        %v706 = vld [vmem:[#allocation2 + $0x2] sm:$0xff]
        %v707 = vld [vmem:[#allocation2 + $0xa] sm:$0xff]
        %v708 = vld [vmem:[#allocation2 + $0x12] sm:$0xff]
        %v709 = vld [vmem:[#allocation2 + $0x1a] sm:$0xff]
        %v710 = vld [vmem:[#allocation2 + $0x22] sm:$0xff]
        %v711 = vld [vmem:[#allocation2 + $0x2a] sm:$0xff]
        %v712 = vld [vmem:[#allocation2 + $0x32] sm:$0xff]
        %v713 = vld [vmem:[#allocation2 + $0x3a] sm:$0xff]
        %v714 = vld [vmem:[#allocation2 + $0x42] sm:$0xff]
        %v715 = vld [vmem:[#allocation2 + $0x4a] sm:$0xff]
        %v716 = vpack.c.bf16 %v707, %v706
        %v717 = vpack.c.bf16 %v709, %v708
        %v718 = vpack.c.bf16 %v711, %v710
        %v719 = vpack.c.bf16 %v713, %v712
        %v720 = vpack.c.bf16 %v715, %v714
        %v722 = vsel %vm378, %v716, 0
        %v725 = vsel %vm378, %v717, 0
        %v728 = vsel %vm378, %v718, 0
        %v731 = vsel %vm378, %v719, 0
        %v734 = vsel %vm378, %v720, 0
        %v737 = vsel %vm497, %v453, 0
        %739 = vmatprep.subr.bf16.mxu0 0
        %740 = vmatpush1.bf16.msra.mxu0 %v737
        %741 = vmatprep.subr.bf16.mxu0 0
        %742 = vmatpush1.bf16.msra.mxu0 0
        %743 = vmatprep.subr.bf16.mxu0 0
        %744 = vmatpush1.bf16.msra.mxu0 0
        %745 = vmatprep.subr.bf16.mxu0 0
        %746 = vmatpush1.bf16.msra.mxu0 0
        %747 = vmatprep.subr.bf16.mxu0 0
        %748 = vmatpush1.bf16.msra.mxu0 0
        %749 = vmatprep.subr.bf16.mxu0 0
        %750 = vmatpush1.bf16.msra.mxu0 0
        %751 = vmatprep.subr.bf16.mxu0 0
        %752 = vmatpush1.bf16.msra.mxu0 0
        %753 = vmatprep.subr.bf16.mxu0 0
        %754 = vmatpush1.bf16.msra.mxu0 0
        %755 = vmatprep.subr.bf16.mxu0 0
        %756 = vmatpush1.bf16.msra.mxu0 0
        %757 = vmatprep.subr.bf16.mxu0 0
        %758 = vmatpush1.bf16.msra.mxu0 0
        %759 = vmatprep.subr.bf16.mxu0 0
        %760 = vmatpush1.bf16.msra.mxu0 0
        %761 = vmatprep.subr.bf16.mxu0 0
        %762 = vmatpush1.bf16.msra.mxu0 0
        %763 = vmatprep.subr.bf16.mxu0 0
        %764 = vmatpush1.bf16.msra.mxu0 0
        %765 = vmatprep.subr.bf16.mxu0 0
        %766 = vmatpush1.bf16.msra.mxu0 0
        %767 = vmatprep.subr.bf16.mxu0 0
        %768 = vmatpush1.bf16.msra.mxu0 0
        %769 = vmatprep.subr.bf16.mxu0 0
        %770 = vmatpush1.bf16.msra.mxu0 0
        %771 = vmatprep.mubr.bf16.mxu0 0
        %772 = vmatmul.mubr.bf16.gmra.mrb[0].mxu0 %v722
        %v773 = vpop.f32.mrb[0].mxu0
        %v774 = vadd.f32 0.0, %v773
        %v775 = vpop.f32.mrb[0].mxu0
        %v776 = vpop.f32.mrb[0].mxu0
        %v777 = vadd.f32 0.0, %v776
        %v778 = vpop.f32.mrb[0].mxu0
        %779 = vmatprep.mubr.bf16.mxu0 0
        %780 = vmatmul.mubr.bf16.gmra.mrb[0].mxu0 %v725
        %v781 = vpop.f32.mrb[0].mxu0
        %v782 = vadd.f32 0.0, %v781
        %v783 = vpop.f32.mrb[0].mxu0
        %v784 = vpop.f32.mrb[0].mxu0
        %v785 = vadd.f32 0.0, %v784
        %v786 = vpop.f32.mrb[0].mxu0
        %787 = vmatprep.mubr.bf16.mxu0 0
        %788 = vmatmul.mubr.bf16.gmra.mrb[0].mxu0 %v728
        %v789 = vpop.f32.mrb[0].mxu0
        %v790 = vadd.f32 0.0, %v789
        %v791 = vpop.f32.mrb[0].mxu0
        %v792 = vpop.f32.mrb[0].mxu0
        %v793 = vadd.f32 0.0, %v792
        %v794 = vpop.f32.mrb[0].mxu0
        %795 = vmatprep.mubr.bf16.mxu0 0
        %796 = vmatmul.mubr.bf16.gmra.mrb[0].mxu0 %v731
        %v797 = vpop.f32.mrb[0].mxu0
        %v798 = vadd.f32 0.0, %v797
        %v799 = vpop.f32.mrb[0].mxu0
        %v800 = vpop.f32.mrb[0].mxu0
        %v801 = vadd.f32 0.0, %v800
        %v802 = vpop.f32.mrb[0].mxu0
        %803 = vmatprep.mubr.bf16.mxu0 0
        %804 = vmatmul.mubr.bf16.gmra.mrb[0].mxu0 %v734
        %v805 = vpop.f32.mrb[0].mxu0
        %v806 = vadd.f32 0.0, %v805
        %v807 = vpop.f32.mrb[0].mxu0
        %v808 = vpop.f32.mrb[0].mxu0
        %v809 = vadd.f32 0.0, %v808
        %v810 = vpop.f32.mrb[0].mxu0
        %811 = vdwg.mxu0
        %v812 = vadd.f32 %v696, %v774
        %v813 = vadd.f32 %v697, %v777
        %v814 = vadd.f32 %v698, %v782
        %v815 = vadd.f32 %v699, %v785
        %v816 = vadd.f32 %v700, %v790
        %v817 = vadd.f32 %v701, %v793
        %v818 = vadd.f32 %v702, %v798
        %v819 = vadd.f32 %v703, %v801
        %v820 = vadd.f32 %v704, %v806
        %v821 = vadd.f32 %v705, %v809
        %v822 = vld [vmem:[#allocation2 + $0x14] sm:$0xff]
        %v823 = vld [vmem:[#allocation2 + $0x1c] sm:$0xff]
        %v824 = vld [vmem:[#allocation2 + $0x24] sm:$0xff]
        %v825 = vld [vmem:[#allocation2 + $0x2c] sm:$0xff]
        %v826 = vld [vmem:[#allocation2 + $0x34] sm:$0xff]
        %v827 = vld [vmem:[#allocation2 + $0x3c] sm:$0xff]
        %v828 = vld [vmem:[#allocation2 + $0x44] sm:$0xff]
        %v829 = vld [vmem:[#allocation2 + $0x4c] sm:$0xff]
        %v830 = vld [vmem:[#allocation2 + $0x54] sm:$0xff]
        %v831 = vld [vmem:[#allocation2 + $0x5c] sm:$0xff]
        %v832 = vpack.c.bf16 %v823, %v822
        %v833 = vpack.c.bf16 %v825, %v824
        %v834 = vpack.c.bf16 %v827, %v826
        %v835 = vpack.c.bf16 %v829, %v828
        %v836 = vpack.c.bf16 %v831, %v830
        %v838 = vsel %vm378, %v832, 0
        %v841 = vsel %vm378, %v833, 0
        %v844 = vsel %vm378, %v834, 0
        %v847 = vsel %vm378, %v835, 0
        %v850 = vsel %vm378, %v836, 0
        %v853 = vsel %vm497, %v455, 0
        %855 = vmatprep.subr.bf16.mxu0 0
        %856 = vmatpush1.bf16.msra.mxu0 %v853
        %857 = vmatprep.subr.bf16.mxu0 0
        %858 = vmatpush1.bf16.msra.mxu0 0
        %859 = vmatprep.subr.bf16.mxu0 0
        %860 = vmatpush1.bf16.msra.mxu0 0
        %861 = vmatprep.subr.bf16.mxu0 0
        %862 = vmatpush1.bf16.msra.mxu0 0
        %863 = vmatprep.subr.bf16.mxu0 0
        %864 = vmatpush1.bf16.msra.mxu0 0
        %865 = vmatprep.subr.bf16.mxu0 0
        %866 = vmatpush1.bf16.msra.mxu0 0
        %867 = vmatprep.subr.bf16.mxu0 0
        %868 = vmatpush1.bf16.msra.mxu0 0
        %869 = vmatprep.subr.bf16.mxu0 0
        %870 = vmatpush1.bf16.msra.mxu0 0
        %871 = vmatprep.subr.bf16.mxu0 0
        %872 = vmatpush1.bf16.msra.mxu0 0
        %873 = vmatprep.subr.bf16.mxu0 0
        %874 = vmatpush1.bf16.msra.mxu0 0
        %875 = vmatprep.subr.bf16.mxu0 0
        %876 = vmatpush1.bf16.msra.mxu0 0
        %877 = vmatprep.subr.bf16.mxu0 0
        %878 = vmatpush1.bf16.msra.mxu0 0
        %879 = vmatprep.subr.bf16.mxu0 0
        %880 = vmatpush1.bf16.msra.mxu0 0
        %881 = vmatprep.subr.bf16.mxu0 0
        %882 = vmatpush1.bf16.msra.mxu0 0
        %883 = vmatprep.subr.bf16.mxu0 0
        %884 = vmatpush1.bf16.msra.mxu0 0
        %885 = vmatprep.subr.bf16.mxu0 0
        %886 = vmatpush1.bf16.msra.mxu0 0
        %887 = vmatprep.mubr.bf16.mxu0 0
        %888 = vmatmul.mubr.bf16.gmra.mrb[0].mxu0 %v838
        %v889 = vpop.f32.mrb[0].mxu0
        %v890 = vadd.f32 0.0, %v889
        %v891 = vpop.f32.mrb[0].mxu0
        %v892 = vpop.f32.mrb[0].mxu0
        %v893 = vadd.f32 0.0, %v892
        %v894 = vpop.f32.mrb[0].mxu0
        %895 = vmatprep.mubr.bf16.mxu0 0
        %896 = vmatmul.mubr.bf16.gmra.mrb[0].mxu0 %v841
        %v897 = vpop.f32.mrb[0].mxu0
        %v898 = vadd.f32 0.0, %v897
        %v899 = vpop.f32.mrb[0].mxu0
        %v900 = vpop.f32.mrb[0].mxu0
        %v901 = vadd.f32 0.0, %v900
        %v902 = vpop.f32.mrb[0].mxu0
        %903 = vmatprep.mubr.bf16.mxu0 0
        %904 = vmatmul.mubr.bf16.gmra.mrb[0].mxu0 %v844
        %v905 = vpop.f32.mrb[0].mxu0
        %v906 = vadd.f32 0.0, %v905
        %v907 = vpop.f32.mrb[0].mxu0
        %v908 = vpop.f32.mrb[0].mxu0
        %v909 = vadd.f32 0.0, %v908
        %v910 = vpop.f32.mrb[0].mxu0
        %911 = vmatprep.mubr.bf16.mxu0 0
        %912 = vmatmul.mubr.bf16.gmra.mrb[0].mxu0 %v847
        %v913 = vpop.f32.mrb[0].mxu0
        %v914 = vadd.f32 0.0, %v913
        %v915 = vpop.f32.mrb[0].mxu0
        %v916 = vpop.f32.mrb[0].mxu0
        %v917 = vadd.f32 0.0, %v916
        %v918 = vpop.f32.mrb[0].mxu0
        %919 = vmatprep.mubr.bf16.mxu0 0
        %920 = vmatmul.mubr.bf16.gmra.mrb[0].mxu0 %v850
        %v921 = vpop.f32.mrb[0].mxu0
        %v922 = vadd.f32 0.0, %v921
        %v923 = vpop.f32.mrb[0].mxu0
        %v924 = vpop.f32.mrb[0].mxu0
        %v925 = vadd.f32 0.0, %v924
        %v926 = vpop.f32.mrb[0].mxu0
        %927 = vdwg.mxu0
        %v928 = vadd.f32 %v812, %v890
        %v929 = vadd.f32 %v813, %v893
        %v930 = vadd.f32 %v814, %v898
        %v931 = vadd.f32 %v815, %v901
        %v932 = vadd.f32 %v816, %v906
        %v933 = vadd.f32 %v817, %v909
        %v934 = vadd.f32 %v818, %v914
        %v935 = vadd.f32 %v819, %v917
        %v936 = vadd.f32 %v820, %v922
        %v937 = vadd.f32 %v821, %v925
        %v938 = vld [vmem:[#allocation2 + $0x15] sm:$0xff]
        %v939 = vld [vmem:[#allocation2 + $0x1d] sm:$0xff]
        %v940 = vld [vmem:[#allocation2 + $0x25] sm:$0xff]
        %v941 = vld [vmem:[#allocation2 + $0x2d] sm:$0xff]
        %v942 = vld [vmem:[#allocation2 + $0x35] sm:$0xff]
        %v943 = vld [vmem:[#allocation2 + $0x3d] sm:$0xff]
        %v944 = vld [vmem:[#allocation2 + $0x45] sm:$0xff]
        %v945 = vld [vmem:[#allocation2 + $0x4d] sm:$0xff]
        %v946 = vld [vmem:[#allocation2 + $0x55] sm:$0xff]
        %v947 = vld [vmem:[#allocation2 + $0x5d] sm:$0xff]
        %v948 = vpack.c.bf16 %v939, %v938
        %v949 = vpack.c.bf16 %v941, %v940
        %v950 = vpack.c.bf16 %v943, %v942
        %v951 = vpack.c.bf16 %v945, %v944
        %v952 = vpack.c.bf16 %v947, %v946
        %v954 = vsel %vm378, %v948, 0
        %v957 = vsel %vm378, %v949, 0
        %v960 = vsel %vm378, %v950, 0
        %v963 = vsel %vm378, %v951, 0
        %v966 = vsel %vm378, %v952, 0
        %v969 = vsel %vm497, %v457, 0
        %971 = vmatprep.subr.bf16.mxu0 0
        %972 = vmatpush1.bf16.msra.mxu0 %v969
        %973 = vmatprep.subr.bf16.mxu0 0
        %974 = vmatpush1.bf16.msra.mxu0 0
        %975 = vmatprep.subr.bf16.mxu0 0
        %976 = vmatpush1.bf16.msra.mxu0 0
        %977 = vmatprep.subr.bf16.mxu0 0
        %978 = vmatpush1.bf16.msra.mxu0 0
        %979 = vmatprep.subr.bf16.mxu0 0
        %980 = vmatpush1.bf16.msra.mxu0 0
        %981 = vmatprep.subr.bf16.mxu0 0
        %982 = vmatpush1.bf16.msra.mxu0 0
        %983 = vmatprep.subr.bf16.mxu0 0
        %984 = vmatpush1.bf16.msra.mxu0 0
        %985 = vmatprep.subr.bf16.mxu0 0
        %986 = vmatpush1.bf16.msra.mxu0 0
        %987 = vmatprep.subr.bf16.mxu0 0
        %988 = vmatpush1.bf16.msra.mxu0 0
        %989 = vmatprep.subr.bf16.mxu0 0
        %990 = vmatpush1.bf16.msra.mxu0 0
        %991 = vmatprep.subr.bf16.mxu0 0
        %992 = vmatpush1.bf16.msra.mxu0 0
        %993 = vmatprep.subr.bf16.mxu0 0
        %994 = vmatpush1.bf16.msra.mxu0 0
        %995 = vmatprep.subr.bf16.mxu0 0
        %996 = vmatpush1.bf16.msra.mxu0 0
        %997 = vmatprep.subr.bf16.mxu0 0
        %998 = vmatpush1.bf16.msra.mxu0 0
        %999 = vmatprep.subr.bf16.mxu0 0
        %1000 = vmatpush1.bf16.msra.mxu0 0
        %1001 = vmatprep.subr.bf16.mxu0 0
        %1002 = vmatpush1.bf16.msra.mxu0 0
        %1003 = vmatprep.mubr.bf16.mxu0 0
        %1004 = vmatmul.mubr.bf16.gmra.mrb[0].mxu0 %v954
        %v1005 = vpop.f32.mrb[0].mxu0
        %v1006 = vadd.f32 0.0, %v1005
        %v1007 = vpop.f32.mrb[0].mxu0
        %v1008 = vpop.f32.mrb[0].mxu0
        %v1009 = vadd.f32 0.0, %v1008
        %v1010 = vpop.f32.mrb[0].mxu0
        %1011 = vmatprep.mubr.bf16.mxu0 0
        %1012 = vmatmul.mubr.bf16.gmra.mrb[0].mxu0 %v957
        %v1013 = vpop.f32.mrb[0].mxu0
        %v1014 = vadd.f32 0.0, %v1013
        %v1015 = vpop.f32.mrb[0].mxu0
        %v1016 = vpop.f32.mrb[0].mxu0
        %v1017 = vadd.f32 0.0, %v1016
        %v1018 = vpop.f32.mrb[0].mxu0
        %1019 = vmatprep.mubr.bf16.mxu0 0
        %1020 = vmatmul.mubr.bf16.gmra.mrb[0].mxu0 %v960
        %v1021 = vpop.f32.mrb[0].mxu0
        %v1022 = vadd.f32 0.0, %v1021
        %v1023 = vpop.f32.mrb[0].mxu0
        %v1024 = vpop.f32.mrb[0].mxu0
        %v1025 = vadd.f32 0.0, %v1024
        %v1026 = vpop.f32.mrb[0].mxu0
        %1027 = vmatprep.mubr.bf16.mxu0 0
        %1028 = vmatmul.mubr.bf16.gmra.mrb[0].mxu0 %v963
        %v1029 = vpop.f32.mrb[0].mxu0
        %v1030 = vadd.f32 0.0, %v1029
        %v1031 = vpop.f32.mrb[0].mxu0
        %v1032 = vpop.f32.mrb[0].mxu0
        %v1033 = vadd.f32 0.0, %v1032
        %v1034 = vpop.f32.mrb[0].mxu0
        %1035 = vmatprep.mubr.bf16.mxu0 0
        %1036 = vmatmul.mubr.bf16.gmra.mrb[0].mxu0 %v966
        %v1037 = vpop.f32.mrb[0].mxu0
        %v1038 = vadd.f32 0.0, %v1037
        %v1039 = vpop.f32.mrb[0].mxu0
        %v1040 = vpop.f32.mrb[0].mxu0
        %v1041 = vadd.f32 0.0, %v1040
        %v1042 = vpop.f32.mrb[0].mxu0
        %1043 = vdwg.mxu0
        %v1044 = vadd.f32 %v928, %v1006
        %v1045 = vadd.f32 %v929, %v1009
        %v1046 = vadd.f32 %v930, %v1014
        %v1047 = vadd.f32 %v931, %v1017
        %v1048 = vadd.f32 %v932, %v1022
        %v1049 = vadd.f32 %v933, %v1025
        %v1050 = vadd.f32 %v934, %v1030
        %v1051 = vadd.f32 %v935, %v1033
        %v1052 = vadd.f32 %v936, %v1038
        %v1053 = vadd.f32 %v937, %v1041
        %v1054 = vld [vmem:[#allocation2 + $0x16] sm:$0xff]
        %v1055 = vld [vmem:[#allocation2 + $0x1e] sm:$0xff]
        %v1056 = vld [vmem:[#allocation2 + $0x26] sm:$0xff]
        %v1057 = vld [vmem:[#allocation2 + $0x2e] sm:$0xff]
        %v1058 = vld [vmem:[#allocation2 + $0x36] sm:$0xff]
        %v1059 = vld [vmem:[#allocation2 + $0x3e] sm:$0xff]
        %v1060 = vld [vmem:[#allocation2 + $0x46] sm:$0xff]
        %v1061 = vld [vmem:[#allocation2 + $0x4e] sm:$0xff]
        %v1062 = vld [vmem:[#allocation2 + $0x56] sm:$0xff]
        %v1063 = vld [vmem:[#allocation2 + $0x5e] sm:$0xff]
        %v1064 = vpack.c.bf16 %v1055, %v1054
        %v1065 = vpack.c.bf16 %v1057, %v1056
        %v1066 = vpack.c.bf16 %v1059, %v1058
        %v1067 = vpack.c.bf16 %v1061, %v1060
        %v1068 = vpack.c.bf16 %v1063, %v1062
        %v1070 = vsel %vm378, %v1064, 0
        %v1073 = vsel %vm378, %v1065, 0
        %v1076 = vsel %vm378, %v1066, 0
        %v1079 = vsel %vm378, %v1067, 0
        %v1082 = vsel %vm378, %v1068, 0
        %v1085 = vsel %vm497, %v459, 0
        %1087 = vmatprep.subr.bf16.mxu0 0
        %1088 = vmatpush1.bf16.msra.mxu0 %v1085
        %1089 = vmatprep.subr.bf16.mxu0 0
        %1090 = vmatpush1.bf16.msra.mxu0 0
        %1091 = vmatprep.subr.bf16.mxu0 0
        %1092 = vmatpush1.bf16.msra.mxu0 0
        %1093 = vmatprep.subr.bf16.mxu0 0
        %1094 = vmatpush1.bf16.msra.mxu0 0
        %1095 = vmatprep.subr.bf16.mxu0 0
        %1096 = vmatpush1.bf16.msra.mxu0 0
        %1097 = vmatprep.subr.bf16.mxu0 0
        %1098 = vmatpush1.bf16.msra.mxu0 0
        %1099 = vmatprep.subr.bf16.mxu0 0
        %1100 = vmatpush1.bf16.msra.mxu0 0
        %1101 = vmatprep.subr.bf16.mxu0 0
        %1102 = vmatpush1.bf16.msra.mxu0 0
        %1103 = vmatprep.subr.bf16.mxu0 0
        %1104 = vmatpush1.bf16.msra.mxu0 0
        %1105 = vmatprep.subr.bf16.mxu0 0
        %1106 = vmatpush1.bf16.msra.mxu0 0
        %1107 = vmatprep.subr.bf16.mxu0 0
        %1108 = vmatpush1.bf16.msra.mxu0 0
        %1109 = vmatprep.subr.bf16.mxu0 0
        %1110 = vmatpush1.bf16.msra.mxu0 0
        %1111 = vmatprep.subr.bf16.mxu0 0
        %1112 = vmatpush1.bf16.msra.mxu0 0
        %1113 = vmatprep.subr.bf16.mxu0 0
        %1114 = vmatpush1.bf16.msra.mxu0 0
        %1115 = vmatprep.subr.bf16.mxu0 0
        %1116 = vmatpush1.bf16.msra.mxu0 0
        %1117 = vmatprep.subr.bf16.mxu0 0
        %1118 = vmatpush1.bf16.msra.mxu0 0
        %1119 = vmatprep.mubr.bf16.mxu0 0
        %1120 = vmatmul.mubr.bf16.gmra.mrb[0].mxu0 %v1070
        %v1121 = vpop.f32.mrb[0].mxu0
        %v1122 = vadd.f32 0.0, %v1121
        %v1123 = vpop.f32.mrb[0].mxu0
        %v1124 = vpop.f32.mrb[0].mxu0
        %v1125 = vadd.f32 0.0, %v1124
        %v1126 = vpop.f32.mrb[0].mxu0
        %1127 = vmatprep.mubr.bf16.mxu0 0
        %1128 = vmatmul.mubr.bf16.gmra.mrb[0].mxu0 %v1073
        %v1129 = vpop.f32.mrb[0].mxu0
        %v1130 = vadd.f32 0.0, %v1129
        %v1131 = vpop.f32.mrb[0].mxu0
        %v1132 = vpop.f32.mrb[0].mxu0
        %v1133 = vadd.f32 0.0, %v1132
        %v1134 = vpop.f32.mrb[0].mxu0
        %1135 = vmatprep.mubr.bf16.mxu0 0
        %1136 = vmatmul.mubr.bf16.gmra.mrb[0].mxu0 %v1076
        %v1137 = vpop.f32.mrb[0].mxu0
        %v1138 = vadd.f32 0.0, %v1137
        %v1139 = vpop.f32.mrb[0].mxu0
        %v1140 = vpop.f32.mrb[0].mxu0
        %v1141 = vadd.f32 0.0, %v1140
        %v1142 = vpop.f32.mrb[0].mxu0
        %1143 = vmatprep.mubr.bf16.mxu0 0
        %1144 = vmatmul.mubr.bf16.gmra.mrb[0].mxu0 %v1079
        %v1145 = vpop.f32.mrb[0].mxu0
        %v1146 = vadd.f32 0.0, %v1145
        %v1147 = vpop.f32.mrb[0].mxu0
        %v1148 = vpop.f32.mrb[0].mxu0
        %v1149 = vadd.f32 0.0, %v1148
        %v1150 = vpop.f32.mrb[0].mxu0
        %1151 = vmatprep.mubr.bf16.mxu0 0
        %1152 = vmatmul.mubr.bf16.gmra.mrb[0].mxu0 %v1082
        %v1153 = vpop.f32.mrb[0].mxu0
        %v1154 = vadd.f32 0.0, %v1153
        %v1155 = vpop.f32.mrb[0].mxu0
        %v1156 = vpop.f32.mrb[0].mxu0
        %v1157 = vadd.f32 0.0, %v1156
        %v1158 = vpop.f32.mrb[0].mxu0
        %1159 = vdwg.mxu0
        %v1160 = vadd.f32 %v1044, %v1122
        %v1161 = vadd.f32 %v1045, %v1125
        %v1162 = vadd.f32 %v1046, %v1130
        %v1163 = vadd.f32 %v1047, %v1133
        %v1164 = vadd.f32 %v1048, %v1138
        %v1165 = vadd.f32 %v1049, %v1141
        %v1166 = vadd.f32 %v1050, %v1146
        %v1167 = vadd.f32 %v1051, %v1149
        %v1168 = vadd.f32 %v1052, %v1154
        %v1169 = vadd.f32 %v1053, %v1157
        %v1170 = vld [vmem:[#allocation2 + $0x28] sm:$0xff]
        %v1171 = vld [vmem:[#allocation2 + $0x30] sm:$0xff]
        %v1172 = vld [vmem:[#allocation2 + $0x38] sm:$0xff]
        %v1173 = vld [vmem:[#allocation2 + $0x40] sm:$0xff]
        %v1174 = vld [vmem:[#allocation2 + $0x48] sm:$0xff]
        %v1175 = vld [vmem:[#allocation2 + $0x50] sm:$0xff]
        %v1176 = vld [vmem:[#allocation2 + $0x58] sm:$0xff]
        %v1177 = vld [vmem:[#allocation2 + $0x60] sm:$0xff]
        %v1178 = vld [vmem:[#allocation2 + $0x68] sm:$0xff]
        %v1179 = vld [vmem:[#allocation2 + $0x70] sm:$0xff]
        %v1180 = vpack.c.bf16 %v1171, %v1170
        %v1181 = vpack.c.bf16 %v1173, %v1172
        %v1182 = vpack.c.bf16 %v1175, %v1174
        %v1183 = vpack.c.bf16 %v1177, %v1176
        %v1184 = vpack.c.bf16 %v1179, %v1178
        %v1186 = vsel %vm378, %v1180, 0
        %v1189 = vsel %vm378, %v1181, 0
        %v1192 = vsel %vm378, %v1182, 0
        %v1195 = vsel %vm378, %v1183, 0
        %v1198 = vsel %vm378, %v1184, 0
        %v1201 = vsel %vm497, %v461, 0
        %1203 = vmatprep.subr.bf16.mxu0 0
        %1204 = vmatpush1.bf16.msra.mxu0 %v1201
        %1205 = vmatprep.subr.bf16.mxu0 0
        %1206 = vmatpush1.bf16.msra.mxu0 0
        %1207 = vmatprep.subr.bf16.mxu0 0
        %1208 = vmatpush1.bf16.msra.mxu0 0
        %1209 = vmatprep.subr.bf16.mxu0 0
        %1210 = vmatpush1.bf16.msra.mxu0 0
        %1211 = vmatprep.subr.bf16.mxu0 0
        %1212 = vmatpush1.bf16.msra.mxu0 0
        %1213 = vmatprep.subr.bf16.mxu0 0
        %1214 = vmatpush1.bf16.msra.mxu0 0
        %1215 = vmatprep.subr.bf16.mxu0 0
        %1216 = vmatpush1.bf16.msra.mxu0 0
        %1217 = vmatprep.subr.bf16.mxu0 0
        %1218 = vmatpush1.bf16.msra.mxu0 0
        %1219 = vmatprep.subr.bf16.mxu0 0
        %1220 = vmatpush1.bf16.msra.mxu0 0
        %1221 = vmatprep.subr.bf16.mxu0 0
        %1222 = vmatpush1.bf16.msra.mxu0 0
        %1223 = vmatprep.subr.bf16.mxu0 0
        %1224 = vmatpush1.bf16.msra.mxu0 0
        %1225 = vmatprep.subr.bf16.mxu0 0
        %1226 = vmatpush1.bf16.msra.mxu0 0
        %1227 = vmatprep.subr.bf16.mxu0 0
        %1228 = vmatpush1.bf16.msra.mxu0 0
        %1229 = vmatprep.subr.bf16.mxu0 0
        %1230 = vmatpush1.bf16.msra.mxu0 0
        %1231 = vmatprep.subr.bf16.mxu0 0
        %1232 = vmatpush1.bf16.msra.mxu0 0
        %1233 = vmatprep.subr.bf16.mxu0 0
        %1234 = vmatpush1.bf16.msra.mxu0 0
        %1235 = vmatprep.mubr.bf16.mxu0 0
        %1236 = vmatmul.mubr.bf16.gmra.mrb[0].mxu0 %v1186
        %v1237 = vpop.f32.mrb[0].mxu0
        %v1238 = vadd.f32 0.0, %v1237
        %v1239 = vpop.f32.mrb[0].mxu0
        %v1240 = vpop.f32.mrb[0].mxu0
        %v1241 = vadd.f32 0.0, %v1240
        %v1242 = vpop.f32.mrb[0].mxu0
        %1243 = vmatprep.mubr.bf16.mxu0 0
        %1244 = vmatmul.mubr.bf16.gmra.mrb[0].mxu0 %v1189
        %v1245 = vpop.f32.mrb[0].mxu0
        %v1246 = vadd.f32 0.0, %v1245
        %v1247 = vpop.f32.mrb[0].mxu0
        %v1248 = vpop.f32.mrb[0].mxu0
        %v1249 = vadd.f32 0.0, %v1248
        %v1250 = vpop.f32.mrb[0].mxu0
        %1251 = vmatprep.mubr.bf16.mxu0 0
        %1252 = vmatmul.mubr.bf16.gmra.mrb[0].mxu0 %v1192
        %v1253 = vpop.f32.mrb[0].mxu0
        %v1254 = vadd.f32 0.0, %v1253
        %v1255 = vpop.f32.mrb[0].mxu0
        %v1256 = vpop.f32.mrb[0].mxu0
        %v1257 = vadd.f32 0.0, %v1256
        %v1258 = vpop.f32.mrb[0].mxu0
        %1259 = vmatprep.mubr.bf16.mxu0 0
        %1260 = vmatmul.mubr.bf16.gmra.mrb[0].mxu0 %v1195
        %v1261 = vpop.f32.mrb[0].mxu0
        %v1262 = vadd.f32 0.0, %v1261
        %v1263 = vpop.f32.mrb[0].mxu0
        %v1264 = vpop.f32.mrb[0].mxu0
        %v1265 = vadd.f32 0.0, %v1264
        %v1266 = vpop.f32.mrb[0].mxu0
        %1267 = vmatprep.mubr.bf16.mxu0 0
        %1268 = vmatmul.mubr.bf16.gmra.mrb[0].mxu0 %v1198
        %v1269 = vpop.f32.mrb[0].mxu0
        %v1270 = vadd.f32 0.0, %v1269
        %v1271 = vpop.f32.mrb[0].mxu0
        %v1272 = vpop.f32.mrb[0].mxu0
        %v1273 = vadd.f32 0.0, %v1272
        %v1274 = vpop.f32.mrb[0].mxu0
        %1275 = vdwg.mxu0
        %v1276 = vadd.f32 %v1160, %v1238
        %v1277 = vadd.f32 %v1161, %v1241
        %v1278 = vadd.f32 %v1162, %v1246
        %v1279 = vadd.f32 %v1163, %v1249
        %v1280 = vadd.f32 %v1164, %v1254
        %v1281 = vadd.f32 %v1165, %v1257
        %v1282 = vadd.f32 %v1166, %v1262
        %v1283 = vadd.f32 %v1167, %v1265
        %v1284 = vadd.f32 %v1168, %v1270
        %v1285 = vadd.f32 %v1169, %v1273
        %v1286 = vld [vmem:[#allocation2 + $0x29] sm:$0xff]
        %v1287 = vld [vmem:[#allocation2 + $0x31] sm:$0xff]
        %v1288 = vld [vmem:[#allocation2 + $0x39] sm:$0xff]
        %v1289 = vld [vmem:[#allocation2 + $0x41] sm:$0xff]
        %v1290 = vld [vmem:[#allocation2 + $0x49] sm:$0xff]
        %v1291 = vld [vmem:[#allocation2 + $0x51] sm:$0xff]
        %v1292 = vld [vmem:[#allocation2 + $0x59] sm:$0xff]
        %v1293 = vld [vmem:[#allocation2 + $0x61] sm:$0xff]
        %v1294 = vld [vmem:[#allocation2 + $0x69] sm:$0xff]
        %v1295 = vld [vmem:[#allocation2 + $0x71] sm:$0xff]
        %v1296 = vpack.c.bf16 %v1287, %v1286
        %v1297 = vpack.c.bf16 %v1289, %v1288
        %v1298 = vpack.c.bf16 %v1291, %v1290
        %v1299 = vpack.c.bf16 %v1293, %v1292
        %v1300 = vpack.c.bf16 %v1295, %v1294
        %v1302 = vsel %vm378, %v1296, 0
        %v1305 = vsel %vm378, %v1297, 0
        %v1308 = vsel %vm378, %v1298, 0
        %v1311 = vsel %vm378, %v1299, 0
        %v1314 = vsel %vm378, %v1300, 0
        %v1317 = vsel %vm497, %v463, 0
        %1319 = vmatprep.subr.bf16.mxu0 0
        %1320 = vmatpush1.bf16.msra.mxu0 %v1317
        %1321 = vmatprep.subr.bf16.mxu0 0
        %1322 = vmatpush1.bf16.msra.mxu0 0
        %1323 = vmatprep.subr.bf16.mxu0 0
        %1324 = vmatpush1.bf16.msra.mxu0 0
        %1325 = vmatprep.subr.bf16.mxu0 0
        %1326 = vmatpush1.bf16.msra.mxu0 0
        %1327 = vmatprep.subr.bf16.mxu0 0
        %1328 = vmatpush1.bf16.msra.mxu0 0
        %1329 = vmatprep.subr.bf16.mxu0 0
        %1330 = vmatpush1.bf16.msra.mxu0 0
        %1331 = vmatprep.subr.bf16.mxu0 0
        %1332 = vmatpush1.bf16.msra.mxu0 0
        %1333 = vmatprep.subr.bf16.mxu0 0
        %1334 = vmatpush1.bf16.msra.mxu0 0
        %1335 = vmatprep.subr.bf16.mxu0 0
        %1336 = vmatpush1.bf16.msra.mxu0 0
        %1337 = vmatprep.subr.bf16.mxu0 0
        %1338 = vmatpush1.bf16.msra.mxu0 0
        %1339 = vmatprep.subr.bf16.mxu0 0
        %1340 = vmatpush1.bf16.msra.mxu0 0
        %1341 = vmatprep.subr.bf16.mxu0 0
        %1342 = vmatpush1.bf16.msra.mxu0 0
        %1343 = vmatprep.subr.bf16.mxu0 0
        %1344 = vmatpush1.bf16.msra.mxu0 0
        %1345 = vmatprep.subr.bf16.mxu0 0
        %1346 = vmatpush1.bf16.msra.mxu0 0
        %1347 = vmatprep.subr.bf16.mxu0 0
        %1348 = vmatpush1.bf16.msra.mxu0 0
        %1349 = vmatprep.subr.bf16.mxu0 0
        %1350 = vmatpush1.bf16.msra.mxu0 0
        %1351 = vmatprep.mubr.bf16.mxu0 0
        %1352 = vmatmul.mubr.bf16.gmra.mrb[0].mxu0 %v1302
        %v1353 = vpop.f32.mrb[0].mxu0
        %v1354 = vadd.f32 0.0, %v1353
        %v1355 = vpop.f32.mrb[0].mxu0
        %v1356 = vpop.f32.mrb[0].mxu0
        %v1357 = vadd.f32 0.0, %v1356
        %v1358 = vpop.f32.mrb[0].mxu0
        %1359 = vmatprep.mubr.bf16.mxu0 0
        %1360 = vmatmul.mubr.bf16.gmra.mrb[0].mxu0 %v1305
        %v1361 = vpop.f32.mrb[0].mxu0
        %v1362 = vadd.f32 0.0, %v1361
        %v1363 = vpop.f32.mrb[0].mxu0
        %v1364 = vpop.f32.mrb[0].mxu0
        %v1365 = vadd.f32 0.0, %v1364
        %v1366 = vpop.f32.mrb[0].mxu0
        %1367 = vmatprep.mubr.bf16.mxu0 0
        %1368 = vmatmul.mubr.bf16.gmra.mrb[0].mxu0 %v1308
        %v1369 = vpop.f32.mrb[0].mxu0
        %v1370 = vadd.f32 0.0, %v1369
        %v1371 = vpop.f32.mrb[0].mxu0
        %v1372 = vpop.f32.mrb[0].mxu0
        %v1373 = vadd.f32 0.0, %v1372
        %v1374 = vpop.f32.mrb[0].mxu0
        %1375 = vmatprep.mubr.bf16.mxu0 0
        %1376 = vmatmul.mubr.bf16.gmra.mrb[0].mxu0 %v1311
        %v1377 = vpop.f32.mrb[0].mxu0
        %v1378 = vadd.f32 0.0, %v1377
        %v1379 = vpop.f32.mrb[0].mxu0
        %v1380 = vpop.f32.mrb[0].mxu0
        %v1381 = vadd.f32 0.0, %v1380
        %v1382 = vpop.f32.mrb[0].mxu0
        %1383 = vmatprep.mubr.bf16.mxu0 0
        %1384 = vmatmul.mubr.bf16.gmra.mrb[0].mxu0 %v1314
        %v1385 = vpop.f32.mrb[0].mxu0
        %v1386 = vadd.f32 0.0, %v1385
        %v1387 = vpop.f32.mrb[0].mxu0
        %v1388 = vpop.f32.mrb[0].mxu0
        %v1389 = vadd.f32 0.0, %v1388
        %v1390 = vpop.f32.mrb[0].mxu0
        %1391 = vdwg.mxu0
        %v1392 = vadd.f32 %v1276, %v1354
        %v1393 = vadd.f32 %v1277, %v1357
        %v1394 = vadd.f32 %v1278, %v1362
        %v1395 = vadd.f32 %v1279, %v1365
        %v1396 = vadd.f32 %v1280, %v1370
        %v1397 = vadd.f32 %v1281, %v1373
        %v1398 = vadd.f32 %v1282, %v1378
        %v1399 = vadd.f32 %v1283, %v1381
        %v1400 = vadd.f32 %v1284, %v1386
        %v1401 = vadd.f32 %v1285, %v1389
        %v1402 = vld [vmem:[#allocation2 + $0x2a] sm:$0xff]
        %v1403 = vld [vmem:[#allocation2 + $0x32] sm:$0xff]
        %v1404 = vld [vmem:[#allocation2 + $0x3a] sm:$0xff]
        %v1405 = vld [vmem:[#allocation2 + $0x42] sm:$0xff]
        %v1406 = vld [vmem:[#allocation2 + $0x4a] sm:$0xff]
        %v1407 = vld [vmem:[#allocation2 + $0x52] sm:$0xff]
        %v1408 = vld [vmem:[#allocation2 + $0x5a] sm:$0xff]
        %v1409 = vld [vmem:[#allocation2 + $0x62] sm:$0xff]
        %v1410 = vld [vmem:[#allocation2 + $0x6a] sm:$0xff]
        %v1411 = vld [vmem:[#allocation2 + $0x72] sm:$0xff]
        %v1412 = vpack.c.bf16 %v1403, %v1402
        %v1413 = vpack.c.bf16 %v1405, %v1404
        %v1414 = vpack.c.bf16 %v1407, %v1406
        %v1415 = vpack.c.bf16 %v1409, %v1408
        %v1416 = vpack.c.bf16 %v1411, %v1410
        %v1418 = vsel %vm378, %v1412, 0
        %v1421 = vsel %vm378, %v1413, 0
        %v1424 = vsel %vm378, %v1414, 0
        %v1427 = vsel %vm378, %v1415, 0
        %v1430 = vsel %vm378, %v1416, 0
        %v1433 = vsel %vm497, %v465, 0
        %1435 = vmatprep.subr.bf16.mxu0 0
        %1436 = vmatpush1.bf16.msra.mxu0 %v1433
        %1437 = vmatprep.subr.bf16.mxu0 0
        %1438 = vmatpush1.bf16.msra.mxu0 0
        %1439 = vmatprep.subr.bf16.mxu0 0
        %1440 = vmatpush1.bf16.msra.mxu0 0
        %1441 = vmatprep.subr.bf16.mxu0 0
        %1442 = vmatpush1.bf16.msra.mxu0 0
        %1443 = vmatprep.subr.bf16.mxu0 0
        %1444 = vmatpush1.bf16.msra.mxu0 0
        %1445 = vmatprep.subr.bf16.mxu0 0
        %1446 = vmatpush1.bf16.msra.mxu0 0
        %1447 = vmatprep.subr.bf16.mxu0 0
        %1448 = vmatpush1.bf16.msra.mxu0 0
        %1449 = vmatprep.subr.bf16.mxu0 0
        %1450 = vmatpush1.bf16.msra.mxu0 0
        %1451 = vmatprep.subr.bf16.mxu0 0
        %1452 = vmatpush1.bf16.msra.mxu0 0
        %1453 = vmatprep.subr.bf16.mxu0 0
        %1454 = vmatpush1.bf16.msra.mxu0 0
        %1455 = vmatprep.subr.bf16.mxu0 0
        %1456 = vmatpush1.bf16.msra.mxu0 0
        %1457 = vmatprep.subr.bf16.mxu0 0
        %1458 = vmatpush1.bf16.msra.mxu0 0
        %1459 = vmatprep.subr.bf16.mxu0 0
        %1460 = vmatpush1.bf16.msra.mxu0 0
        %1461 = vmatprep.subr.bf16.mxu0 0
        %1462 = vmatpush1.bf16.msra.mxu0 0
        %1463 = vmatprep.subr.bf16.mxu0 0
        %1464 = vmatpush1.bf16.msra.mxu0 0
        %1465 = vmatprep.subr.bf16.mxu0 0
        %1466 = vmatpush1.bf16.msra.mxu0 0
        %1467 = vmatprep.mubr.bf16.mxu0 0
        %1468 = vmatmul.mubr.bf16.gmra.mrb[0].mxu0 %v1418
        %v1469 = vpop.f32.mrb[0].mxu0
        %v1470 = vadd.f32 0.0, %v1469
        %v1471 = vpop.f32.mrb[0].mxu0
        %v1472 = vpop.f32.mrb[0].mxu0
        %v1473 = vadd.f32 0.0, %v1472
        %v1474 = vpop.f32.mrb[0].mxu0
        %1475 = vmatprep.mubr.bf16.mxu0 0
        %1476 = vmatmul.mubr.bf16.gmra.mrb[0].mxu0 %v1421
        %v1477 = vpop.f32.mrb[0].mxu0
        %v1478 = vadd.f32 0.0, %v1477
        %v1479 = vpop.f32.mrb[0].mxu0
        %v1480 = vpop.f32.mrb[0].mxu0
        %v1481 = vadd.f32 0.0, %v1480
        %v1482 = vpop.f32.mrb[0].mxu0
        %1483 = vmatprep.mubr.bf16.mxu0 0
        %1484 = vmatmul.mubr.bf16.gmra.mrb[0].mxu0 %v1424
        %v1485 = vpop.f32.mrb[0].mxu0
        %v1486 = vadd.f32 0.0, %v1485
        %v1487 = vpop.f32.mrb[0].mxu0
        %v1488 = vpop.f32.mrb[0].mxu0
        %v1489 = vadd.f32 0.0, %v1488
        %v1490 = vpop.f32.mrb[0].mxu0
        %1491 = vmatprep.mubr.bf16.mxu0 0
        %1492 = vmatmul.mubr.bf16.gmra.mrb[0].mxu0 %v1427
        %v1493 = vpop.f32.mrb[0].mxu0
        %v1494 = vadd.f32 0.0, %v1493
        %v1495 = vpop.f32.mrb[0].mxu0
        %v1496 = vpop.f32.mrb[0].mxu0
        %v1497 = vadd.f32 0.0, %v1496
        %v1498 = vpop.f32.mrb[0].mxu0
        %1499 = vmatprep.mubr.bf16.mxu0 0
        %1500 = vmatmul.mubr.bf16.gmra.mrb[0].mxu0 %v1430
        %v1501 = vpop.f32.mrb[0].mxu0
        %v1502 = vadd.f32 0.0, %v1501
        %v1503 = vpop.f32.mrb[0].mxu0
        %v1504 = vpop.f32.mrb[0].mxu0
        %v1505 = vadd.f32 0.0, %v1504
        %v1506 = vpop.f32.mrb[0].mxu0
        %1507 = vdwg.mxu0
        %v1508 = vadd.f32 %v1392, %v1470
        %v1509 = vadd.f32 %v1393, %v1473
        %v1510 = vadd.f32 %v1394, %v1478
        %v1511 = vadd.f32 %v1395, %v1481
        %v1512 = vadd.f32 %v1396, %v1486
        %v1513 = vadd.f32 %v1397, %v1489
        %v1514 = vadd.f32 %v1398, %v1494
        %v1515 = vadd.f32 %v1399, %v1497
        %v1516 = vadd.f32 %v1400, %v1502
        %v1517 = vadd.f32 %v1401, %v1505
        %1518 = vst [vmem:[%s263] sm:$0xff] %v1508
        %1519 = vst [vmem:[%s263 + $0x8] sm:$0xff] %v1509
        %1520 = vst [vmem:[%s263 + $0x10] sm:$0xff] %v1510
        %1521 = vst [vmem:[%s263 + $0x18] sm:$0xff] %v1511
        %1522 = vst [vmem:[%s263 + $0x20] sm:$0xff] %v1512
        %1523 = vst [vmem:[%s263 + $0x28] sm:$0xff] %v1513
        %1524 = vst [vmem:[%s263 + $0x30] sm:$0xff] %v1514
        %1525 = vst [vmem:[%s263 + $0x38] sm:$0xff] %v1515
        %1526 = vst [vmem:[%s263 + $0x40] sm:$0xff] %v1516
        %1527 = vst [vmem:[%s263 + $0x48] sm:$0xff] %v1517
        %v1528 = vld [vmem:[#allocation2 + $0x50] sm:$0xff]
        %v1529 = vld [vmem:[#allocation2 + $0x58] sm:$0xff]
        %v1530 = vld [vmem:[#allocation2 + $0x60] sm:$0xff]
        %v1531 = vld [vmem:[#allocation2 + $0x68] sm:$0xff]
        %v1532 = vld [vmem:[#allocation2 + $0x70] sm:$0xff]
        %v1533 = vld [vmem:[#allocation2 + $0x78] sm:$0xff]
        %v1534 = vld [vmem:[#allocation2 + $0x80] sm:$0xff]
        %v1535 = vld [vmem:[#allocation2 + $0x88] sm:$0xff]
        %v1536 = vld [vmem:[#allocation2 + $0x90] sm:$0xff]
        %v1537 = vld [vmem:[#allocation2 + $0x98] sm:$0xff]
        %v1538 = vpack.c.bf16 %v1529, %v1528
        %v1539 = vpack.c.bf16 %v1531, %v1530
        %v1540 = vpack.c.bf16 %v1533, %v1532
        %v1541 = vpack.c.bf16 %v1535, %v1534
        %v1542 = vpack.c.bf16 %v1537, %v1536
        %v1544 = vsel %vm378, %v1538, 0
        %v1547 = vsel %vm378, %v1539, 0
        %v1550 = vsel %vm378, %v1540, 0
        %v1553 = vsel %vm378, %v1541, 0
        %v1556 = vsel %vm378, %v1542, 0
        %1558 = vmatprep.subr.bf16.mxu0 0
        %1559 = vmatpush1.bf16.msra.mxu0 %v499
        %1560 = vmatprep.subr.bf16.mxu0 0
        %1561 = vmatpush1.bf16.msra.mxu0 0
        %1562 = vmatprep.subr.bf16.mxu0 0
        %1563 = vmatpush1.bf16.msra.mxu0 0
        %1564 = vmatprep.subr.bf16.mxu0 0
        %1565 = vmatpush1.bf16.msra.mxu0 0
        %1566 = vmatprep.subr.bf16.mxu0 0
        %1567 = vmatpush1.bf16.msra.mxu0 0
        %1568 = vmatprep.subr.bf16.mxu0 0
        %1569 = vmatpush1.bf16.msra.mxu0 0
        %1570 = vmatprep.subr.bf16.mxu0 0
        %1571 = vmatpush1.bf16.msra.mxu0 0
        %1572 = vmatprep.subr.bf16.mxu0 0
        %1573 = vmatpush1.bf16.msra.mxu0 0
        %1574 = vmatprep.subr.bf16.mxu0 0
        %1575 = vmatpush1.bf16.msra.mxu0 0
        %1576 = vmatprep.subr.bf16.mxu0 0
        %1577 = vmatpush1.bf16.msra.mxu0 0
        %1578 = vmatprep.subr.bf16.mxu0 0
        %1579 = vmatpush1.bf16.msra.mxu0 0
        %1580 = vmatprep.subr.bf16.mxu0 0
        %1581 = vmatpush1.bf16.msra.mxu0 0
        %1582 = vmatprep.subr.bf16.mxu0 0
        %1583 = vmatpush1.bf16.msra.mxu0 0
        %1584 = vmatprep.subr.bf16.mxu0 0
        %1585 = vmatpush1.bf16.msra.mxu0 0
        %1586 = vmatprep.subr.bf16.mxu0 0
        %1587 = vmatpush1.bf16.msra.mxu0 0
        %1588 = vmatprep.subr.bf16.mxu0 0
        %1589 = vmatpush1.bf16.msra.mxu0 0
        %1590 = vmatprep.mubr.bf16.mxu0 0
        %1591 = vmatmul.mubr.bf16.gmra.mrb[0].mxu0 %v1544
        %v1592 = vpop.f32.mrb[0].mxu0
        %v1593 = vadd.f32 0.0, %v1592
        %v1594 = vpop.f32.mrb[0].mxu0
        %v1595 = vpop.f32.mrb[0].mxu0
        %v1596 = vadd.f32 0.0, %v1595
        %v1597 = vpop.f32.mrb[0].mxu0
        %1598 = vmatprep.mubr.bf16.mxu0 0
        %1599 = vmatmul.mubr.bf16.gmra.mrb[0].mxu0 %v1547
        %v1600 = vpop.f32.mrb[0].mxu0
        %v1601 = vadd.f32 0.0, %v1600
        %v1602 = vpop.f32.mrb[0].mxu0
        %v1603 = vpop.f32.mrb[0].mxu0
        %v1604 = vadd.f32 0.0, %v1603
        %v1605 = vpop.f32.mrb[0].mxu0
        %1606 = vmatprep.mubr.bf16.mxu0 0
        %1607 = vmatmul.mubr.bf16.gmra.mrb[0].mxu0 %v1550
        %v1608 = vpop.f32.mrb[0].mxu0
        %v1609 = vadd.f32 0.0, %v1608
        %v1610 = vpop.f32.mrb[0].mxu0
        %v1611 = vpop.f32.mrb[0].mxu0
        %v1612 = vadd.f32 0.0, %v1611
        %v1613 = vpop.f32.mrb[0].mxu0
        %1614 = vmatprep.mubr.bf16.mxu0 0
        %1615 = vmatmul.mubr.bf16.gmra.mrb[0].mxu0 %v1553
        %v1616 = vpop.f32.mrb[0].mxu0
        %v1617 = vadd.f32 0.0, %v1616
        %v1618 = vpop.f32.mrb[0].mxu0
        %v1619 = vpop.f32.mrb[0].mxu0
        %v1620 = vadd.f32 0.0, %v1619
        %v1621 = vpop.f32.mrb[0].mxu0
        %1622 = vmatprep.mubr.bf16.mxu0 0
        %1623 = vmatmul.mubr.bf16.gmra.mrb[0].mxu0 %v1556
        %v1624 = vpop.f32.mrb[0].mxu0
        %v1625 = vadd.f32 0.0, %v1624
        %v1626 = vpop.f32.mrb[0].mxu0
        %v1627 = vpop.f32.mrb[0].mxu0
        %v1628 = vadd.f32 0.0, %v1627
        %v1629 = vpop.f32.mrb[0].mxu0
        %1630 = vdwg.mxu0
        %v1631 = vadd.f32 %v578, %v1593
        %v1632 = vadd.f32 %v578, %v1596
        %v1633 = vadd.f32 %v578, %v1601
        %v1634 = vadd.f32 %v578, %v1604
        %v1635 = vadd.f32 %v578, %v1609
        %v1636 = vadd.f32 %v578, %v1612
        %v1637 = vadd.f32 %v578, %v1617
        %v1638 = vadd.f32 %v578, %v1620
        %v1639 = vadd.f32 %v578, %v1625
        %v1640 = vadd.f32 %v578, %v1628
        %v1641 = vld [vmem:[#allocation2 + $0x51] sm:$0xff]
        %v1642 = vld [vmem:[#allocation2 + $0x59] sm:$0xff]
        %v1643 = vld [vmem:[#allocation2 + $0x61] sm:$0xff]
        %v1644 = vld [vmem:[#allocation2 + $0x69] sm:$0xff]
        %v1645 = vld [vmem:[#allocation2 + $0x71] sm:$0xff]
        %v1646 = vld [vmem:[#allocation2 + $0x79] sm:$0xff]
        %v1647 = vld [vmem:[#allocation2 + $0x81] sm:$0xff]
        %v1648 = vld [vmem:[#allocation2 + $0x89] sm:$0xff]
        %v1649 = vld [vmem:[#allocation2 + $0x91] sm:$0xff]
        %v1650 = vld [vmem:[#allocation2 + $0x99] sm:$0xff]
        %v1651 = vpack.c.bf16 %v1642, %v1641
        %v1652 = vpack.c.bf16 %v1644, %v1643
        %v1653 = vpack.c.bf16 %v1646, %v1645
        %v1654 = vpack.c.bf16 %v1648, %v1647
        %v1655 = vpack.c.bf16 %v1650, %v1649
        %v1657 = vsel %vm378, %v1651, 0
        %v1660 = vsel %vm378, %v1652, 0
        %v1663 = vsel %vm378, %v1653, 0
        %v1666 = vsel %vm378, %v1654, 0
        %v1669 = vsel %vm378, %v1655, 0
        %1671 = vmatprep.subr.bf16.mxu0 0
        %1672 = vmatpush1.bf16.msra.mxu0 %v621
        %1673 = vmatprep.subr.bf16.mxu0 0
        %1674 = vmatpush1.bf16.msra.mxu0 0
        %1675 = vmatprep.subr.bf16.mxu0 0
        %1676 = vmatpush1.bf16.msra.mxu0 0
        %1677 = vmatprep.subr.bf16.mxu0 0
        %1678 = vmatpush1.bf16.msra.mxu0 0
        %1679 = vmatprep.subr.bf16.mxu0 0
        %1680 = vmatpush1.bf16.msra.mxu0 0
        %1681 = vmatprep.subr.bf16.mxu0 0
        %1682 = vmatpush1.bf16.msra.mxu0 0
        %1683 = vmatprep.subr.bf16.mxu0 0
        %1684 = vmatpush1.bf16.msra.mxu0 0
        %1685 = vmatprep.subr.bf16.mxu0 0
        %1686 = vmatpush1.bf16.msra.mxu0 0
        %1687 = vmatprep.subr.bf16.mxu0 0
        %1688 = vmatpush1.bf16.msra.mxu0 0
        %1689 = vmatprep.subr.bf16.mxu0 0
        %1690 = vmatpush1.bf16.msra.mxu0 0
        %1691 = vmatprep.subr.bf16.mxu0 0
        %1692 = vmatpush1.bf16.msra.mxu0 0
        %1693 = vmatprep.subr.bf16.mxu0 0
        %1694 = vmatpush1.bf16.msra.mxu0 0
        %1695 = vmatprep.subr.bf16.mxu0 0
        %1696 = vmatpush1.bf16.msra.mxu0 0
        %1697 = vmatprep.subr.bf16.mxu0 0
        %1698 = vmatpush1.bf16.msra.mxu0 0
        %1699 = vmatprep.subr.bf16.mxu0 0
        %1700 = vmatpush1.bf16.msra.mxu0 0
        %1701 = vmatprep.subr.bf16.mxu0 0
        %1702 = vmatpush1.bf16.msra.mxu0 0
        %1703 = vmatprep.mubr.bf16.mxu0 0
        %1704 = vmatmul.mubr.bf16.gmra.mrb[0].mxu0 %v1657
        %v1705 = vpop.f32.mrb[0].mxu0
        %v1706 = vadd.f32 0.0, %v1705
        %v1707 = vpop.f32.mrb[0].mxu0
        %v1708 = vpop.f32.mrb[0].mxu0
        %v1709 = vadd.f32 0.0, %v1708
        %v1710 = vpop.f32.mrb[0].mxu0
        %1711 = vmatprep.mubr.bf16.mxu0 0
        %1712 = vmatmul.mubr.bf16.gmra.mrb[0].mxu0 %v1660
        %v1713 = vpop.f32.mrb[0].mxu0
        %v1714 = vadd.f32 0.0, %v1713
        %v1715 = vpop.f32.mrb[0].mxu0
        %v1716 = vpop.f32.mrb[0].mxu0
        %v1717 = vadd.f32 0.0, %v1716
        %v1718 = vpop.f32.mrb[0].mxu0
        %1719 = vmatprep.mubr.bf16.mxu0 0
        %1720 = vmatmul.mubr.bf16.gmra.mrb[0].mxu0 %v1663
        %v1721 = vpop.f32.mrb[0].mxu0
        %v1722 = vadd.f32 0.0, %v1721
        %v1723 = vpop.f32.mrb[0].mxu0
        %v1724 = vpop.f32.mrb[0].mxu0
        %v1725 = vadd.f32 0.0, %v1724
        %v1726 = vpop.f32.mrb[0].mxu0
        %1727 = vmatprep.mubr.bf16.mxu0 0
        %1728 = vmatmul.mubr.bf16.gmra.mrb[0].mxu0 %v1666
        %v1729 = vpop.f32.mrb[0].mxu0
        %v1730 = vadd.f32 0.0, %v1729
        %v1731 = vpop.f32.mrb[0].mxu0
        %v1732 = vpop.f32.mrb[0].mxu0
        %v1733 = vadd.f32 0.0, %v1732
        %v1734 = vpop.f32.mrb[0].mxu0
        %1735 = vmatprep.mubr.bf16.mxu0 0
        %1736 = vmatmul.mubr.bf16.gmra.mrb[0].mxu0 %v1669
        %v1737 = vpop.f32.mrb[0].mxu0
        %v1738 = vadd.f32 0.0, %v1737
        %v1739 = vpop.f32.mrb[0].mxu0
        %v1740 = vpop.f32.mrb[0].mxu0
        %v1741 = vadd.f32 0.0, %v1740
        %v1742 = vpop.f32.mrb[0].mxu0
        %1743 = vdwg.mxu0
        %v1744 = vadd.f32 %v1631, %v1706
        %v1745 = vadd.f32 %v1632, %v1709
        %v1746 = vadd.f32 %v1633, %v1714
        %v1747 = vadd.f32 %v1634, %v1717
        %v1748 = vadd.f32 %v1635, %v1722
        %v1749 = vadd.f32 %v1636, %v1725
        %v1750 = vadd.f32 %v1637, %v1730
        %v1751 = vadd.f32 %v1638, %v1733
        %v1752 = vadd.f32 %v1639, %v1738
        %v1753 = vadd.f32 %v1640, %v1741
        %v1754 = vld [vmem:[#allocation2 + $0x52] sm:$0xff]
        %v1755 = vld [vmem:[#allocation2 + $0x5a] sm:$0xff]
        %v1756 = vld [vmem:[#allocation2 + $0x62] sm:$0xff]
        %v1757 = vld [vmem:[#allocation2 + $0x6a] sm:$0xff]
        %v1758 = vld [vmem:[#allocation2 + $0x72] sm:$0xff]
        %v1759 = vld [vmem:[#allocation2 + $0x7a] sm:$0xff]
        %v1760 = vld [vmem:[#allocation2 + $0x82] sm:$0xff]
        %v1761 = vld [vmem:[#allocation2 + $0x8a] sm:$0xff]
        %v1762 = vld [vmem:[#allocation2 + $0x92] sm:$0xff]
        %v1763 = vld [vmem:[#allocation2 + $0x9a] sm:$0xff]
        %v1764 = vpack.c.bf16 %v1755, %v1754
        %v1765 = vpack.c.bf16 %v1757, %v1756
        %v1766 = vpack.c.bf16 %v1759, %v1758
        %v1767 = vpack.c.bf16 %v1761, %v1760
        %v1768 = vpack.c.bf16 %v1763, %v1762
        %v1770 = vsel %vm378, %v1764, 0
        %v1773 = vsel %vm378, %v1765, 0
        %v1776 = vsel %vm378, %v1766, 0
        %v1779 = vsel %vm378, %v1767, 0
        %v1782 = vsel %vm378, %v1768, 0
        %1784 = vmatprep.subr.bf16.mxu0 0
        %1785 = vmatpush1.bf16.msra.mxu0 %v737
        %1786 = vmatprep.subr.bf16.mxu0 0
        %1787 = vmatpush1.bf16.msra.mxu0 0
        %1788 = vmatprep.subr.bf16.mxu0 0
        %1789 = vmatpush1.bf16.msra.mxu0 0
        %1790 = vmatprep.subr.bf16.mxu0 0
        %1791 = vmatpush1.bf16.msra.mxu0 0
        %1792 = vmatprep.subr.bf16.mxu0 0
        %1793 = vmatpush1.bf16.msra.mxu0 0
        %1794 = vmatprep.subr.bf16.mxu0 0
        %1795 = vmatpush1.bf16.msra.mxu0 0
        %1796 = vmatprep.subr.bf16.mxu0 0
        %1797 = vmatpush1.bf16.msra.mxu0 0
        %1798 = vmatprep.subr.bf16.mxu0 0
        %1799 = vmatpush1.bf16.msra.mxu0 0
        %1800 = vmatprep.subr.bf16.mxu0 0
        %1801 = vmatpush1.bf16.msra.mxu0 0
        %1802 = vmatprep.subr.bf16.mxu0 0
        %1803 = vmatpush1.bf16.msra.mxu0 0
        %1804 = vmatprep.subr.bf16.mxu0 0
        %1805 = vmatpush1.bf16.msra.mxu0 0
        %1806 = vmatprep.subr.bf16.mxu0 0
        %1807 = vmatpush1.bf16.msra.mxu0 0
        %1808 = vmatprep.subr.bf16.mxu0 0
        %1809 = vmatpush1.bf16.msra.mxu0 0
        %1810 = vmatprep.subr.bf16.mxu0 0
        %1811 = vmatpush1.bf16.msra.mxu0 0
        %1812 = vmatprep.subr.bf16.mxu0 0
        %1813 = vmatpush1.bf16.msra.mxu0 0
        %1814 = vmatprep.subr.bf16.mxu0 0
        %1815 = vmatpush1.bf16.msra.mxu0 0
        %1816 = vmatprep.mubr.bf16.mxu0 0
        %1817 = vmatmul.mubr.bf16.gmra.mrb[0].mxu0 %v1770
        %v1818 = vpop.f32.mrb[0].mxu0
        %v1819 = vadd.f32 0.0, %v1818
        %v1820 = vpop.f32.mrb[0].mxu0
        %v1821 = vpop.f32.mrb[0].mxu0
        %v1822 = vadd.f32 0.0, %v1821
        %v1823 = vpop.f32.mrb[0].mxu0
        %1824 = vmatprep.mubr.bf16.mxu0 0
        %1825 = vmatmul.mubr.bf16.gmra.mrb[0].mxu0 %v1773
        %v1826 = vpop.f32.mrb[0].mxu0
        %v1827 = vadd.f32 0.0, %v1826
        %v1828 = vpop.f32.mrb[0].mxu0
        %v1829 = vpop.f32.mrb[0].mxu0
        %v1830 = vadd.f32 0.0, %v1829
        %v1831 = vpop.f32.mrb[0].mxu0
        %1832 = vmatprep.mubr.bf16.mxu0 0
        %1833 = vmatmul.mubr.bf16.gmra.mrb[0].mxu0 %v1776
        %v1834 = vpop.f32.mrb[0].mxu0
        %v1835 = vadd.f32 0.0, %v1834
        %v1836 = vpop.f32.mrb[0].mxu0
        %v1837 = vpop.f32.mrb[0].mxu0
        %v1838 = vadd.f32 0.0, %v1837
        %v1839 = vpop.f32.mrb[0].mxu0
        %1840 = vmatprep.mubr.bf16.mxu0 0
        %1841 = vmatmul.mubr.bf16.gmra.mrb[0].mxu0 %v1779
        %v1842 = vpop.f32.mrb[0].mxu0
        %v1843 = vadd.f32 0.0, %v1842
        %v1844 = vpop.f32.mrb[0].mxu0
        %v1845 = vpop.f32.mrb[0].mxu0
        %v1846 = vadd.f32 0.0, %v1845
        %v1847 = vpop.f32.mrb[0].mxu0
        %1848 = vmatprep.mubr.bf16.mxu0 0
        %1849 = vmatmul.mubr.bf16.gmra.mrb[0].mxu0 %v1782
        %v1850 = vpop.f32.mrb[0].mxu0
        %v1851 = vadd.f32 0.0, %v1850
        %v1852 = vpop.f32.mrb[0].mxu0
        %v1853 = vpop.f32.mrb[0].mxu0
        %v1854 = vadd.f32 0.0, %v1853
        %v1855 = vpop.f32.mrb[0].mxu0
        %1856 = vdwg.mxu0
        %v1857 = vadd.f32 %v1744, %v1819
        %v1858 = vadd.f32 %v1745, %v1822
        %v1859 = vadd.f32 %v1746, %v1827
        %v1860 = vadd.f32 %v1747, %v1830
        %v1861 = vadd.f32 %v1748, %v1835
        %v1862 = vadd.f32 %v1749, %v1838
        %v1863 = vadd.f32 %v1750, %v1843
        %v1864 = vadd.f32 %v1751, %v1846
        %v1865 = vadd.f32 %v1752, %v1851
        %v1866 = vadd.f32 %v1753, %v1854
        %v1867 = vld [vmem:[#allocation2 + $0x64] sm:$0xff]
        %v1868 = vld [vmem:[#allocation2 + $0x6c] sm:$0xff]
        %v1869 = vld [vmem:[#allocation2 + $0x74] sm:$0xff]
        %v1870 = vld [vmem:[#allocation2 + $0x7c] sm:$0xff]
        %v1871 = vld [vmem:[#allocation2 + $0x84] sm:$0xff]
        %v1872 = vld [vmem:[#allocation2 + $0x8c] sm:$0xff]
        %v1873 = vld [vmem:[#allocation2 + $0x94] sm:$0xff]
        %v1874 = vld [vmem:[#allocation2 + $0x9c] sm:$0xff]
        %v1875 = vld [vmem:[#allocation2 + $0xa4] sm:$0xff]
        %v1876 = vld [vmem:[#allocation2 + $0xac] sm:$0xff]
        %v1877 = vpack.c.bf16 %v1868, %v1867
        %v1878 = vpack.c.bf16 %v1870, %v1869
        %v1879 = vpack.c.bf16 %v1872, %v1871
        %v1880 = vpack.c.bf16 %v1874, %v1873
        %v1881 = vpack.c.bf16 %v1876, %v1875
        %v1883 = vsel %vm378, %v1877, 0
        %v1886 = vsel %vm378, %v1878, 0
        %v1889 = vsel %vm378, %v1879, 0
        %v1892 = vsel %vm378, %v1880, 0
        %v1895 = vsel %vm378, %v1881, 0
        %1897 = vmatprep.subr.bf16.mxu0 0
        %1898 = vmatpush1.bf16.msra.mxu0 %v853
        %1899 = vmatprep.subr.bf16.mxu0 0
        %1900 = vmatpush1.bf16.msra.mxu0 0
        %1901 = vmatprep.subr.bf16.mxu0 0
        %1902 = vmatpush1.bf16.msra.mxu0 0
        %1903 = vmatprep.subr.bf16.mxu0 0
        %1904 = vmatpush1.bf16.msra.mxu0 0
        %1905 = vmatprep.subr.bf16.mxu0 0
        %1906 = vmatpush1.bf16.msra.mxu0 0
        %1907 = vmatprep.subr.bf16.mxu0 0
        %1908 = vmatpush1.bf16.msra.mxu0 0
        %1909 = vmatprep.subr.bf16.mxu0 0
        %1910 = vmatpush1.bf16.msra.mxu0 0
        %1911 = vmatprep.subr.bf16.mxu0 0
        %1912 = vmatpush1.bf16.msra.mxu0 0
        %1913 = vmatprep.subr.bf16.mxu0 0
        %1914 = vmatpush1.bf16.msra.mxu0 0
        %1915 = vmatprep.subr.bf16.mxu0 0
        %1916 = vmatpush1.bf16.msra.mxu0 0
        %1917 = vmatprep.subr.bf16.mxu0 0
        %1918 = vmatpush1.bf16.msra.mxu0 0
        %1919 = vmatprep.subr.bf16.mxu0 0
        %1920 = vmatpush1.bf16.msra.mxu0 0
        %1921 = vmatprep.subr.bf16.mxu0 0
        %1922 = vmatpush1.bf16.msra.mxu0 0
        %1923 = vmatprep.subr.bf16.mxu0 0
        %1924 = vmatpush1.bf16.msra.mxu0 0
        %1925 = vmatprep.subr.bf16.mxu0 0
        %1926 = vmatpush1.bf16.msra.mxu0 0
        %1927 = vmatprep.subr.bf16.mxu0 0
        %1928 = vmatpush1.bf16.msra.mxu0 0
        %1929 = vmatprep.mubr.bf16.mxu0 0
        %1930 = vmatmul.mubr.bf16.gmra.mrb[0].mxu0 %v1883
        %v1931 = vpop.f32.mrb[0].mxu0
        %v1932 = vadd.f32 0.0, %v1931
        %v1933 = vpop.f32.mrb[0].mxu0
        %v1934 = vpop.f32.mrb[0].mxu0
        %v1935 = vadd.f32 0.0, %v1934
        %v1936 = vpop.f32.mrb[0].mxu0
        %1937 = vmatprep.mubr.bf16.mxu0 0
        %1938 = vmatmul.mubr.bf16.gmra.mrb[0].mxu0 %v1886
        %v1939 = vpop.f32.mrb[0].mxu0
        %v1940 = vadd.f32 0.0, %v1939
        %v1941 = vpop.f32.mrb[0].mxu0
        %v1942 = vpop.f32.mrb[0].mxu0
        %v1943 = vadd.f32 0.0, %v1942
        %v1944 = vpop.f32.mrb[0].mxu0
        %1945 = vmatprep.mubr.bf16.mxu0 0
        %1946 = vmatmul.mubr.bf16.gmra.mrb[0].mxu0 %v1889
        %v1947 = vpop.f32.mrb[0].mxu0
        %v1948 = vadd.f32 0.0, %v1947
        %v1949 = vpop.f32.mrb[0].mxu0
        %v1950 = vpop.f32.mrb[0].mxu0
        %v1951 = vadd.f32 0.0, %v1950
        %v1952 = vpop.f32.mrb[0].mxu0
        %1953 = vmatprep.mubr.bf16.mxu0 0
        %1954 = vmatmul.mubr.bf16.gmra.mrb[0].mxu0 %v1892
        %v1955 = vpop.f32.mrb[0].mxu0
        %v1956 = vadd.f32 0.0, %v1955
        %v1957 = vpop.f32.mrb[0].mxu0
        %v1958 = vpop.f32.mrb[0].mxu0
        %v1959 = vadd.f32 0.0, %v1958
        %v1960 = vpop.f32.mrb[0].mxu0
        %1961 = vmatprep.mubr.bf16.mxu0 0
        %1962 = vmatmul.mubr.bf16.gmra.mrb[0].mxu0 %v1895
        %v1963 = vpop.f32.mrb[0].mxu0
        %v1964 = vadd.f32 0.0, %v1963
        %v1965 = vpop.f32.mrb[0].mxu0
        %v1966 = vpop.f32.mrb[0].mxu0
        %v1967 = vadd.f32 0.0, %v1966
        %v1968 = vpop.f32.mrb[0].mxu0
        %1969 = vdwg.mxu0
        %v1970 = vadd.f32 %v1857, %v1932
        %v1971 = vadd.f32 %v1858, %v1935
        %v1972 = vadd.f32 %v1859, %v1940
        %v1973 = vadd.f32 %v1860, %v1943
        %v1974 = vadd.f32 %v1861, %v1948
        %v1975 = vadd.f32 %v1862, %v1951
        %v1976 = vadd.f32 %v1863, %v1956
        %v1977 = vadd.f32 %v1864, %v1959
        %v1978 = vadd.f32 %v1865, %v1964
        %v1979 = vadd.f32 %v1866, %v1967
        %v1980 = vld [vmem:[#allocation2 + $0x65] sm:$0xff]
        %v1981 = vld [vmem:[#allocation2 + $0x6d] sm:$0xff]
        %v1982 = vld [vmem:[#allocation2 + $0x75] sm:$0xff]
        %v1983 = vld [vmem:[#allocation2 + $0x7d] sm:$0xff]
        %v1984 = vld [vmem:[#allocation2 + $0x85] sm:$0xff]
        %v1985 = vld [vmem:[#allocation2 + $0x8d] sm:$0xff]
        %v1986 = vld [vmem:[#allocation2 + $0x95] sm:$0xff]
        %v1987 = vld [vmem:[#allocation2 + $0x9d] sm:$0xff]
        %v1988 = vld [vmem:[#allocation2 + $0xa5] sm:$0xff]
        %v1989 = vld [vmem:[#allocation2 + $0xad] sm:$0xff]
        %v1990 = vpack.c.bf16 %v1981, %v1980
        %v1991 = vpack.c.bf16 %v1983, %v1982
        %v1992 = vpack.c.bf16 %v1985, %v1984
        %v1993 = vpack.c.bf16 %v1987, %v1986
        %v1994 = vpack.c.bf16 %v1989, %v1988
        %v1996 = vsel %vm378, %v1990, 0
        %v1999 = vsel %vm378, %v1991, 0
        %v2002 = vsel %vm378, %v1992, 0
        %v2005 = vsel %vm378, %v1993, 0
        %v2008 = vsel %vm378, %v1994, 0
        %2010 = vmatprep.subr.bf16.mxu0 0
        %2011 = vmatpush1.bf16.msra.mxu0 %v969
        %2012 = vmatprep.subr.bf16.mxu0 0
        %2013 = vmatpush1.bf16.msra.mxu0 0
        %2014 = vmatprep.subr.bf16.mxu0 0
        %2015 = vmatpush1.bf16.msra.mxu0 0
        %2016 = vmatprep.subr.bf16.mxu0 0
        %2017 = vmatpush1.bf16.msra.mxu0 0
        %2018 = vmatprep.subr.bf16.mxu0 0
        %2019 = vmatpush1.bf16.msra.mxu0 0
        %2020 = vmatprep.subr.bf16.mxu0 0
        %2021 = vmatpush1.bf16.msra.mxu0 0
        %2022 = vmatprep.subr.bf16.mxu0 0
        %2023 = vmatpush1.bf16.msra.mxu0 0
        %2024 = vmatprep.subr.bf16.mxu0 0
        %2025 = vmatpush1.bf16.msra.mxu0 0
        %2026 = vmatprep.subr.bf16.mxu0 0
        %2027 = vmatpush1.bf16.msra.mxu0 0
        %2028 = vmatprep.subr.bf16.mxu0 0
        %2029 = vmatpush1.bf16.msra.mxu0 0
        %2030 = vmatprep.subr.bf16.mxu0 0
        %2031 = vmatpush1.bf16.msra.mxu0 0
        %2032 = vmatprep.subr.bf16.mxu0 0
        %2033 = vmatpush1.bf16.msra.mxu0 0
        %2034 = vmatprep.subr.bf16.mxu0 0
        %2035 = vmatpush1.bf16.msra.mxu0 0
        %2036 = vmatprep.subr.bf16.mxu0 0
        %2037 = vmatpush1.bf16.msra.mxu0 0
        %2038 = vmatprep.subr.bf16.mxu0 0
        %2039 = vmatpush1.bf16.msra.mxu0 0
        %2040 = vmatprep.subr.bf16.mxu0 0
        %2041 = vmatpush1.bf16.msra.mxu0 0
        %2042 = vmatprep.mubr.bf16.mxu0 0
        %2043 = vmatmul.mubr.bf16.gmra.mrb[0].mxu0 %v1996
        %v2044 = vpop.f32.mrb[0].mxu0
        %v2045 = vadd.f32 0.0, %v2044
        %v2046 = vpop.f32.mrb[0].mxu0
        %v2047 = vpop.f32.mrb[0].mxu0
        %v2048 = vadd.f32 0.0, %v2047
        %v2049 = vpop.f32.mrb[0].mxu0
        %2050 = vmatprep.mubr.bf16.mxu0 0
        %2051 = vmatmul.mubr.bf16.gmra.mrb[0].mxu0 %v1999
        %v2052 = vpop.f32.mrb[0].mxu0
        %v2053 = vadd.f32 0.0, %v2052
        %v2054 = vpop.f32.mrb[0].mxu0
        %v2055 = vpop.f32.mrb[0].mxu0
        %v2056 = vadd.f32 0.0, %v2055
        %v2057 = vpop.f32.mrb[0].mxu0
        %2058 = vmatprep.mubr.bf16.mxu0 0
        %2059 = vmatmul.mubr.bf16.gmra.mrb[0].mxu0 %v2002
        %v2060 = vpop.f32.mrb[0].mxu0
        %v2061 = vadd.f32 0.0, %v2060
        %v2062 = vpop.f32.mrb[0].mxu0
        %v2063 = vpop.f32.mrb[0].mxu0
        %v2064 = vadd.f32 0.0, %v2063
        %v2065 = vpop.f32.mrb[0].mxu0
        %2066 = vmatprep.mubr.bf16.mxu0 0
        %2067 = vmatmul.mubr.bf16.gmra.mrb[0].mxu0 %v2005
        %v2068 = vpop.f32.mrb[0].mxu0
        %v2069 = vadd.f32 0.0, %v2068
        %v2070 = vpop.f32.mrb[0].mxu0
        %v2071 = vpop.f32.mrb[0].mxu0
        %v2072 = vadd.f32 0.0, %v2071
        %v2073 = vpop.f32.mrb[0].mxu0
        %2074 = vmatprep.mubr.bf16.mxu0 0
        %2075 = vmatmul.mubr.bf16.gmra.mrb[0].mxu0 %v2008
        %v2076 = vpop.f32.mrb[0].mxu0
        %v2077 = vadd.f32 0.0, %v2076
        %v2078 = vpop.f32.mrb[0].mxu0
        %v2079 = vpop.f32.mrb[0].mxu0
        %v2080 = vadd.f32 0.0, %v2079
        %v2081 = vpop.f32.mrb[0].mxu0
        %2082 = vdwg.mxu0
        %v2083 = vadd.f32 %v1970, %v2045
        %v2084 = vadd.f32 %v1971, %v2048
        %v2085 = vadd.f32 %v1972, %v2053
        %v2086 = vadd.f32 %v1973, %v2056
        %v2087 = vadd.f32 %v1974, %v2061
        %v2088 = vadd.f32 %v1975, %v2064
        %v2089 = vadd.f32 %v1976, %v2069
        %v2090 = vadd.f32 %v1977, %v2072
        %v2091 = vadd.f32 %v1978, %v2077
        %v2092 = vadd.f32 %v1979, %v2080
        %v2093 = vld [vmem:[#allocation2 + $0x66] sm:$0xff]
        %v2094 = vld [vmem:[#allocation2 + $0x6e] sm:$0xff]
        %v2095 = vld [vmem:[#allocation2 + $0x76] sm:$0xff]
        %v2096 = vld [vmem:[#allocation2 + $0x7e] sm:$0xff]
        %v2097 = vld [vmem:[#allocation2 + $0x86] sm:$0xff]
        %v2098 = vld [vmem:[#allocation2 + $0x8e] sm:$0xff]
        %v2099 = vld [vmem:[#allocation2 + $0x96] sm:$0xff]
        %v2100 = vld [vmem:[#allocation2 + $0x9e] sm:$0xff]
        %v2101 = vld [vmem:[#allocation2 + $0xa6] sm:$0xff]
        %v2102 = vld [vmem:[#allocation2 + $0xae] sm:$0xff]
        %v2103 = vpack.c.bf16 %v2094, %v2093
        %v2104 = vpack.c.bf16 %v2096, %v2095
        %v2105 = vpack.c.bf16 %v2098, %v2097
        %v2106 = vpack.c.bf16 %v2100, %v2099
        %v2107 = vpack.c.bf16 %v2102, %v2101
        %v2109 = vsel %vm378, %v2103, 0
        %v2112 = vsel %vm378, %v2104, 0
        %v2115 = vsel %vm378, %v2105, 0
        %v2118 = vsel %vm378, %v2106, 0
        %v2121 = vsel %vm378, %v2107, 0
        %2123 = vmatprep.subr.bf16.mxu0 0
        %2124 = vmatpush1.bf16.msra.mxu0 %v1085
        %2125 = vmatprep.subr.bf16.mxu0 0
        %2126 = vmatpush1.bf16.msra.mxu0 0
        %2127 = vmatprep.subr.bf16.mxu0 0
        %2128 = vmatpush1.bf16.msra.mxu0 0
        %2129 = vmatprep.subr.bf16.mxu0 0
        %2130 = vmatpush1.bf16.msra.mxu0 0
        %2131 = vmatprep.subr.bf16.mxu0 0
        %2132 = vmatpush1.bf16.msra.mxu0 0
        %2133 = vmatprep.subr.bf16.mxu0 0
        %2134 = vmatpush1.bf16.msra.mxu0 0
        %2135 = vmatprep.subr.bf16.mxu0 0
        %2136 = vmatpush1.bf16.msra.mxu0 0
        %2137 = vmatprep.subr.bf16.mxu0 0
        %2138 = vmatpush1.bf16.msra.mxu0 0
        %2139 = vmatprep.subr.bf16.mxu0 0
        %2140 = vmatpush1.bf16.msra.mxu0 0
        %2141 = vmatprep.subr.bf16.mxu0 0
        %2142 = vmatpush1.bf16.msra.mxu0 0
        %2143 = vmatprep.subr.bf16.mxu0 0
        %2144 = vmatpush1.bf16.msra.mxu0 0
        %2145 = vmatprep.subr.bf16.mxu0 0
        %2146 = vmatpush1.bf16.msra.mxu0 0
        %2147 = vmatprep.subr.bf16.mxu0 0
        %2148 = vmatpush1.bf16.msra.mxu0 0
        %2149 = vmatprep.subr.bf16.mxu0 0
        %2150 = vmatpush1.bf16.msra.mxu0 0
        %2151 = vmatprep.subr.bf16.mxu0 0
        %2152 = vmatpush1.bf16.msra.mxu0 0
        %2153 = vmatprep.subr.bf16.mxu0 0
        %2154 = vmatpush1.bf16.msra.mxu0 0
        %2155 = vmatprep.mubr.bf16.mxu0 0
        %2156 = vmatmul.mubr.bf16.gmra.mrb[0].mxu0 %v2109
        %v2157 = vpop.f32.mrb[0].mxu0
        %v2158 = vadd.f32 0.0, %v2157
        %v2159 = vpop.f32.mrb[0].mxu0
        %v2160 = vpop.f32.mrb[0].mxu0
        %v2161 = vadd.f32 0.0, %v2160
        %v2162 = vpop.f32.mrb[0].mxu0
        %2163 = vmatprep.mubr.bf16.mxu0 0
        %2164 = vmatmul.mubr.bf16.gmra.mrb[0].mxu0 %v2112
        %v2165 = vpop.f32.mrb[0].mxu0
        %v2166 = vadd.f32 0.0, %v2165
        %v2167 = vpop.f32.mrb[0].mxu0
        %v2168 = vpop.f32.mrb[0].mxu0
        %v2169 = vadd.f32 0.0, %v2168
        %v2170 = vpop.f32.mrb[0].mxu0
        %2171 = vmatprep.mubr.bf16.mxu0 0
        %2172 = vmatmul.mubr.bf16.gmra.mrb[0].mxu0 %v2115
        %v2173 = vpop.f32.mrb[0].mxu0
        %v2174 = vadd.f32 0.0, %v2173
        %v2175 = vpop.f32.mrb[0].mxu0
        %v2176 = vpop.f32.mrb[0].mxu0
        %v2177 = vadd.f32 0.0, %v2176
        %v2178 = vpop.f32.mrb[0].mxu0
        %2179 = vmatprep.mubr.bf16.mxu0 0
        %2180 = vmatmul.mubr.bf16.gmra.mrb[0].mxu0 %v2118
        %v2181 = vpop.f32.mrb[0].mxu0
        %v2182 = vadd.f32 0.0, %v2181
        %v2183 = vpop.f32.mrb[0].mxu0
        %v2184 = vpop.f32.mrb[0].mxu0
        %v2185 = vadd.f32 0.0, %v2184
        %v2186 = vpop.f32.mrb[0].mxu0
        %2187 = vmatprep.mubr.bf16.mxu0 0
        %2188 = vmatmul.mubr.bf16.gmra.mrb[0].mxu0 %v2121
        %v2189 = vpop.f32.mrb[0].mxu0
        %v2190 = vadd.f32 0.0, %v2189
        %v2191 = vpop.f32.mrb[0].mxu0
        %v2192 = vpop.f32.mrb[0].mxu0
        %v2193 = vadd.f32 0.0, %v2192
        %v2194 = vpop.f32.mrb[0].mxu0
        %2195 = vdwg.mxu0
        %v2196 = vadd.f32 %v2083, %v2158
        %v2197 = vadd.f32 %v2084, %v2161
        %v2198 = vadd.f32 %v2085, %v2166
        %v2199 = vadd.f32 %v2086, %v2169
        %v2200 = vadd.f32 %v2087, %v2174
        %v2201 = vadd.f32 %v2088, %v2177
        %v2202 = vadd.f32 %v2089, %v2182
        %v2203 = vadd.f32 %v2090, %v2185
        %v2204 = vadd.f32 %v2091, %v2190
        %v2205 = vadd.f32 %v2092, %v2193
        %v2206 = vld [vmem:[#allocation2 + $0x78] sm:$0xff]
        %v2207 = vld [vmem:[#allocation2 + $0x80] sm:$0xff]
        %v2208 = vld [vmem:[#allocation2 + $0x88] sm:$0xff]
        %v2209 = vld [vmem:[#allocation2 + $0x90] sm:$0xff]
        %v2210 = vld [vmem:[#allocation2 + $0x98] sm:$0xff]
        %v2211 = vld [vmem:[#allocation2 + $0xa0] sm:$0xff]
        %v2212 = vld [vmem:[#allocation2 + $0xa8] sm:$0xff]
        %v2213 = vld [vmem:[#allocation2 + $0xb0] sm:$0xff]
        %v2214 = vld [vmem:[#allocation2 + $0xb8] sm:$0xff]
        %v2215 = vld [vmem:[#allocation2 + $0xc0] sm:$0xff]
        %v2216 = vpack.c.bf16 %v2207, %v2206
        %v2217 = vpack.c.bf16 %v2209, %v2208
        %v2218 = vpack.c.bf16 %v2211, %v2210
        %v2219 = vpack.c.bf16 %v2213, %v2212
        %v2220 = vpack.c.bf16 %v2215, %v2214
        %v2222 = vsel %vm378, %v2216, 0
        %v2225 = vsel %vm378, %v2217, 0
        %v2228 = vsel %vm378, %v2218, 0
        %v2231 = vsel %vm378, %v2219, 0
        %v2234 = vsel %vm378, %v2220, 0
        %2236 = vmatprep.subr.bf16.mxu0 0
        %2237 = vmatpush1.bf16.msra.mxu0 %v1201
        %2238 = vmatprep.subr.bf16.mxu0 0
        %2239 = vmatpush1.bf16.msra.mxu0 0
        %2240 = vmatprep.subr.bf16.mxu0 0
        %2241 = vmatpush1.bf16.msra.mxu0 0
        %2242 = vmatprep.subr.bf16.mxu0 0
        %2243 = vmatpush1.bf16.msra.mxu0 0
        %2244 = vmatprep.subr.bf16.mxu0 0
        %2245 = vmatpush1.bf16.msra.mxu0 0
        %2246 = vmatprep.subr.bf16.mxu0 0
        %2247 = vmatpush1.bf16.msra.mxu0 0
        %2248 = vmatprep.subr.bf16.mxu0 0
        %2249 = vmatpush1.bf16.msra.mxu0 0
        %2250 = vmatprep.subr.bf16.mxu0 0
        %2251 = vmatpush1.bf16.msra.mxu0 0
        %2252 = vmatprep.subr.bf16.mxu0 0
        %2253 = vmatpush1.bf16.msra.mxu0 0
        %2254 = vmatprep.subr.bf16.mxu0 0
        %2255 = vmatpush1.bf16.msra.mxu0 0
        %2256 = vmatprep.subr.bf16.mxu0 0
        %2257 = vmatpush1.bf16.msra.mxu0 0
        %2258 = vmatprep.subr.bf16.mxu0 0
        %2259 = vmatpush1.bf16.msra.mxu0 0
        %2260 = vmatprep.subr.bf16.mxu0 0
        %2261 = vmatpush1.bf16.msra.mxu0 0
        %2262 = vmatprep.subr.bf16.mxu0 0
        %2263 = vmatpush1.bf16.msra.mxu0 0
        %2264 = vmatprep.subr.bf16.mxu0 0
        %2265 = vmatpush1.bf16.msra.mxu0 0
        %2266 = vmatprep.subr.bf16.mxu0 0
        %2267 = vmatpush1.bf16.msra.mxu0 0
        %2268 = vmatprep.mubr.bf16.mxu0 0
        %2269 = vmatmul.mubr.bf16.gmra.mrb[0].mxu0 %v2222
        %v2270 = vpop.f32.mrb[0].mxu0
        %v2271 = vadd.f32 0.0, %v2270
        %v2272 = vpop.f32.mrb[0].mxu0
        %v2273 = vpop.f32.mrb[0].mxu0
        %v2274 = vadd.f32 0.0, %v2273
        %v2275 = vpop.f32.mrb[0].mxu0
        %2276 = vmatprep.mubr.bf16.mxu0 0
        %2277 = vmatmul.mubr.bf16.gmra.mrb[0].mxu0 %v2225
        %v2278 = vpop.f32.mrb[0].mxu0
        %v2279 = vadd.f32 0.0, %v2278
        %v2280 = vpop.f32.mrb[0].mxu0
        %v2281 = vpop.f32.mrb[0].mxu0
        %v2282 = vadd.f32 0.0, %v2281
        %v2283 = vpop.f32.mrb[0].mxu0
        %2284 = vmatprep.mubr.bf16.mxu0 0
        %2285 = vmatmul.mubr.bf16.gmra.mrb[0].mxu0 %v2228
        %v2286 = vpop.f32.mrb[0].mxu0
        %v2287 = vadd.f32 0.0, %v2286
        %v2288 = vpop.f32.mrb[0].mxu0
        %v2289 = vpop.f32.mrb[0].mxu0
        %v2290 = vadd.f32 0.0, %v2289
        %v2291 = vpop.f32.mrb[0].mxu0
        %2292 = vmatprep.mubr.bf16.mxu0 0
        %2293 = vmatmul.mubr.bf16.gmra.mrb[0].mxu0 %v2231
        %v2294 = vpop.f32.mrb[0].mxu0
        %v2295 = vadd.f32 0.0, %v2294
        %v2296 = vpop.f32.mrb[0].mxu0
        %v2297 = vpop.f32.mrb[0].mxu0
        %v2298 = vadd.f32 0.0, %v2297
        %v2299 = vpop.f32.mrb[0].mxu0
        %2300 = vmatprep.mubr.bf16.mxu0 0
        %2301 = vmatmul.mubr.bf16.gmra.mrb[0].mxu0 %v2234
        %v2302 = vpop.f32.mrb[0].mxu0
        %v2303 = vadd.f32 0.0, %v2302
        %v2304 = vpop.f32.mrb[0].mxu0
        %v2305 = vpop.f32.mrb[0].mxu0
        %v2306 = vadd.f32 0.0, %v2305
        %v2307 = vpop.f32.mrb[0].mxu0
        %2308 = vdwg.mxu0
        %v2309 = vadd.f32 %v2196, %v2271
        %v2310 = vadd.f32 %v2197, %v2274
        %v2311 = vadd.f32 %v2198, %v2279
        %v2312 = vadd.f32 %v2199, %v2282
        %v2313 = vadd.f32 %v2200, %v2287
        %v2314 = vadd.f32 %v2201, %v2290
        %v2315 = vadd.f32 %v2202, %v2295
        %v2316 = vadd.f32 %v2203, %v2298
        %v2317 = vadd.f32 %v2204, %v2303
        %v2318 = vadd.f32 %v2205, %v2306
        %v2319 = vld [vmem:[#allocation2 + $0x79] sm:$0xff]
        %v2320 = vld [vmem:[#allocation2 + $0x81] sm:$0xff]
        %v2321 = vld [vmem:[#allocation2 + $0x89] sm:$0xff]
        %v2322 = vld [vmem:[#allocation2 + $0x91] sm:$0xff]
        %v2323 = vld [vmem:[#allocation2 + $0x99] sm:$0xff]
        %v2324 = vld [vmem:[#allocation2 + $0xa1] sm:$0xff]
        %v2325 = vld [vmem:[#allocation2 + $0xa9] sm:$0xff]
        %v2326 = vld [vmem:[#allocation2 + $0xb1] sm:$0xff]
        %v2327 = vld [vmem:[#allocation2 + $0xb9] sm:$0xff]
        %v2328 = vld [vmem:[#allocation2 + $0xc1] sm:$0xff]
        %v2329 = vpack.c.bf16 %v2320, %v2319
        %v2330 = vpack.c.bf16 %v2322, %v2321
        %v2331 = vpack.c.bf16 %v2324, %v2323
        %v2332 = vpack.c.bf16 %v2326, %v2325
        %v2333 = vpack.c.bf16 %v2328, %v2327
        %v2335 = vsel %vm378, %v2329, 0
        %v2338 = vsel %vm378, %v2330, 0
        %v2341 = vsel %vm378, %v2331, 0
        %v2344 = vsel %vm378, %v2332, 0
        %v2347 = vsel %vm378, %v2333, 0
        %2349 = vmatprep.subr.bf16.mxu0 0
        %2350 = vmatpush1.bf16.msra.mxu0 %v1317
        %2351 = vmatprep.subr.bf16.mxu0 0
        %2352 = vmatpush1.bf16.msra.mxu0 0
        %2353 = vmatprep.subr.bf16.mxu0 0
        %2354 = vmatpush1.bf16.msra.mxu0 0
        %2355 = vmatprep.subr.bf16.mxu0 0
        %2356 = vmatpush1.bf16.msra.mxu0 0
        %2357 = vmatprep.subr.bf16.mxu0 0
        %2358 = vmatpush1.bf16.msra.mxu0 0
        %2359 = vmatprep.subr.bf16.mxu0 0
        %2360 = vmatpush1.bf16.msra.mxu0 0
        %2361 = vmatprep.subr.bf16.mxu0 0
        %2362 = vmatpush1.bf16.msra.mxu0 0
        %2363 = vmatprep.subr.bf16.mxu0 0
        %2364 = vmatpush1.bf16.msra.mxu0 0
        %2365 = vmatprep.subr.bf16.mxu0 0
        %2366 = vmatpush1.bf16.msra.mxu0 0
        %2367 = vmatprep.subr.bf16.mxu0 0
        %2368 = vmatpush1.bf16.msra.mxu0 0
        %2369 = vmatprep.subr.bf16.mxu0 0
        %2370 = vmatpush1.bf16.msra.mxu0 0
        %2371 = vmatprep.subr.bf16.mxu0 0
        %2372 = vmatpush1.bf16.msra.mxu0 0
        %2373 = vmatprep.subr.bf16.mxu0 0
        %2374 = vmatpush1.bf16.msra.mxu0 0
        %2375 = vmatprep.subr.bf16.mxu0 0
        %2376 = vmatpush1.bf16.msra.mxu0 0
        %2377 = vmatprep.subr.bf16.mxu0 0
        %2378 = vmatpush1.bf16.msra.mxu0 0
        %2379 = vmatprep.subr.bf16.mxu0 0
        %2380 = vmatpush1.bf16.msra.mxu0 0
        %2381 = vmatprep.mubr.bf16.mxu0 0
        %2382 = vmatmul.mubr.bf16.gmra.mrb[0].mxu0 %v2335
        %v2383 = vpop.f32.mrb[0].mxu0
        %v2384 = vadd.f32 0.0, %v2383
        %v2385 = vpop.f32.mrb[0].mxu0
        %v2386 = vpop.f32.mrb[0].mxu0
        %v2387 = vadd.f32 0.0, %v2386
        %v2388 = vpop.f32.mrb[0].mxu0
        %2389 = vmatprep.mubr.bf16.mxu0 0
        %2390 = vmatmul.mubr.bf16.gmra.mrb[0].mxu0 %v2338
        %v2391 = vpop.f32.mrb[0].mxu0
        %v2392 = vadd.f32 0.0, %v2391
        %v2393 = vpop.f32.mrb[0].mxu0
        %v2394 = vpop.f32.mrb[0].mxu0
        %v2395 = vadd.f32 0.0, %v2394
        %v2396 = vpop.f32.mrb[0].mxu0
        %2397 = vmatprep.mubr.bf16.mxu0 0
        %2398 = vmatmul.mubr.bf16.gmra.mrb[0].mxu0 %v2341
        %v2399 = vpop.f32.mrb[0].mxu0
        %v2400 = vadd.f32 0.0, %v2399
        %v2401 = vpop.f32.mrb[0].mxu0
        %v2402 = vpop.f32.mrb[0].mxu0
        %v2403 = vadd.f32 0.0, %v2402
        %v2404 = vpop.f32.mrb[0].mxu0
        %2405 = vmatprep.mubr.bf16.mxu0 0
        %2406 = vmatmul.mubr.bf16.gmra.mrb[0].mxu0 %v2344
        %v2407 = vpop.f32.mrb[0].mxu0
        %v2408 = vadd.f32 0.0, %v2407
        %v2409 = vpop.f32.mrb[0].mxu0
        %v2410 = vpop.f32.mrb[0].mxu0
        %v2411 = vadd.f32 0.0, %v2410
        %v2412 = vpop.f32.mrb[0].mxu0
        %2413 = vmatprep.mubr.bf16.mxu0 0
        %2414 = vmatmul.mubr.bf16.gmra.mrb[0].mxu0 %v2347
        %v2415 = vpop.f32.mrb[0].mxu0
        %v2416 = vadd.f32 0.0, %v2415
        %v2417 = vpop.f32.mrb[0].mxu0
        %v2418 = vpop.f32.mrb[0].mxu0
        %v2419 = vadd.f32 0.0, %v2418
        %v2420 = vpop.f32.mrb[0].mxu0
        %2421 = vdwg.mxu0
        %v2422 = vadd.f32 %v2309, %v2384
        %v2423 = vadd.f32 %v2310, %v2387
        %v2424 = vadd.f32 %v2311, %v2392
        %v2425 = vadd.f32 %v2312, %v2395
        %v2426 = vadd.f32 %v2313, %v2400
        %v2427 = vadd.f32 %v2314, %v2403
        %v2428 = vadd.f32 %v2315, %v2408
        %v2429 = vadd.f32 %v2316, %v2411
        %v2430 = vadd.f32 %v2317, %v2416
        %v2431 = vadd.f32 %v2318, %v2419
        %v2432 = vld [vmem:[#allocation2 + $0x7a] sm:$0xff]
        %v2433 = vld [vmem:[#allocation2 + $0x82] sm:$0xff]
        %v2434 = vld [vmem:[#allocation2 + $0x8a] sm:$0xff]
        %v2435 = vld [vmem:[#allocation2 + $0x92] sm:$0xff]
        %v2436 = vld [vmem:[#allocation2 + $0x9a] sm:$0xff]
        %v2437 = vld [vmem:[#allocation2 + $0xa2] sm:$0xff]
        %v2438 = vld [vmem:[#allocation2 + $0xaa] sm:$0xff]
        %v2439 = vld [vmem:[#allocation2 + $0xb2] sm:$0xff]
        %v2440 = vld [vmem:[#allocation2 + $0xba] sm:$0xff]
        %v2441 = vld [vmem:[#allocation2 + $0xc2] sm:$0xff]
        %v2442 = vpack.c.bf16 %v2433, %v2432
        %v2443 = vpack.c.bf16 %v2435, %v2434
        %v2444 = vpack.c.bf16 %v2437, %v2436
        %v2445 = vpack.c.bf16 %v2439, %v2438
        %v2446 = vpack.c.bf16 %v2441, %v2440
        %v2448 = vsel %vm378, %v2442, 0
        %v2451 = vsel %vm378, %v2443, 0
        %v2454 = vsel %vm378, %v2444, 0
        %v2457 = vsel %vm378, %v2445, 0
        %v2460 = vsel %vm378, %v2446, 0
        %2462 = vmatprep.subr.bf16.mxu0 0
        %2463 = vmatpush1.bf16.msra.mxu0 %v1433
        %2464 = vmatprep.subr.bf16.mxu0 0
        %2465 = vmatpush1.bf16.msra.mxu0 0
        %2466 = vmatprep.subr.bf16.mxu0 0
        %2467 = vmatpush1.bf16.msra.mxu0 0
        %2468 = vmatprep.subr.bf16.mxu0 0
        %2469 = vmatpush1.bf16.msra.mxu0 0
        %2470 = vmatprep.subr.bf16.mxu0 0
        %2471 = vmatpush1.bf16.msra.mxu0 0
        %2472 = vmatprep.subr.bf16.mxu0 0
        %2473 = vmatpush1.bf16.msra.mxu0 0
        %2474 = vmatprep.subr.bf16.mxu0 0
        %2475 = vmatpush1.bf16.msra.mxu0 0
        %2476 = vmatprep.subr.bf16.mxu0 0
        %2477 = vmatpush1.bf16.msra.mxu0 0
        %2478 = vmatprep.subr.bf16.mxu0 0
        %2479 = vmatpush1.bf16.msra.mxu0 0
        %2480 = vmatprep.subr.bf16.mxu0 0
        %2481 = vmatpush1.bf16.msra.mxu0 0
        %2482 = vmatprep.subr.bf16.mxu0 0
        %2483 = vmatpush1.bf16.msra.mxu0 0
        %2484 = vmatprep.subr.bf16.mxu0 0
        %2485 = vmatpush1.bf16.msra.mxu0 0
        %2486 = vmatprep.subr.bf16.mxu0 0
        %2487 = vmatpush1.bf16.msra.mxu0 0
        %2488 = vmatprep.subr.bf16.mxu0 0
        %2489 = vmatpush1.bf16.msra.mxu0 0
        %2490 = vmatprep.subr.bf16.mxu0 0
        %2491 = vmatpush1.bf16.msra.mxu0 0
        %2492 = vmatprep.subr.bf16.mxu0 0
        %2493 = vmatpush1.bf16.msra.mxu0 0
        %2494 = vmatprep.mubr.bf16.mxu0 0
        %2495 = vmatmul.mubr.bf16.gmra.mrb[0].mxu0 %v2448
        %v2496 = vpop.f32.mrb[0].mxu0
        %v2497 = vadd.f32 0.0, %v2496
        %v2498 = vpop.f32.mrb[0].mxu0
        %v2499 = vpop.f32.mrb[0].mxu0
        %v2500 = vadd.f32 0.0, %v2499
        %v2501 = vpop.f32.mrb[0].mxu0
        %2502 = vmatprep.mubr.bf16.mxu0 0
        %2503 = vmatmul.mubr.bf16.gmra.mrb[0].mxu0 %v2451
        %v2504 = vpop.f32.mrb[0].mxu0
        %v2505 = vadd.f32 0.0, %v2504
        %v2506 = vpop.f32.mrb[0].mxu0
        %v2507 = vpop.f32.mrb[0].mxu0
        %v2508 = vadd.f32 0.0, %v2507
        %v2509 = vpop.f32.mrb[0].mxu0
        %2510 = vmatprep.mubr.bf16.mxu0 0
        %2511 = vmatmul.mubr.bf16.gmra.mrb[0].mxu0 %v2454
        %v2512 = vpop.f32.mrb[0].mxu0
        %v2513 = vadd.f32 0.0, %v2512
        %v2514 = vpop.f32.mrb[0].mxu0
        %v2515 = vpop.f32.mrb[0].mxu0
        %v2516 = vadd.f32 0.0, %v2515
        %v2517 = vpop.f32.mrb[0].mxu0
        %2518 = vmatprep.mubr.bf16.mxu0 0
        %2519 = vmatmul.mubr.bf16.gmra.mrb[0].mxu0 %v2457
        %v2520 = vpop.f32.mrb[0].mxu0
        %v2521 = vadd.f32 0.0, %v2520
        %v2522 = vpop.f32.mrb[0].mxu0
        %v2523 = vpop.f32.mrb[0].mxu0
        %v2524 = vadd.f32 0.0, %v2523
        %v2525 = vpop.f32.mrb[0].mxu0
        %2526 = vmatprep.mubr.bf16.mxu0 0
        %2527 = vmatmul.mubr.bf16.gmra.mrb[0].mxu0 %v2460
        %v2528 = vpop.f32.mrb[0].mxu0
        %v2529 = vadd.f32 0.0, %v2528
        %v2530 = vpop.f32.mrb[0].mxu0
        %v2531 = vpop.f32.mrb[0].mxu0
        %v2532 = vadd.f32 0.0, %v2531
        %v2533 = vpop.f32.mrb[0].mxu0
        %2534 = vdwg.mxu0
        %v2535 = vadd.f32 %v2422, %v2497
        %v2536 = vadd.f32 %v2423, %v2500
        %v2537 = vadd.f32 %v2424, %v2505
        %v2538 = vadd.f32 %v2425, %v2508
        %v2539 = vadd.f32 %v2426, %v2513
        %v2540 = vadd.f32 %v2427, %v2516
        %v2541 = vadd.f32 %v2428, %v2521
        %v2542 = vadd.f32 %v2429, %v2524
        %v2543 = vadd.f32 %v2430, %v2529
        %v2544 = vadd.f32 %v2431, %v2532
        %2545 = vst [vmem:[%s263 + $0x50] sm:$0xff] %v2535
        %2546 = vst [vmem:[%s263 + $0x58] sm:$0xff] %v2536
        %2547 = vst [vmem:[%s263 + $0x60] sm:$0xff] %v2537
        %2548 = vst [vmem:[%s263 + $0x68] sm:$0xff] %v2538
        %2549 = vst [vmem:[%s263 + $0x70] sm:$0xff] %v2539
        %2550 = vst [vmem:[%s263 + $0x78] sm:$0xff] %v2540
        %2551 = vst [vmem:[%s263 + $0x80] sm:$0xff] %v2541
        %2552 = vst [vmem:[%s263 + $0x88] sm:$0xff] %v2542
        %2553 = vst [vmem:[%s263 + $0x90] sm:$0xff] %v2543
        %2554 = vst [vmem:[%s263 + $0x98] sm:$0xff] %v2544
        %v2555 = vld [vmem:[#allocation2 + $0xa0] sm:$0xff]
        %v2556 = vld [vmem:[#allocation2 + $0xa8] sm:$0xff]
        %v2557 = vld [vmem:[#allocation2 + $0xb0] sm:$0xff]
        %v2558 = vld [vmem:[#allocation2 + $0xb8] sm:$0xff]
        %v2559 = vld [vmem:[#allocation2 + $0xc0] sm:$0xff]
        %v2560 = vld [vmem:[#allocation2 + $0xc8] sm:$0xff]
        %v2561 = vld [vmem:[#allocation2 + $0xd0] sm:$0xff]
        %v2562 = vld [vmem:[#allocation2 + $0xd8] sm:$0xff]
        %v2563 = vld [vmem:[#allocation2 + $0xe0] sm:$0xff]
        %v2564 = vld [vmem:[#allocation2 + $0xe8] sm:$0xff]
        %v2565 = vpack.c.bf16 %v2556, %v2555
        %v2566 = vpack.c.bf16 %v2558, %v2557
        %v2567 = vpack.c.bf16 %v2560, %v2559
        %v2568 = vpack.c.bf16 %v2562, %v2561
        %v2569 = vpack.c.bf16 %v2564, %v2563
        %v2571 = vsel %vm378, %v2565, 0
        %v2574 = vsel %vm378, %v2566, 0
        %v2577 = vsel %vm378, %v2567, 0
        %v2580 = vsel %vm378, %v2568, 0
        %v2583 = vsel %vm378, %v2569, 0
        %2585 = vmatprep.subr.bf16.mxu0 0
        %2586 = vmatpush1.bf16.msra.mxu0 %v499
        %2587 = vmatprep.subr.bf16.mxu0 0
        %2588 = vmatpush1.bf16.msra.mxu0 0
        %2589 = vmatprep.subr.bf16.mxu0 0
        %2590 = vmatpush1.bf16.msra.mxu0 0
        %2591 = vmatprep.subr.bf16.mxu0 0
        %2592 = vmatpush1.bf16.msra.mxu0 0
        %2593 = vmatprep.subr.bf16.mxu0 0
        %2594 = vmatpush1.bf16.msra.mxu0 0
        %2595 = vmatprep.subr.bf16.mxu0 0
        %2596 = vmatpush1.bf16.msra.mxu0 0
        %2597 = vmatprep.subr.bf16.mxu0 0
        %2598 = vmatpush1.bf16.msra.mxu0 0
        %2599 = vmatprep.subr.bf16.mxu0 0
        %2600 = vmatpush1.bf16.msra.mxu0 0
        %2601 = vmatprep.subr.bf16.mxu0 0
        %2602 = vmatpush1.bf16.msra.mxu0 0
        %2603 = vmatprep.subr.bf16.mxu0 0
        %2604 = vmatpush1.bf16.msra.mxu0 0
        %2605 = vmatprep.subr.bf16.mxu0 0
        %2606 = vmatpush1.bf16.msra.mxu0 0
        %2607 = vmatprep.subr.bf16.mxu0 0
        %2608 = vmatpush1.bf16.msra.mxu0 0
        %2609 = vmatprep.subr.bf16.mxu0 0
        %2610 = vmatpush1.bf16.msra.mxu0 0
        %2611 = vmatprep.subr.bf16.mxu0 0
        %2612 = vmatpush1.bf16.msra.mxu0 0
        %2613 = vmatprep.subr.bf16.mxu0 0
        %2614 = vmatpush1.bf16.msra.mxu0 0
        %2615 = vmatprep.subr.bf16.mxu0 0
        %2616 = vmatpush1.bf16.msra.mxu0 0
        %2617 = vmatprep.mubr.bf16.mxu0 0
        %2618 = vmatmul.mubr.bf16.gmra.mrb[0].mxu0 %v2571
        %v2619 = vpop.f32.mrb[0].mxu0
        %v2620 = vadd.f32 0.0, %v2619
        %v2621 = vpop.f32.mrb[0].mxu0
        %v2622 = vpop.f32.mrb[0].mxu0
        %v2623 = vadd.f32 0.0, %v2622
        %v2624 = vpop.f32.mrb[0].mxu0
        %2625 = vmatprep.mubr.bf16.mxu0 0
        %2626 = vmatmul.mubr.bf16.gmra.mrb[0].mxu0 %v2574
        %v2627 = vpop.f32.mrb[0].mxu0
        %v2628 = vadd.f32 0.0, %v2627
        %v2629 = vpop.f32.mrb[0].mxu0
        %v2630 = vpop.f32.mrb[0].mxu0
        %v2631 = vadd.f32 0.0, %v2630
        %v2632 = vpop.f32.mrb[0].mxu0
        %2633 = vmatprep.mubr.bf16.mxu0 0
        %2634 = vmatmul.mubr.bf16.gmra.mrb[0].mxu0 %v2577
        %v2635 = vpop.f32.mrb[0].mxu0
        %v2636 = vadd.f32 0.0, %v2635
        %v2637 = vpop.f32.mrb[0].mxu0
        %v2638 = vpop.f32.mrb[0].mxu0
        %v2639 = vadd.f32 0.0, %v2638
        %v2640 = vpop.f32.mrb[0].mxu0
        %2641 = vmatprep.mubr.bf16.mxu0 0
        %2642 = vmatmul.mubr.bf16.gmra.mrb[0].mxu0 %v2580
        %v2643 = vpop.f32.mrb[0].mxu0
        %v2644 = vadd.f32 0.0, %v2643
        %v2645 = vpop.f32.mrb[0].mxu0
        %v2646 = vpop.f32.mrb[0].mxu0
        %v2647 = vadd.f32 0.0, %v2646
        %v2648 = vpop.f32.mrb[0].mxu0
        %2649 = vmatprep.mubr.bf16.mxu0 0
        %2650 = vmatmul.mubr.bf16.gmra.mrb[0].mxu0 %v2583
        %v2651 = vpop.f32.mrb[0].mxu0
        %v2652 = vadd.f32 0.0, %v2651
        %v2653 = vpop.f32.mrb[0].mxu0
        %v2654 = vpop.f32.mrb[0].mxu0
        %v2655 = vadd.f32 0.0, %v2654
        %v2656 = vpop.f32.mrb[0].mxu0
        %2657 = vdwg.mxu0
        %v2658 = vadd.f32 %v578, %v2620
        %v2659 = vadd.f32 %v578, %v2623
        %v2660 = vadd.f32 %v578, %v2628
        %v2661 = vadd.f32 %v578, %v2631
        %v2662 = vadd.f32 %v578, %v2636
        %v2663 = vadd.f32 %v578, %v2639
        %v2664 = vadd.f32 %v578, %v2644
        %v2665 = vadd.f32 %v578, %v2647
        %v2666 = vadd.f32 %v578, %v2652
        %v2667 = vadd.f32 %v578, %v2655
        %v2668 = vld [vmem:[#allocation2 + $0xa1] sm:$0xff]
        %v2669 = vld [vmem:[#allocation2 + $0xa9] sm:$0xff]
        %v2670 = vld [vmem:[#allocation2 + $0xb1] sm:$0xff]
        %v2671 = vld [vmem:[#allocation2 + $0xb9] sm:$0xff]
        %v2672 = vld [vmem:[#allocation2 + $0xc1] sm:$0xff]
        %v2673 = vld [vmem:[#allocation2 + $0xc9] sm:$0xff]
        %v2674 = vld [vmem:[#allocation2 + $0xd1] sm:$0xff]
        %v2675 = vld [vmem:[#allocation2 + $0xd9] sm:$0xff]
        %v2676 = vld [vmem:[#allocation2 + $0xe1] sm:$0xff]
        %v2677 = vld [vmem:[#allocation2 + $0xe9] sm:$0xff]
        %v2678 = vpack.c.bf16 %v2669, %v2668
        %v2679 = vpack.c.bf16 %v2671, %v2670
        %v2680 = vpack.c.bf16 %v2673, %v2672
        %v2681 = vpack.c.bf16 %v2675, %v2674
        %v2682 = vpack.c.bf16 %v2677, %v2676
        %v2684 = vsel %vm378, %v2678, 0
        %v2687 = vsel %vm378, %v2679, 0
        %v2690 = vsel %vm378, %v2680, 0
        %v2693 = vsel %vm378, %v2681, 0
        %v2696 = vsel %vm378, %v2682, 0
        %2698 = vmatprep.subr.bf16.mxu0 0
        %2699 = vmatpush1.bf16.msra.mxu0 %v621
        %2700 = vmatprep.subr.bf16.mxu0 0
        %2701 = vmatpush1.bf16.msra.mxu0 0
        %2702 = vmatprep.subr.bf16.mxu0 0
        %2703 = vmatpush1.bf16.msra.mxu0 0
        %2704 = vmatprep.subr.bf16.mxu0 0
        %2705 = vmatpush1.bf16.msra.mxu0 0
        %2706 = vmatprep.subr.bf16.mxu0 0
        %2707 = vmatpush1.bf16.msra.mxu0 0
        %2708 = vmatprep.subr.bf16.mxu0 0
        %2709 = vmatpush1.bf16.msra.mxu0 0
        %2710 = vmatprep.subr.bf16.mxu0 0
        %2711 = vmatpush1.bf16.msra.mxu0 0
        %2712 = vmatprep.subr.bf16.mxu0 0
        %2713 = vmatpush1.bf16.msra.mxu0 0
        %2714 = vmatprep.subr.bf16.mxu0 0
        %2715 = vmatpush1.bf16.msra.mxu0 0
        %2716 = vmatprep.subr.bf16.mxu0 0
        %2717 = vmatpush1.bf16.msra.mxu0 0
        %2718 = vmatprep.subr.bf16.mxu0 0
        %2719 = vmatpush1.bf16.msra.mxu0 0
        %2720 = vmatprep.subr.bf16.mxu0 0
        %2721 = vmatpush1.bf16.msra.mxu0 0
        %2722 = vmatprep.subr.bf16.mxu0 0
        %2723 = vmatpush1.bf16.msra.mxu0 0
        %2724 = vmatprep.subr.bf16.mxu0 0
        %2725 = vmatpush1.bf16.msra.mxu0 0
        %2726 = vmatprep.subr.bf16.mxu0 0
        %2727 = vmatpush1.bf16.msra.mxu0 0
        %2728 = vmatprep.subr.bf16.mxu0 0
        %2729 = vmatpush1.bf16.msra.mxu0 0
        %2730 = vmatprep.mubr.bf16.mxu0 0
        %2731 = vmatmul.mubr.bf16.gmra.mrb[0].mxu0 %v2684
        %v2732 = vpop.f32.mrb[0].mxu0
        %v2733 = vadd.f32 0.0, %v2732
        %v2734 = vpop.f32.mrb[0].mxu0
        %v2735 = vpop.f32.mrb[0].mxu0
        %v2736 = vadd.f32 0.0, %v2735
        %v2737 = vpop.f32.mrb[0].mxu0
        %2738 = vmatprep.mubr.bf16.mxu0 0
        %2739 = vmatmul.mubr.bf16.gmra.mrb[0].mxu0 %v2687
        %v2740 = vpop.f32.mrb[0].mxu0
        %v2741 = vadd.f32 0.0, %v2740
        %v2742 = vpop.f32.mrb[0].mxu0
        %v2743 = vpop.f32.mrb[0].mxu0
        %v2744 = vadd.f32 0.0, %v2743
        %v2745 = vpop.f32.mrb[0].mxu0
        %2746 = vmatprep.mubr.bf16.mxu0 0
        %2747 = vmatmul.mubr.bf16.gmra.mrb[0].mxu0 %v2690
        %v2748 = vpop.f32.mrb[0].mxu0
        %v2749 = vadd.f32 0.0, %v2748
        %v2750 = vpop.f32.mrb[0].mxu0
        %v2751 = vpop.f32.mrb[0].mxu0
        %v2752 = vadd.f32 0.0, %v2751
        %v2753 = vpop.f32.mrb[0].mxu0
        %2754 = vmatprep.mubr.bf16.mxu0 0
        %2755 = vmatmul.mubr.bf16.gmra.mrb[0].mxu0 %v2693
        %v2756 = vpop.f32.mrb[0].mxu0
        %v2757 = vadd.f32 0.0, %v2756
        %v2758 = vpop.f32.mrb[0].mxu0
        %v2759 = vpop.f32.mrb[0].mxu0
        %v2760 = vadd.f32 0.0, %v2759
        %v2761 = vpop.f32.mrb[0].mxu0
        %2762 = vmatprep.mubr.bf16.mxu0 0
        %2763 = vmatmul.mubr.bf16.gmra.mrb[0].mxu0 %v2696
        %v2764 = vpop.f32.mrb[0].mxu0
        %v2765 = vadd.f32 0.0, %v2764
        %v2766 = vpop.f32.mrb[0].mxu0
        %v2767 = vpop.f32.mrb[0].mxu0
        %v2768 = vadd.f32 0.0, %v2767
        %v2769 = vpop.f32.mrb[0].mxu0
        %2770 = vdwg.mxu0
        %v2771 = vadd.f32 %v2658, %v2733
        %v2772 = vadd.f32 %v2659, %v2736
        %v2773 = vadd.f32 %v2660, %v2741
        %v2774 = vadd.f32 %v2661, %v2744
        %v2775 = vadd.f32 %v2662, %v2749
        %v2776 = vadd.f32 %v2663, %v2752
        %v2777 = vadd.f32 %v2664, %v2757
        %v2778 = vadd.f32 %v2665, %v2760
        %v2779 = vadd.f32 %v2666, %v2765
        %v2780 = vadd.f32 %v2667, %v2768
        %v2781 = vld [vmem:[#allocation2 + $0xa2] sm:$0xff]
        %v2782 = vld [vmem:[#allocation2 + $0xaa] sm:$0xff]
        %v2783 = vld [vmem:[#allocation2 + $0xb2] sm:$0xff]
        %v2784 = vld [vmem:[#allocation2 + $0xba] sm:$0xff]
        %v2785 = vld [vmem:[#allocation2 + $0xc2] sm:$0xff]
        %v2786 = vld [vmem:[#allocation2 + $0xca] sm:$0xff]
        %v2787 = vld [vmem:[#allocation2 + $0xd2] sm:$0xff]
        %v2788 = vld [vmem:[#allocation2 + $0xda] sm:$0xff]
        %v2789 = vld [vmem:[#allocation2 + $0xe2] sm:$0xff]
        %v2790 = vld [vmem:[#allocation2 + $0xea] sm:$0xff]
        %v2791 = vpack.c.bf16 %v2782, %v2781
        %v2792 = vpack.c.bf16 %v2784, %v2783
        %v2793 = vpack.c.bf16 %v2786, %v2785
        %v2794 = vpack.c.bf16 %v2788, %v2787
        %v2795 = vpack.c.bf16 %v2790, %v2789
        %v2797 = vsel %vm378, %v2791, 0
        %v2800 = vsel %vm378, %v2792, 0
        %v2803 = vsel %vm378, %v2793, 0
        %v2806 = vsel %vm378, %v2794, 0
        %v2809 = vsel %vm378, %v2795, 0
        %2811 = vmatprep.subr.bf16.mxu0 0
        %2812 = vmatpush1.bf16.msra.mxu0 %v737
        %2813 = vmatprep.subr.bf16.mxu0 0
        %2814 = vmatpush1.bf16.msra.mxu0 0
        %2815 = vmatprep.subr.bf16.mxu0 0
        %2816 = vmatpush1.bf16.msra.mxu0 0
        %2817 = vmatprep.subr.bf16.mxu0 0
        %2818 = vmatpush1.bf16.msra.mxu0 0
        %2819 = vmatprep.subr.bf16.mxu0 0
        %2820 = vmatpush1.bf16.msra.mxu0 0
        %2821 = vmatprep.subr.bf16.mxu0 0
        %2822 = vmatpush1.bf16.msra.mxu0 0
        %2823 = vmatprep.subr.bf16.mxu0 0
        %2824 = vmatpush1.bf16.msra.mxu0 0
        %2825 = vmatprep.subr.bf16.mxu0 0
        %2826 = vmatpush1.bf16.msra.mxu0 0
        %2827 = vmatprep.subr.bf16.mxu0 0
        %2828 = vmatpush1.bf16.msra.mxu0 0
        %2829 = vmatprep.subr.bf16.mxu0 0
        %2830 = vmatpush1.bf16.msra.mxu0 0
        %2831 = vmatprep.subr.bf16.mxu0 0
        %2832 = vmatpush1.bf16.msra.mxu0 0
        %2833 = vmatprep.subr.bf16.mxu0 0
        %2834 = vmatpush1.bf16.msra.mxu0 0
        %2835 = vmatprep.subr.bf16.mxu0 0
        %2836 = vmatpush1.bf16.msra.mxu0 0
        %2837 = vmatprep.subr.bf16.mxu0 0
        %2838 = vmatpush1.bf16.msra.mxu0 0
        %2839 = vmatprep.subr.bf16.mxu0 0
        %2840 = vmatpush1.bf16.msra.mxu0 0
        %2841 = vmatprep.subr.bf16.mxu0 0
        %2842 = vmatpush1.bf16.msra.mxu0 0
        %2843 = vmatprep.mubr.bf16.mxu0 0
        %2844 = vmatmul.mubr.bf16.gmra.mrb[0].mxu0 %v2797
        %v2845 = vpop.f32.mrb[0].mxu0
        %v2846 = vadd.f32 0.0, %v2845
        %v2847 = vpop.f32.mrb[0].mxu0
        %v2848 = vpop.f32.mrb[0].mxu0
        %v2849 = vadd.f32 0.0, %v2848
        %v2850 = vpop.f32.mrb[0].mxu0
        %2851 = vmatprep.mubr.bf16.mxu0 0
        %2852 = vmatmul.mubr.bf16.gmra.mrb[0].mxu0 %v2800
        %v2853 = vpop.f32.mrb[0].mxu0
        %v2854 = vadd.f32 0.0, %v2853
        %v2855 = vpop.f32.mrb[0].mxu0
        %v2856 = vpop.f32.mrb[0].mxu0
        %v2857 = vadd.f32 0.0, %v2856
        %v2858 = vpop.f32.mrb[0].mxu0
        %2859 = vmatprep.mubr.bf16.mxu0 0
        %2860 = vmatmul.mubr.bf16.gmra.mrb[0].mxu0 %v2803
        %v2861 = vpop.f32.mrb[0].mxu0
        %v2862 = vadd.f32 0.0, %v2861
        %v2863 = vpop.f32.mrb[0].mxu0
        %v2864 = vpop.f32.mrb[0].mxu0
        %v2865 = vadd.f32 0.0, %v2864
        %v2866 = vpop.f32.mrb[0].mxu0
        %2867 = vmatprep.mubr.bf16.mxu0 0
        %2868 = vmatmul.mubr.bf16.gmra.mrb[0].mxu0 %v2806
        %v2869 = vpop.f32.mrb[0].mxu0
        %v2870 = vadd.f32 0.0, %v2869
        %v2871 = vpop.f32.mrb[0].mxu0
        %v2872 = vpop.f32.mrb[0].mxu0
        %v2873 = vadd.f32 0.0, %v2872
        %v2874 = vpop.f32.mrb[0].mxu0
        %2875 = vmatprep.mubr.bf16.mxu0 0
        %2876 = vmatmul.mubr.bf16.gmra.mrb[0].mxu0 %v2809
        %v2877 = vpop.f32.mrb[0].mxu0
        %v2878 = vadd.f32 0.0, %v2877
        %v2879 = vpop.f32.mrb[0].mxu0
        %v2880 = vpop.f32.mrb[0].mxu0
        %v2881 = vadd.f32 0.0, %v2880
        %v2882 = vpop.f32.mrb[0].mxu0
        %2883 = vdwg.mxu0
        %v2884 = vadd.f32 %v2771, %v2846
        %v2885 = vadd.f32 %v2772, %v2849
        %v2886 = vadd.f32 %v2773, %v2854
        %v2887 = vadd.f32 %v2774, %v2857
        %v2888 = vadd.f32 %v2775, %v2862
        %v2889 = vadd.f32 %v2776, %v2865
        %v2890 = vadd.f32 %v2777, %v2870
        %v2891 = vadd.f32 %v2778, %v2873
        %v2892 = vadd.f32 %v2779, %v2878
        %v2893 = vadd.f32 %v2780, %v2881
        %v2894 = vld [vmem:[#allocation2 + $0xb4] sm:$0xff]
        %v2895 = vld [vmem:[#allocation2 + $0xbc] sm:$0xff]
        %v2896 = vld [vmem:[#allocation2 + $0xc4] sm:$0xff]
        %v2897 = vld [vmem:[#allocation2 + $0xcc] sm:$0xff]
        %v2898 = vld [vmem:[#allocation2 + $0xd4] sm:$0xff]
        %v2899 = vld [vmem:[#allocation2 + $0xdc] sm:$0xff]
        %v2900 = vld [vmem:[#allocation2 + $0xe4] sm:$0xff]
        %v2901 = vld [vmem:[#allocation2 + $0xec] sm:$0xff]
        %v2902 = vld [vmem:[#allocation2 + $0xf4] sm:$0xff]
        %v2903 = vld [vmem:[#allocation2 + $0xfc] sm:$0xff]
        %v2904 = vpack.c.bf16 %v2895, %v2894
        %v2905 = vpack.c.bf16 %v2897, %v2896
        %v2906 = vpack.c.bf16 %v2899, %v2898
        %v2907 = vpack.c.bf16 %v2901, %v2900
        %v2908 = vpack.c.bf16 %v2903, %v2902
        %v2910 = vsel %vm378, %v2904, 0
        %v2913 = vsel %vm378, %v2905, 0
        %v2916 = vsel %vm378, %v2906, 0
        %v2919 = vsel %vm378, %v2907, 0
        %v2922 = vsel %vm378, %v2908, 0
        %2924 = vmatprep.subr.bf16.mxu0 0
        %2925 = vmatpush1.bf16.msra.mxu0 %v853
        %2926 = vmatprep.subr.bf16.mxu0 0
        %2927 = vmatpush1.bf16.msra.mxu0 0
        %2928 = vmatprep.subr.bf16.mxu0 0
        %2929 = vmatpush1.bf16.msra.mxu0 0
        %2930 = vmatprep.subr.bf16.mxu0 0
        %2931 = vmatpush1.bf16.msra.mxu0 0
        %2932 = vmatprep.subr.bf16.mxu0 0
        %2933 = vmatpush1.bf16.msra.mxu0 0
        %2934 = vmatprep.subr.bf16.mxu0 0
        %2935 = vmatpush1.bf16.msra.mxu0 0
        %2936 = vmatprep.subr.bf16.mxu0 0
        %2937 = vmatpush1.bf16.msra.mxu0 0
        %2938 = vmatprep.subr.bf16.mxu0 0
        %2939 = vmatpush1.bf16.msra.mxu0 0
        %2940 = vmatprep.subr.bf16.mxu0 0
        %2941 = vmatpush1.bf16.msra.mxu0 0
        %2942 = vmatprep.subr.bf16.mxu0 0
        %2943 = vmatpush1.bf16.msra.mxu0 0
        %2944 = vmatprep.subr.bf16.mxu0 0
        %2945 = vmatpush1.bf16.msra.mxu0 0
        %2946 = vmatprep.subr.bf16.mxu0 0
        %2947 = vmatpush1.bf16.msra.mxu0 0
        %2948 = vmatprep.subr.bf16.mxu0 0
        %2949 = vmatpush1.bf16.msra.mxu0 0
        %2950 = vmatprep.subr.bf16.mxu0 0
        %2951 = vmatpush1.bf16.msra.mxu0 0
        %2952 = vmatprep.subr.bf16.mxu0 0
        %2953 = vmatpush1.bf16.msra.mxu0 0
        %2954 = vmatprep.subr.bf16.mxu0 0
        %2955 = vmatpush1.bf16.msra.mxu0 0
        %2956 = vmatprep.mubr.bf16.mxu0 0
        %2957 = vmatmul.mubr.bf16.gmra.mrb[0].mxu0 %v2910
        %v2958 = vpop.f32.mrb[0].mxu0
        %v2959 = vadd.f32 0.0, %v2958
        %v2960 = vpop.f32.mrb[0].mxu0
        %v2961 = vpop.f32.mrb[0].mxu0
        %v2962 = vadd.f32 0.0, %v2961
        %v2963 = vpop.f32.mrb[0].mxu0
        %2964 = vmatprep.mubr.bf16.mxu0 0
        %2965 = vmatmul.mubr.bf16.gmra.mrb[0].mxu0 %v2913
        %v2966 = vpop.f32.mrb[0].mxu0
        %v2967 = vadd.f32 0.0, %v2966
        %v2968 = vpop.f32.mrb[0].mxu0
        %v2969 = vpop.f32.mrb[0].mxu0
        %v2970 = vadd.f32 0.0, %v2969
        %v2971 = vpop.f32.mrb[0].mxu0
        %2972 = vmatprep.mubr.bf16.mxu0 0
        %2973 = vmatmul.mubr.bf16.gmra.mrb[0].mxu0 %v2916
        %v2974 = vpop.f32.mrb[0].mxu0
        %v2975 = vadd.f32 0.0, %v2974
        %v2976 = vpop.f32.mrb[0].mxu0
        %v2977 = vpop.f32.mrb[0].mxu0
        %v2978 = vadd.f32 0.0, %v2977
        %v2979 = vpop.f32.mrb[0].mxu0
        %2980 = vmatprep.mubr.bf16.mxu0 0
        %2981 = vmatmul.mubr.bf16.gmra.mrb[0].mxu0 %v2919
        %v2982 = vpop.f32.mrb[0].mxu0
        %v2983 = vadd.f32 0.0, %v2982
        %v2984 = vpop.f32.mrb[0].mxu0
        %v2985 = vpop.f32.mrb[0].mxu0
        %v2986 = vadd.f32 0.0, %v2985
        %v2987 = vpop.f32.mrb[0].mxu0
        %2988 = vmatprep.mubr.bf16.mxu0 0
        %2989 = vmatmul.mubr.bf16.gmra.mrb[0].mxu0 %v2922
        %v2990 = vpop.f32.mrb[0].mxu0
        %v2991 = vadd.f32 0.0, %v2990
        %v2992 = vpop.f32.mrb[0].mxu0
        %v2993 = vpop.f32.mrb[0].mxu0
        %v2994 = vadd.f32 0.0, %v2993
        %v2995 = vpop.f32.mrb[0].mxu0
        %2996 = vdwg.mxu0
        %v2997 = vadd.f32 %v2884, %v2959
        %v2998 = vadd.f32 %v2885, %v2962
        %v2999 = vadd.f32 %v2886, %v2967
        %v3000 = vadd.f32 %v2887, %v2970
        %v3001 = vadd.f32 %v2888, %v2975
        %v3002 = vadd.f32 %v2889, %v2978
        %v3003 = vadd.f32 %v2890, %v2983
        %v3004 = vadd.f32 %v2891, %v2986
        %v3005 = vadd.f32 %v2892, %v2991
        %v3006 = vadd.f32 %v2893, %v2994
        %v3007 = vld [vmem:[#allocation2 + $0xb5] sm:$0xff]
        %v3008 = vld [vmem:[#allocation2 + $0xbd] sm:$0xff]
        %v3009 = vld [vmem:[#allocation2 + $0xc5] sm:$0xff]
        %v3010 = vld [vmem:[#allocation2 + $0xcd] sm:$0xff]
        %v3011 = vld [vmem:[#allocation2 + $0xd5] sm:$0xff]
        %v3012 = vld [vmem:[#allocation2 + $0xdd] sm:$0xff]
        %v3013 = vld [vmem:[#allocation2 + $0xe5] sm:$0xff]
        %v3014 = vld [vmem:[#allocation2 + $0xed] sm:$0xff]
        %v3015 = vld [vmem:[#allocation2 + $0xf5] sm:$0xff]
        %v3016 = vld [vmem:[#allocation2 + $0xfd] sm:$0xff]
        %v3017 = vpack.c.bf16 %v3008, %v3007
        %v3018 = vpack.c.bf16 %v3010, %v3009
        %v3019 = vpack.c.bf16 %v3012, %v3011
        %v3020 = vpack.c.bf16 %v3014, %v3013
        %v3021 = vpack.c.bf16 %v3016, %v3015
        %v3023 = vsel %vm378, %v3017, 0
        %v3026 = vsel %vm378, %v3018, 0
        %v3029 = vsel %vm378, %v3019, 0
        %v3032 = vsel %vm378, %v3020, 0
        %v3035 = vsel %vm378, %v3021, 0
        %3037 = vmatprep.subr.bf16.mxu0 0
        %3038 = vmatpush1.bf16.msra.mxu0 %v969
        %3039 = vmatprep.subr.bf16.mxu0 0
        %3040 = vmatpush1.bf16.msra.mxu0 0
        %3041 = vmatprep.subr.bf16.mxu0 0
        %3042 = vmatpush1.bf16.msra.mxu0 0
        %3043 = vmatprep.subr.bf16.mxu0 0
        %3044 = vmatpush1.bf16.msra.mxu0 0
        %3045 = vmatprep.subr.bf16.mxu0 0
        %3046 = vmatpush1.bf16.msra.mxu0 0
        %3047 = vmatprep.subr.bf16.mxu0 0
        %3048 = vmatpush1.bf16.msra.mxu0 0
        %3049 = vmatprep.subr.bf16.mxu0 0
        %3050 = vmatpush1.bf16.msra.mxu0 0
        %3051 = vmatprep.subr.bf16.mxu0 0
        %3052 = vmatpush1.bf16.msra.mxu0 0
        %3053 = vmatprep.subr.bf16.mxu0 0
        %3054 = vmatpush1.bf16.msra.mxu0 0
        %3055 = vmatprep.subr.bf16.mxu0 0
        %3056 = vmatpush1.bf16.msra.mxu0 0
        %3057 = vmatprep.subr.bf16.mxu0 0
        %3058 = vmatpush1.bf16.msra.mxu0 0
        %3059 = vmatprep.subr.bf16.mxu0 0
        %3060 = vmatpush1.bf16.msra.mxu0 0
        %3061 = vmatprep.subr.bf16.mxu0 0
        %3062 = vmatpush1.bf16.msra.mxu0 0
        %3063 = vmatprep.subr.bf16.mxu0 0
        %3064 = vmatpush1.bf16.msra.mxu0 0
        %3065 = vmatprep.subr.bf16.mxu0 0
        %3066 = vmatpush1.bf16.msra.mxu0 0
        %3067 = vmatprep.subr.bf16.mxu0 0
        %3068 = vmatpush1.bf16.msra.mxu0 0
        %3069 = vmatprep.mubr.bf16.mxu0 0
        %3070 = vmatmul.mubr.bf16.gmra.mrb[0].mxu0 %v3023
        %v3071 = vpop.f32.mrb[0].mxu0
        %v3072 = vadd.f32 0.0, %v3071
        %v3073 = vpop.f32.mrb[0].mxu0
        %v3074 = vpop.f32.mrb[0].mxu0
        %v3075 = vadd.f32 0.0, %v3074
        %v3076 = vpop.f32.mrb[0].mxu0
        %3077 = vmatprep.mubr.bf16.mxu0 0
        %3078 = vmatmul.mubr.bf16.gmra.mrb[0].mxu0 %v3026
        %v3079 = vpop.f32.mrb[0].mxu0
        %v3080 = vadd.f32 0.0, %v3079
        %v3081 = vpop.f32.mrb[0].mxu0
        %v3082 = vpop.f32.mrb[0].mxu0
        %v3083 = vadd.f32 0.0, %v3082
        %v3084 = vpop.f32.mrb[0].mxu0
        %3085 = vmatprep.mubr.bf16.mxu0 0
        %3086 = vmatmul.mubr.bf16.gmra.mrb[0].mxu0 %v3029
        %v3087 = vpop.f32.mrb[0].mxu0
        %v3088 = vadd.f32 0.0, %v3087
        %v3089 = vpop.f32.mrb[0].mxu0
        %v3090 = vpop.f32.mrb[0].mxu0
        %v3091 = vadd.f32 0.0, %v3090
        %v3092 = vpop.f32.mrb[0].mxu0
        %3093 = vmatprep.mubr.bf16.mxu0 0
        %3094 = vmatmul.mubr.bf16.gmra.mrb[0].mxu0 %v3032
        %v3095 = vpop.f32.mrb[0].mxu0
        %v3096 = vadd.f32 0.0, %v3095
        %v3097 = vpop.f32.mrb[0].mxu0
        %v3098 = vpop.f32.mrb[0].mxu0
        %v3099 = vadd.f32 0.0, %v3098
        %v3100 = vpop.f32.mrb[0].mxu0
        %3101 = vmatprep.mubr.bf16.mxu0 0
        %3102 = vmatmul.mubr.bf16.gmra.mrb[0].mxu0 %v3035
        %v3103 = vpop.f32.mrb[0].mxu0
        %v3104 = vadd.f32 0.0, %v3103
        %v3105 = vpop.f32.mrb[0].mxu0
        %v3106 = vpop.f32.mrb[0].mxu0
        %v3107 = vadd.f32 0.0, %v3106
        %v3108 = vpop.f32.mrb[0].mxu0
        %3109 = vdwg.mxu0
        %v3110 = vadd.f32 %v2997, %v3072
        %v3111 = vadd.f32 %v2998, %v3075
        %v3112 = vadd.f32 %v2999, %v3080
        %v3113 = vadd.f32 %v3000, %v3083
        %v3114 = vadd.f32 %v3001, %v3088
        %v3115 = vadd.f32 %v3002, %v3091
        %v3116 = vadd.f32 %v3003, %v3096
        %v3117 = vadd.f32 %v3004, %v3099
        %v3118 = vadd.f32 %v3005, %v3104
        %v3119 = vadd.f32 %v3006, %v3107
        %v3120 = vld [vmem:[#allocation2 + $0xb6] sm:$0xff]
        %v3121 = vld [vmem:[#allocation2 + $0xbe] sm:$0xff]
        %v3122 = vld [vmem:[#allocation2 + $0xc6] sm:$0xff]
        %v3123 = vld [vmem:[#allocation2 + $0xce] sm:$0xff]
        %v3124 = vld [vmem:[#allocation2 + $0xd6] sm:$0xff]
        %v3125 = vld [vmem:[#allocation2 + $0xde] sm:$0xff]
        %v3126 = vld [vmem:[#allocation2 + $0xe6] sm:$0xff]
        %v3127 = vld [vmem:[#allocation2 + $0xee] sm:$0xff]
        %v3128 = vld [vmem:[#allocation2 + $0xf6] sm:$0xff]
        %v3129 = vld [vmem:[#allocation2 + $0xfe] sm:$0xff]
        %v3130 = vpack.c.bf16 %v3121, %v3120
        %v3131 = vpack.c.bf16 %v3123, %v3122
        %v3132 = vpack.c.bf16 %v3125, %v3124
        %v3133 = vpack.c.bf16 %v3127, %v3126
        %v3134 = vpack.c.bf16 %v3129, %v3128
        %v3136 = vsel %vm378, %v3130, 0
        %v3139 = vsel %vm378, %v3131, 0
        %v3142 = vsel %vm378, %v3132, 0
        %v3145 = vsel %vm378, %v3133, 0
        %v3148 = vsel %vm378, %v3134, 0
        %3150 = vmatprep.subr.bf16.mxu0 0
        %3151 = vmatpush1.bf16.msra.mxu0 %v1085
        %3152 = vmatprep.subr.bf16.mxu0 0
        %3153 = vmatpush1.bf16.msra.mxu0 0
        %3154 = vmatprep.subr.bf16.mxu0 0
        %3155 = vmatpush1.bf16.msra.mxu0 0
        %3156 = vmatprep.subr.bf16.mxu0 0
        %3157 = vmatpush1.bf16.msra.mxu0 0
        %3158 = vmatprep.subr.bf16.mxu0 0
        %3159 = vmatpush1.bf16.msra.mxu0 0
        %3160 = vmatprep.subr.bf16.mxu0 0
        %3161 = vmatpush1.bf16.msra.mxu0 0
        %3162 = vmatprep.subr.bf16.mxu0 0
        %3163 = vmatpush1.bf16.msra.mxu0 0
        %3164 = vmatprep.subr.bf16.mxu0 0
        %3165 = vmatpush1.bf16.msra.mxu0 0
        %3166 = vmatprep.subr.bf16.mxu0 0
        %3167 = vmatpush1.bf16.msra.mxu0 0
        %3168 = vmatprep.subr.bf16.mxu0 0
        %3169 = vmatpush1.bf16.msra.mxu0 0
        %3170 = vmatprep.subr.bf16.mxu0 0
        %3171 = vmatpush1.bf16.msra.mxu0 0
        %3172 = vmatprep.subr.bf16.mxu0 0
        %3173 = vmatpush1.bf16.msra.mxu0 0
        %3174 = vmatprep.subr.bf16.mxu0 0
        %3175 = vmatpush1.bf16.msra.mxu0 0
        %3176 = vmatprep.subr.bf16.mxu0 0
        %3177 = vmatpush1.bf16.msra.mxu0 0
        %3178 = vmatprep.subr.bf16.mxu0 0
        %3179 = vmatpush1.bf16.msra.mxu0 0
        %3180 = vmatprep.subr.bf16.mxu0 0
        %3181 = vmatpush1.bf16.msra.mxu0 0
        %3182 = vmatprep.mubr.bf16.mxu0 0
        %3183 = vmatmul.mubr.bf16.gmra.mrb[0].mxu0 %v3136
        %v3184 = vpop.f32.mrb[0].mxu0
        %v3185 = vadd.f32 0.0, %v3184
        %v3186 = vpop.f32.mrb[0].mxu0
        %v3187 = vpop.f32.mrb[0].mxu0
        %v3188 = vadd.f32 0.0, %v3187
        %v3189 = vpop.f32.mrb[0].mxu0
        %3190 = vmatprep.mubr.bf16.mxu0 0
        %3191 = vmatmul.mubr.bf16.gmra.mrb[0].mxu0 %v3139
        %v3192 = vpop.f32.mrb[0].mxu0
        %v3193 = vadd.f32 0.0, %v3192
        %v3194 = vpop.f32.mrb[0].mxu0
        %v3195 = vpop.f32.mrb[0].mxu0
        %v3196 = vadd.f32 0.0, %v3195
        %v3197 = vpop.f32.mrb[0].mxu0
        %3198 = vmatprep.mubr.bf16.mxu0 0
        %3199 = vmatmul.mubr.bf16.gmra.mrb[0].mxu0 %v3142
        %v3200 = vpop.f32.mrb[0].mxu0
        %v3201 = vadd.f32 0.0, %v3200
        %v3202 = vpop.f32.mrb[0].mxu0
        %v3203 = vpop.f32.mrb[0].mxu0
        %v3204 = vadd.f32 0.0, %v3203
        %v3205 = vpop.f32.mrb[0].mxu0
        %3206 = vmatprep.mubr.bf16.mxu0 0
        %3207 = vmatmul.mubr.bf16.gmra.mrb[0].mxu0 %v3145
        %v3208 = vpop.f32.mrb[0].mxu0
        %v3209 = vadd.f32 0.0, %v3208
        %v3210 = vpop.f32.mrb[0].mxu0
        %v3211 = vpop.f32.mrb[0].mxu0
        %v3212 = vadd.f32 0.0, %v3211
        %v3213 = vpop.f32.mrb[0].mxu0
        %3214 = vmatprep.mubr.bf16.mxu0 0
        %3215 = vmatmul.mubr.bf16.gmra.mrb[0].mxu0 %v3148
        %v3216 = vpop.f32.mrb[0].mxu0
        %v3217 = vadd.f32 0.0, %v3216
        %v3218 = vpop.f32.mrb[0].mxu0
        %v3219 = vpop.f32.mrb[0].mxu0
        %v3220 = vadd.f32 0.0, %v3219
        %v3221 = vpop.f32.mrb[0].mxu0
        %3222 = vdwg.mxu0
        %v3223 = vadd.f32 %v3110, %v3185
        %v3224 = vadd.f32 %v3111, %v3188
        %v3225 = vadd.f32 %v3112, %v3193
        %v3226 = vadd.f32 %v3113, %v3196
        %v3227 = vadd.f32 %v3114, %v3201
        %v3228 = vadd.f32 %v3115, %v3204
        %v3229 = vadd.f32 %v3116, %v3209
        %v3230 = vadd.f32 %v3117, %v3212
        %v3231 = vadd.f32 %v3118, %v3217
        %v3232 = vadd.f32 %v3119, %v3220
        %v3233 = vld [vmem:[#allocation2 + $0xc8] sm:$0xff]
        %v3234 = vld [vmem:[#allocation2 + $0xd0] sm:$0xff]
        %v3235 = vld [vmem:[#allocation2 + $0xd8] sm:$0xff]
        %v3236 = vld [vmem:[#allocation2 + $0xe0] sm:$0xff]
        %v3237 = vld [vmem:[#allocation2 + $0xe8] sm:$0xff]
        %v3238 = vld [vmem:[#allocation2 + $0xf0] sm:$0xff]
        %v3239 = vld [vmem:[#allocation2 + $0xf8] sm:$0xff]
        %v3240 = vld [vmem:[#allocation2 + $0x100] sm:$0xff]
        %v3241 = vld [vmem:[#allocation2 + $0x108] sm:$0xff]
        %v3242 = vld [vmem:[#allocation2 + $0x110] sm:$0xff]
        %v3243 = vpack.c.bf16 %v3234, %v3233
        %v3244 = vpack.c.bf16 %v3236, %v3235
        %v3245 = vpack.c.bf16 %v3238, %v3237
        %v3246 = vpack.c.bf16 %v3240, %v3239
        %v3247 = vpack.c.bf16 %v3242, %v3241
        %v3249 = vsel %vm378, %v3243, 0
        %v3252 = vsel %vm378, %v3244, 0
        %v3255 = vsel %vm378, %v3245, 0
        %v3258 = vsel %vm378, %v3246, 0
        %v3261 = vsel %vm378, %v3247, 0
        %3263 = vmatprep.subr.bf16.mxu0 0
        %3264 = vmatpush1.bf16.msra.mxu0 %v1201
        %3265 = vmatprep.subr.bf16.mxu0 0
        %3266 = vmatpush1.bf16.msra.mxu0 0
        %3267 = vmatprep.subr.bf16.mxu0 0
        %3268 = vmatpush1.bf16.msra.mxu0 0
        %3269 = vmatprep.subr.bf16.mxu0 0
        %3270 = vmatpush1.bf16.msra.mxu0 0
        %3271 = vmatprep.subr.bf16.mxu0 0
        %3272 = vmatpush1.bf16.msra.mxu0 0
        %3273 = vmatprep.subr.bf16.mxu0 0
        %3274 = vmatpush1.bf16.msra.mxu0 0
        %3275 = vmatprep.subr.bf16.mxu0 0
        %3276 = vmatpush1.bf16.msra.mxu0 0
        %3277 = vmatprep.subr.bf16.mxu0 0
        %3278 = vmatpush1.bf16.msra.mxu0 0
        %3279 = vmatprep.subr.bf16.mxu0 0
        %3280 = vmatpush1.bf16.msra.mxu0 0
        %3281 = vmatprep.subr.bf16.mxu0 0
        %3282 = vmatpush1.bf16.msra.mxu0 0
        %3283 = vmatprep.subr.bf16.mxu0 0
        %3284 = vmatpush1.bf16.msra.mxu0 0
        %3285 = vmatprep.subr.bf16.mxu0 0
        %3286 = vmatpush1.bf16.msra.mxu0 0
        %3287 = vmatprep.subr.bf16.mxu0 0
        %3288 = vmatpush1.bf16.msra.mxu0 0
        %3289 = vmatprep.subr.bf16.mxu0 0
        %3290 = vmatpush1.bf16.msra.mxu0 0
        %3291 = vmatprep.subr.bf16.mxu0 0
        %3292 = vmatpush1.bf16.msra.mxu0 0
        %3293 = vmatprep.subr.bf16.mxu0 0
        %3294 = vmatpush1.bf16.msra.mxu0 0
        %3295 = vmatprep.mubr.bf16.mxu0 0
        %3296 = vmatmul.mubr.bf16.gmra.mrb[0].mxu0 %v3249
        %v3297 = vpop.f32.mrb[0].mxu0
        %v3298 = vadd.f32 0.0, %v3297
        %v3299 = vpop.f32.mrb[0].mxu0
        %v3300 = vpop.f32.mrb[0].mxu0
        %v3301 = vadd.f32 0.0, %v3300
        %v3302 = vpop.f32.mrb[0].mxu0
        %3303 = vmatprep.mubr.bf16.mxu0 0
        %3304 = vmatmul.mubr.bf16.gmra.mrb[0].mxu0 %v3252
        %v3305 = vpop.f32.mrb[0].mxu0
        %v3306 = vadd.f32 0.0, %v3305
        %v3307 = vpop.f32.mrb[0].mxu0
        %v3308 = vpop.f32.mrb[0].mxu0
        %v3309 = vadd.f32 0.0, %v3308
        %v3310 = vpop.f32.mrb[0].mxu0
        %3311 = vmatprep.mubr.bf16.mxu0 0
        %3312 = vmatmul.mubr.bf16.gmra.mrb[0].mxu0 %v3255
        %v3313 = vpop.f32.mrb[0].mxu0
        %v3314 = vadd.f32 0.0, %v3313
        %v3315 = vpop.f32.mrb[0].mxu0
        %v3316 = vpop.f32.mrb[0].mxu0
        %v3317 = vadd.f32 0.0, %v3316
        %v3318 = vpop.f32.mrb[0].mxu0
        %3319 = vmatprep.mubr.bf16.mxu0 0
        %3320 = vmatmul.mubr.bf16.gmra.mrb[0].mxu0 %v3258
        %v3321 = vpop.f32.mrb[0].mxu0
        %v3322 = vadd.f32 0.0, %v3321
        %v3323 = vpop.f32.mrb[0].mxu0
        %v3324 = vpop.f32.mrb[0].mxu0
        %v3325 = vadd.f32 0.0, %v3324
        %v3326 = vpop.f32.mrb[0].mxu0
        %3327 = vmatprep.mubr.bf16.mxu0 0
        %3328 = vmatmul.mubr.bf16.gmra.mrb[0].mxu0 %v3261
        %v3329 = vpop.f32.mrb[0].mxu0
        %v3330 = vadd.f32 0.0, %v3329
        %v3331 = vpop.f32.mrb[0].mxu0
        %v3332 = vpop.f32.mrb[0].mxu0
        %v3333 = vadd.f32 0.0, %v3332
        %v3334 = vpop.f32.mrb[0].mxu0
        %3335 = vdwg.mxu0
        %v3336 = vadd.f32 %v3223, %v3298
        %v3337 = vadd.f32 %v3224, %v3301
        %v3338 = vadd.f32 %v3225, %v3306
        %v3339 = vadd.f32 %v3226, %v3309
        %v3340 = vadd.f32 %v3227, %v3314
        %v3341 = vadd.f32 %v3228, %v3317
        %v3342 = vadd.f32 %v3229, %v3322
        %v3343 = vadd.f32 %v3230, %v3325
        %v3344 = vadd.f32 %v3231, %v3330
        %v3345 = vadd.f32 %v3232, %v3333
        %v3346 = vld [vmem:[#allocation2 + $0xc9] sm:$0xff]
        %v3347 = vld [vmem:[#allocation2 + $0xd1] sm:$0xff]
        %v3348 = vld [vmem:[#allocation2 + $0xd9] sm:$0xff]
        %v3349 = vld [vmem:[#allocation2 + $0xe1] sm:$0xff]
        %v3350 = vld [vmem:[#allocation2 + $0xe9] sm:$0xff]
        %v3351 = vld [vmem:[#allocation2 + $0xf1] sm:$0xff]
        %v3352 = vld [vmem:[#allocation2 + $0xf9] sm:$0xff]
        %v3353 = vld [vmem:[#allocation2 + $0x101] sm:$0xff]
        %v3354 = vld [vmem:[#allocation2 + $0x109] sm:$0xff]
        %v3355 = vld [vmem:[#allocation2 + $0x111] sm:$0xff]
        %v3356 = vpack.c.bf16 %v3347, %v3346
        %v3357 = vpack.c.bf16 %v3349, %v3348
        %v3358 = vpack.c.bf16 %v3351, %v3350
        %v3359 = vpack.c.bf16 %v3353, %v3352
        %v3360 = vpack.c.bf16 %v3355, %v3354
        %v3362 = vsel %vm378, %v3356, 0
        %v3365 = vsel %vm378, %v3357, 0
        %v3368 = vsel %vm378, %v3358, 0
        %v3371 = vsel %vm378, %v3359, 0
        %v3374 = vsel %vm378, %v3360, 0
        %3376 = vmatprep.subr.bf16.mxu0 0
        %3377 = vmatpush1.bf16.msra.mxu0 %v1317
        %3378 = vmatprep.subr.bf16.mxu0 0
        %3379 = vmatpush1.bf16.msra.mxu0 0
        %3380 = vmatprep.subr.bf16.mxu0 0
        %3381 = vmatpush1.bf16.msra.mxu0 0
        %3382 = vmatprep.subr.bf16.mxu0 0
        %3383 = vmatpush1.bf16.msra.mxu0 0
        %3384 = vmatprep.subr.bf16.mxu0 0
        %3385 = vmatpush1.bf16.msra.mxu0 0
        %3386 = vmatprep.subr.bf16.mxu0 0
        %3387 = vmatpush1.bf16.msra.mxu0 0
        %3388 = vmatprep.subr.bf16.mxu0 0
        %3389 = vmatpush1.bf16.msra.mxu0 0
        %3390 = vmatprep.subr.bf16.mxu0 0
        %3391 = vmatpush1.bf16.msra.mxu0 0
        %3392 = vmatprep.subr.bf16.mxu0 0
        %3393 = vmatpush1.bf16.msra.mxu0 0
        %3394 = vmatprep.subr.bf16.mxu0 0
        %3395 = vmatpush1.bf16.msra.mxu0 0
        %3396 = vmatprep.subr.bf16.mxu0 0
        %3397 = vmatpush1.bf16.msra.mxu0 0
        %3398 = vmatprep.subr.bf16.mxu0 0
        %3399 = vmatpush1.bf16.msra.mxu0 0
        %3400 = vmatprep.subr.bf16.mxu0 0
        %3401 = vmatpush1.bf16.msra.mxu0 0
        %3402 = vmatprep.subr.bf16.mxu0 0
        %3403 = vmatpush1.bf16.msra.mxu0 0
        %3404 = vmatprep.subr.bf16.mxu0 0
        %3405 = vmatpush1.bf16.msra.mxu0 0
        %3406 = vmatprep.subr.bf16.mxu0 0
        %3407 = vmatpush1.bf16.msra.mxu0 0
        %3408 = vmatprep.mubr.bf16.mxu0 0
        %3409 = vmatmul.mubr.bf16.gmra.mrb[0].mxu0 %v3362
        %v3410 = vpop.f32.mrb[0].mxu0
        %v3411 = vadd.f32 0.0, %v3410
        %v3412 = vpop.f32.mrb[0].mxu0
        %v3413 = vpop.f32.mrb[0].mxu0
        %v3414 = vadd.f32 0.0, %v3413
        %v3415 = vpop.f32.mrb[0].mxu0
        %3416 = vmatprep.mubr.bf16.mxu0 0
        %3417 = vmatmul.mubr.bf16.gmra.mrb[0].mxu0 %v3365
        %v3418 = vpop.f32.mrb[0].mxu0
        %v3419 = vadd.f32 0.0, %v3418
        %v3420 = vpop.f32.mrb[0].mxu0
        %v3421 = vpop.f32.mrb[0].mxu0
        %v3422 = vadd.f32 0.0, %v3421
        %v3423 = vpop.f32.mrb[0].mxu0
        %3424 = vmatprep.mubr.bf16.mxu0 0
        %3425 = vmatmul.mubr.bf16.gmra.mrb[0].mxu0 %v3368
        %v3426 = vpop.f32.mrb[0].mxu0
        %v3427 = vadd.f32 0.0, %v3426
        %v3428 = vpop.f32.mrb[0].mxu0
        %v3429 = vpop.f32.mrb[0].mxu0
        %v3430 = vadd.f32 0.0, %v3429
        %v3431 = vpop.f32.mrb[0].mxu0
        %3432 = vmatprep.mubr.bf16.mxu0 0
        %3433 = vmatmul.mubr.bf16.gmra.mrb[0].mxu0 %v3371
        %v3434 = vpop.f32.mrb[0].mxu0
        %v3435 = vadd.f32 0.0, %v3434
        %v3436 = vpop.f32.mrb[0].mxu0
        %v3437 = vpop.f32.mrb[0].mxu0
        %v3438 = vadd.f32 0.0, %v3437
        %v3439 = vpop.f32.mrb[0].mxu0
        %3440 = vmatprep.mubr.bf16.mxu0 0
        %3441 = vmatmul.mubr.bf16.gmra.mrb[0].mxu0 %v3374
        %v3442 = vpop.f32.mrb[0].mxu0
        %v3443 = vadd.f32 0.0, %v3442
        %v3444 = vpop.f32.mrb[0].mxu0
        %v3445 = vpop.f32.mrb[0].mxu0
        %v3446 = vadd.f32 0.0, %v3445
        %v3447 = vpop.f32.mrb[0].mxu0
        %3448 = vdwg.mxu0
        %v3449 = vadd.f32 %v3336, %v3411
        %v3450 = vadd.f32 %v3337, %v3414
        %v3451 = vadd.f32 %v3338, %v3419
        %v3452 = vadd.f32 %v3339, %v3422
        %v3453 = vadd.f32 %v3340, %v3427
        %v3454 = vadd.f32 %v3341, %v3430
        %v3455 = vadd.f32 %v3342, %v3435
        %v3456 = vadd.f32 %v3343, %v3438
        %v3457 = vadd.f32 %v3344, %v3443
        %v3458 = vadd.f32 %v3345, %v3446
        %v3459 = vld [vmem:[#allocation2 + $0xca] sm:$0xff]
        %v3460 = vld [vmem:[#allocation2 + $0xd2] sm:$0xff]
        %v3461 = vld [vmem:[#allocation2 + $0xda] sm:$0xff]
        %v3462 = vld [vmem:[#allocation2 + $0xe2] sm:$0xff]
        %v3463 = vld [vmem:[#allocation2 + $0xea] sm:$0xff]
        %v3464 = vld [vmem:[#allocation2 + $0xf2] sm:$0xff]
        %v3465 = vld [vmem:[#allocation2 + $0xfa] sm:$0xff]
        %v3466 = vld [vmem:[#allocation2 + $0x102] sm:$0xff]
        %v3467 = vld [vmem:[#allocation2 + $0x10a] sm:$0xff]
        %v3468 = vld [vmem:[#allocation2 + $0x112] sm:$0xff]
        %v3469 = vpack.c.bf16 %v3460, %v3459
        %v3470 = vpack.c.bf16 %v3462, %v3461
        %v3471 = vpack.c.bf16 %v3464, %v3463
        %v3472 = vpack.c.bf16 %v3466, %v3465
        %v3473 = vpack.c.bf16 %v3468, %v3467
        %v3475 = vsel %vm378, %v3469, 0
        %v3478 = vsel %vm378, %v3470, 0
        %v3481 = vsel %vm378, %v3471, 0
        %v3484 = vsel %vm378, %v3472, 0
        %v3487 = vsel %vm378, %v3473, 0
        %3489 = vmatprep.subr.bf16.mxu0 0
        %3490 = vmatpush1.bf16.msra.mxu0 %v1433
        %3491 = vmatprep.subr.bf16.mxu0 0
        %3492 = vmatpush1.bf16.msra.mxu0 0
        %3493 = vmatprep.subr.bf16.mxu0 0
        %3494 = vmatpush1.bf16.msra.mxu0 0
        %3495 = vmatprep.subr.bf16.mxu0 0
        %3496 = vmatpush1.bf16.msra.mxu0 0
        %3497 = vmatprep.subr.bf16.mxu0 0
        %3498 = vmatpush1.bf16.msra.mxu0 0
        %3499 = vmatprep.subr.bf16.mxu0 0
        %3500 = vmatpush1.bf16.msra.mxu0 0
        %3501 = vmatprep.subr.bf16.mxu0 0
        %3502 = vmatpush1.bf16.msra.mxu0 0
        %3503 = vmatprep.subr.bf16.mxu0 0
        %3504 = vmatpush1.bf16.msra.mxu0 0
        %3505 = vmatprep.subr.bf16.mxu0 0
        %3506 = vmatpush1.bf16.msra.mxu0 0
        %3507 = vmatprep.subr.bf16.mxu0 0
        %3508 = vmatpush1.bf16.msra.mxu0 0
        %3509 = vmatprep.subr.bf16.mxu0 0
        %3510 = vmatpush1.bf16.msra.mxu0 0
        %3511 = vmatprep.subr.bf16.mxu0 0
        %3512 = vmatpush1.bf16.msra.mxu0 0
        %3513 = vmatprep.subr.bf16.mxu0 0
        %3514 = vmatpush1.bf16.msra.mxu0 0
        %3515 = vmatprep.subr.bf16.mxu0 0
        %3516 = vmatpush1.bf16.msra.mxu0 0
        %3517 = vmatprep.subr.bf16.mxu0 0
        %3518 = vmatpush1.bf16.msra.mxu0 0
        %3519 = vmatprep.subr.bf16.mxu0 0
        %3520 = vmatpush1.bf16.msra.mxu0 0
        %3521 = vmatprep.mubr.bf16.mxu0 0
        %3522 = vmatmul.mubr.bf16.gmra.mrb[0].mxu0 %v3475
        %v3523 = vpop.f32.mrb[0].mxu0
        %v3524 = vadd.f32 0.0, %v3523
        %v3525 = vpop.f32.mrb[0].mxu0
        %v3526 = vpop.f32.mrb[0].mxu0
        %v3527 = vadd.f32 0.0, %v3526
        %v3528 = vpop.f32.mrb[0].mxu0
        %3529 = vmatprep.mubr.bf16.mxu0 0
        %3530 = vmatmul.mubr.bf16.gmra.mrb[0].mxu0 %v3478
        %v3531 = vpop.f32.mrb[0].mxu0
        %v3532 = vadd.f32 0.0, %v3531
        %v3533 = vpop.f32.mrb[0].mxu0
        %v3534 = vpop.f32.mrb[0].mxu0
        %v3535 = vadd.f32 0.0, %v3534
        %v3536 = vpop.f32.mrb[0].mxu0
        %3537 = vmatprep.mubr.bf16.mxu0 0
        %3538 = vmatmul.mubr.bf16.gmra.mrb[0].mxu0 %v3481
        %v3539 = vpop.f32.mrb[0].mxu0
        %v3540 = vadd.f32 0.0, %v3539
        %v3541 = vpop.f32.mrb[0].mxu0
        %v3542 = vpop.f32.mrb[0].mxu0
        %v3543 = vadd.f32 0.0, %v3542
        %v3544 = vpop.f32.mrb[0].mxu0
        %3545 = vmatprep.mubr.bf16.mxu0 0
        %3546 = vmatmul.mubr.bf16.gmra.mrb[0].mxu0 %v3484
        %v3547 = vpop.f32.mrb[0].mxu0
        %v3548 = vadd.f32 0.0, %v3547
        %v3549 = vpop.f32.mrb[0].mxu0
        %v3550 = vpop.f32.mrb[0].mxu0
        %v3551 = vadd.f32 0.0, %v3550
        %v3552 = vpop.f32.mrb[0].mxu0
        %3553 = vmatprep.mubr.bf16.mxu0 0
        %3554 = vmatmul.mubr.bf16.gmra.mrb[0].mxu0 %v3487
        %v3555 = vpop.f32.mrb[0].mxu0
        %v3556 = vadd.f32 0.0, %v3555
        %v3557 = vpop.f32.mrb[0].mxu0
        %v3558 = vpop.f32.mrb[0].mxu0
        %v3559 = vadd.f32 0.0, %v3558
        %v3560 = vpop.f32.mrb[0].mxu0
        %3561 = vdwg.mxu0
        %v3562 = vadd.f32 %v3449, %v3524
        %v3563 = vadd.f32 %v3450, %v3527
        %v3564 = vadd.f32 %v3451, %v3532
        %v3565 = vadd.f32 %v3452, %v3535
        %v3566 = vadd.f32 %v3453, %v3540
        %v3567 = vadd.f32 %v3454, %v3543
        %v3568 = vadd.f32 %v3455, %v3548
        %v3569 = vadd.f32 %v3456, %v3551
        %v3570 = vadd.f32 %v3457, %v3556
        %v3571 = vadd.f32 %v3458, %v3559
        %3572 = vst [vmem:[%s263 + $0xa0] sm:$0xff] %v3562
        %3573 = vst [vmem:[%s263 + $0xa8] sm:$0xff] %v3563
        %3574 = vst [vmem:[%s263 + $0xb0] sm:$0xff] %v3564
        %3575 = vst [vmem:[%s263 + $0xb8] sm:$0xff] %v3565
        %3576 = vst [vmem:[%s263 + $0xc0] sm:$0xff] %v3566
        %3577 = vst [vmem:[%s263 + $0xc8] sm:$0xff] %v3567
        %3578 = vst [vmem:[%s263 + $0xd0] sm:$0xff] %v3568
        %3579 = vst [vmem:[%s263 + $0xd8] sm:$0xff] %v3569
        %3580 = vst [vmem:[%s263 + $0xe0] sm:$0xff] %v3570
        %3581 = vst [vmem:[%s263 + $0xe8] sm:$0xff] %v3571
        %v3582 = vld [vmem:[#allocation2 + $0xf0] sm:$0xff]
        %v3583 = vld [vmem:[#allocation2 + $0xf8] sm:$0xff]
        %v3584 = vld [vmem:[#allocation2 + $0x100] sm:$0xff]
        %v3585 = vld [vmem:[#allocation2 + $0x108] sm:$0xff]
        %v3586 = vld [vmem:[#allocation2 + $0x110] sm:$0xff]
        %v3587 = vld [vmem:[#allocation2 + $0x118] sm:$0xff]
        %v3588 = vld [vmem:[#allocation2 + $0x120] sm:$0xff]
        %v3589 = vld [vmem:[#allocation2 + $0x128] sm:$0xff]
        %v3590 = vld [vmem:[#allocation2 + $0x130] sm:$0xff]
        %v3591 = vld [vmem:[#allocation2 + $0x138] sm:$0xff]
        %v3592 = vpack.c.bf16 %v3583, %v3582
        %v3593 = vpack.c.bf16 %v3585, %v3584
        %v3594 = vpack.c.bf16 %v3587, %v3586
        %v3595 = vpack.c.bf16 %v3589, %v3588
        %v3596 = vpack.c.bf16 %v3591, %v3590
        %v3598 = vsel %vm378, %v3592, 0
        %v3601 = vsel %vm378, %v3593, 0
        %v3604 = vsel %vm378, %v3594, 0
        %v3607 = vsel %vm378, %v3595, 0
        %v3610 = vsel %vm378, %v3596, 0
        %3612 = vmatprep.subr.bf16.mxu0 0
        %3613 = vmatpush1.bf16.msra.mxu0 %v499
        %3614 = vmatprep.subr.bf16.mxu0 0
        %3615 = vmatpush1.bf16.msra.mxu0 0
        %3616 = vmatprep.subr.bf16.mxu0 0
        %3617 = vmatpush1.bf16.msra.mxu0 0
        %3618 = vmatprep.subr.bf16.mxu0 0
        %3619 = vmatpush1.bf16.msra.mxu0 0
        %3620 = vmatprep.subr.bf16.mxu0 0
        %3621 = vmatpush1.bf16.msra.mxu0 0
        %3622 = vmatprep.subr.bf16.mxu0 0
        %3623 = vmatpush1.bf16.msra.mxu0 0
        %3624 = vmatprep.subr.bf16.mxu0 0
        %3625 = vmatpush1.bf16.msra.mxu0 0
        %3626 = vmatprep.subr.bf16.mxu0 0
        %3627 = vmatpush1.bf16.msra.mxu0 0
        %3628 = vmatprep.subr.bf16.mxu0 0
        %3629 = vmatpush1.bf16.msra.mxu0 0
        %3630 = vmatprep.subr.bf16.mxu0 0
        %3631 = vmatpush1.bf16.msra.mxu0 0
        %3632 = vmatprep.subr.bf16.mxu0 0
        %3633 = vmatpush1.bf16.msra.mxu0 0
        %3634 = vmatprep.subr.bf16.mxu0 0
        %3635 = vmatpush1.bf16.msra.mxu0 0
        %3636 = vmatprep.subr.bf16.mxu0 0
        %3637 = vmatpush1.bf16.msra.mxu0 0
        %3638 = vmatprep.subr.bf16.mxu0 0
        %3639 = vmatpush1.bf16.msra.mxu0 0
        %3640 = vmatprep.subr.bf16.mxu0 0
        %3641 = vmatpush1.bf16.msra.mxu0 0
        %3642 = vmatprep.subr.bf16.mxu0 0
        %3643 = vmatpush1.bf16.msra.mxu0 0
        %3644 = vmatprep.mubr.bf16.mxu0 0
        %3645 = vmatmul.mubr.bf16.gmra.mrb[0].mxu0 %v3598
        %v3646 = vpop.f32.mrb[0].mxu0
        %v3647 = vadd.f32 0.0, %v3646
        %v3648 = vpop.f32.mrb[0].mxu0
        %v3649 = vpop.f32.mrb[0].mxu0
        %v3650 = vadd.f32 0.0, %v3649
        %v3651 = vpop.f32.mrb[0].mxu0
        %3652 = vmatprep.mubr.bf16.mxu0 0
        %3653 = vmatmul.mubr.bf16.gmra.mrb[0].mxu0 %v3601
        %v3654 = vpop.f32.mrb[0].mxu0
        %v3655 = vadd.f32 0.0, %v3654
        %v3656 = vpop.f32.mrb[0].mxu0
        %v3657 = vpop.f32.mrb[0].mxu0
        %v3658 = vadd.f32 0.0, %v3657
        %v3659 = vpop.f32.mrb[0].mxu0
        %3660 = vmatprep.mubr.bf16.mxu0 0
        %3661 = vmatmul.mubr.bf16.gmra.mrb[0].mxu0 %v3604
        %v3662 = vpop.f32.mrb[0].mxu0
        %v3663 = vadd.f32 0.0, %v3662
        %v3664 = vpop.f32.mrb[0].mxu0
        %v3665 = vpop.f32.mrb[0].mxu0
        %v3666 = vadd.f32 0.0, %v3665
        %v3667 = vpop.f32.mrb[0].mxu0
        %3668 = vmatprep.mubr.bf16.mxu0 0
        %3669 = vmatmul.mubr.bf16.gmra.mrb[0].mxu0 %v3607
        %v3670 = vpop.f32.mrb[0].mxu0
        %v3671 = vadd.f32 0.0, %v3670
        %v3672 = vpop.f32.mrb[0].mxu0
        %v3673 = vpop.f32.mrb[0].mxu0
        %v3674 = vadd.f32 0.0, %v3673
        %v3675 = vpop.f32.mrb[0].mxu0
        %3676 = vmatprep.mubr.bf16.mxu0 0
        %3677 = vmatmul.mubr.bf16.gmra.mrb[0].mxu0 %v3610
        %v3678 = vpop.f32.mrb[0].mxu0
        %v3679 = vadd.f32 0.0, %v3678
        %v3680 = vpop.f32.mrb[0].mxu0
        %v3681 = vpop.f32.mrb[0].mxu0
        %v3682 = vadd.f32 0.0, %v3681
        %v3683 = vpop.f32.mrb[0].mxu0
        %3684 = vdwg.mxu0
        %v3685 = vadd.f32 %v578, %v3647
        %v3686 = vadd.f32 %v578, %v3650
        %v3687 = vadd.f32 %v578, %v3655
        %v3688 = vadd.f32 %v578, %v3658
        %v3689 = vadd.f32 %v578, %v3663
        %v3690 = vadd.f32 %v578, %v3666
        %v3691 = vadd.f32 %v578, %v3671
        %v3692 = vadd.f32 %v578, %v3674
        %v3693 = vadd.f32 %v578, %v3679
        %v3694 = vadd.f32 %v578, %v3682
        %v3695 = vld [vmem:[#allocation2 + $0xf1] sm:$0xff]
        %v3696 = vld [vmem:[#allocation2 + $0xf9] sm:$0xff]
        %v3697 = vld [vmem:[#allocation2 + $0x101] sm:$0xff]
        %v3698 = vld [vmem:[#allocation2 + $0x109] sm:$0xff]
        %v3699 = vld [vmem:[#allocation2 + $0x111] sm:$0xff]
        %v3700 = vld [vmem:[#allocation2 + $0x119] sm:$0xff]
        %v3701 = vld [vmem:[#allocation2 + $0x121] sm:$0xff]
        %v3702 = vld [vmem:[#allocation2 + $0x129] sm:$0xff]
        %v3703 = vld [vmem:[#allocation2 + $0x131] sm:$0xff]
        %v3704 = vld [vmem:[#allocation2 + $0x139] sm:$0xff]
        %v3705 = vpack.c.bf16 %v3696, %v3695
        %v3706 = vpack.c.bf16 %v3698, %v3697
        %v3707 = vpack.c.bf16 %v3700, %v3699
        %v3708 = vpack.c.bf16 %v3702, %v3701
        %v3709 = vpack.c.bf16 %v3704, %v3703
        %v3711 = vsel %vm378, %v3705, 0
        %v3714 = vsel %vm378, %v3706, 0
        %v3717 = vsel %vm378, %v3707, 0
        %v3720 = vsel %vm378, %v3708, 0
        %v3723 = vsel %vm378, %v3709, 0
        %3725 = vmatprep.subr.bf16.mxu0 0
        %3726 = vmatpush1.bf16.msra.mxu0 %v621
        %3727 = vmatprep.subr.bf16.mxu0 0
        %3728 = vmatpush1.bf16.msra.mxu0 0
        %3729 = vmatprep.subr.bf16.mxu0 0
        %3730 = vmatpush1.bf16.msra.mxu0 0
        %3731 = vmatprep.subr.bf16.mxu0 0
        %3732 = vmatpush1.bf16.msra.mxu0 0
        %3733 = vmatprep.subr.bf16.mxu0 0
        %3734 = vmatpush1.bf16.msra.mxu0 0
        %3735 = vmatprep.subr.bf16.mxu0 0
        %3736 = vmatpush1.bf16.msra.mxu0 0
        %3737 = vmatprep.subr.bf16.mxu0 0
        %3738 = vmatpush1.bf16.msra.mxu0 0
        %3739 = vmatprep.subr.bf16.mxu0 0
        %3740 = vmatpush1.bf16.msra.mxu0 0
        %3741 = vmatprep.subr.bf16.mxu0 0
        %3742 = vmatpush1.bf16.msra.mxu0 0
        %3743 = vmatprep.subr.bf16.mxu0 0
        %3744 = vmatpush1.bf16.msra.mxu0 0
        %3745 = vmatprep.subr.bf16.mxu0 0
        %3746 = vmatpush1.bf16.msra.mxu0 0
        %3747 = vmatprep.subr.bf16.mxu0 0
        %3748 = vmatpush1.bf16.msra.mxu0 0
        %3749 = vmatprep.subr.bf16.mxu0 0
        %3750 = vmatpush1.bf16.msra.mxu0 0
        %3751 = vmatprep.subr.bf16.mxu0 0
        %3752 = vmatpush1.bf16.msra.mxu0 0
        %3753 = vmatprep.subr.bf16.mxu0 0
        %3754 = vmatpush1.bf16.msra.mxu0 0
        %3755 = vmatprep.subr.bf16.mxu0 0
        %3756 = vmatpush1.bf16.msra.mxu0 0
        %3757 = vmatprep.mubr.bf16.mxu0 0
        %3758 = vmatmul.mubr.bf16.gmra.mrb[0].mxu0 %v3711
        %v3759 = vpop.f32.mrb[0].mxu0
        %v3760 = vadd.f32 0.0, %v3759
        %v3761 = vpop.f32.mrb[0].mxu0
        %v3762 = vpop.f32.mrb[0].mxu0
        %v3763 = vadd.f32 0.0, %v3762
        %v3764 = vpop.f32.mrb[0].mxu0
        %3765 = vmatprep.mubr.bf16.mxu0 0
        %3766 = vmatmul.mubr.bf16.gmra.mrb[0].mxu0 %v3714
        %v3767 = vpop.f32.mrb[0].mxu0
        %v3768 = vadd.f32 0.0, %v3767
        %v3769 = vpop.f32.mrb[0].mxu0
        %v3770 = vpop.f32.mrb[0].mxu0
        %v3771 = vadd.f32 0.0, %v3770
        %v3772 = vpop.f32.mrb[0].mxu0
        %3773 = vmatprep.mubr.bf16.mxu0 0
        %3774 = vmatmul.mubr.bf16.gmra.mrb[0].mxu0 %v3717
        %v3775 = vpop.f32.mrb[0].mxu0
        %v3776 = vadd.f32 0.0, %v3775
        %v3777 = vpop.f32.mrb[0].mxu0
        %v3778 = vpop.f32.mrb[0].mxu0
        %v3779 = vadd.f32 0.0, %v3778
        %v3780 = vpop.f32.mrb[0].mxu0
        %3781 = vmatprep.mubr.bf16.mxu0 0
        %3782 = vmatmul.mubr.bf16.gmra.mrb[0].mxu0 %v3720
        %v3783 = vpop.f32.mrb[0].mxu0
        %v3784 = vadd.f32 0.0, %v3783
        %v3785 = vpop.f32.mrb[0].mxu0
        %v3786 = vpop.f32.mrb[0].mxu0
        %v3787 = vadd.f32 0.0, %v3786
        %v3788 = vpop.f32.mrb[0].mxu0
        %3789 = vmatprep.mubr.bf16.mxu0 0
        %3790 = vmatmul.mubr.bf16.gmra.mrb[0].mxu0 %v3723
        %v3791 = vpop.f32.mrb[0].mxu0
        %v3792 = vadd.f32 0.0, %v3791
        %v3793 = vpop.f32.mrb[0].mxu0
        %v3794 = vpop.f32.mrb[0].mxu0
        %v3795 = vadd.f32 0.0, %v3794
        %v3796 = vpop.f32.mrb[0].mxu0
        %3797 = vdwg.mxu0
        %v3798 = vadd.f32 %v3685, %v3760
        %v3799 = vadd.f32 %v3686, %v3763
        %v3800 = vadd.f32 %v3687, %v3768
        %v3801 = vadd.f32 %v3688, %v3771
        %v3802 = vadd.f32 %v3689, %v3776
        %v3803 = vadd.f32 %v3690, %v3779
        %v3804 = vadd.f32 %v3691, %v3784
        %v3805 = vadd.f32 %v3692, %v3787
        %v3806 = vadd.f32 %v3693, %v3792
        %v3807 = vadd.f32 %v3694, %v3795
        %v3808 = vld [vmem:[#allocation2 + $0xf2] sm:$0xff]
        %v3809 = vld [vmem:[#allocation2 + $0xfa] sm:$0xff]
        %v3810 = vld [vmem:[#allocation2 + $0x102] sm:$0xff]
        %v3811 = vld [vmem:[#allocation2 + $0x10a] sm:$0xff]
        %v3812 = vld [vmem:[#allocation2 + $0x112] sm:$0xff]
        %v3813 = vld [vmem:[#allocation2 + $0x11a] sm:$0xff]
        %v3814 = vld [vmem:[#allocation2 + $0x122] sm:$0xff]
        %v3815 = vld [vmem:[#allocation2 + $0x12a] sm:$0xff]
        %v3816 = vld [vmem:[#allocation2 + $0x132] sm:$0xff]
        %v3817 = vld [vmem:[#allocation2 + $0x13a] sm:$0xff]
        %v3818 = vpack.c.bf16 %v3809, %v3808
        %v3819 = vpack.c.bf16 %v3811, %v3810
        %v3820 = vpack.c.bf16 %v3813, %v3812
        %v3821 = vpack.c.bf16 %v3815, %v3814
        %v3822 = vpack.c.bf16 %v3817, %v3816
        %v3824 = vsel %vm378, %v3818, 0
        %v3827 = vsel %vm378, %v3819, 0
        %v3830 = vsel %vm378, %v3820, 0
        %v3833 = vsel %vm378, %v3821, 0
        %v3836 = vsel %vm378, %v3822, 0
        %3838 = vmatprep.subr.bf16.mxu0 0
        %3839 = vmatpush1.bf16.msra.mxu0 %v737
        %3840 = vmatprep.subr.bf16.mxu0 0
        %3841 = vmatpush1.bf16.msra.mxu0 0
        %3842 = vmatprep.subr.bf16.mxu0 0
        %3843 = vmatpush1.bf16.msra.mxu0 0
        %3844 = vmatprep.subr.bf16.mxu0 0
        %3845 = vmatpush1.bf16.msra.mxu0 0
        %3846 = vmatprep.subr.bf16.mxu0 0
        %3847 = vmatpush1.bf16.msra.mxu0 0
        %3848 = vmatprep.subr.bf16.mxu0 0
        %3849 = vmatpush1.bf16.msra.mxu0 0
        %3850 = vmatprep.subr.bf16.mxu0 0
        %3851 = vmatpush1.bf16.msra.mxu0 0
        %3852 = vmatprep.subr.bf16.mxu0 0
        %3853 = vmatpush1.bf16.msra.mxu0 0
        %3854 = vmatprep.subr.bf16.mxu0 0
        %3855 = vmatpush1.bf16.msra.mxu0 0
        %3856 = vmatprep.subr.bf16.mxu0 0
        %3857 = vmatpush1.bf16.msra.mxu0 0
        %3858 = vmatprep.subr.bf16.mxu0 0
        %3859 = vmatpush1.bf16.msra.mxu0 0
        %3860 = vmatprep.subr.bf16.mxu0 0
        %3861 = vmatpush1.bf16.msra.mxu0 0
        %3862 = vmatprep.subr.bf16.mxu0 0
        %3863 = vmatpush1.bf16.msra.mxu0 0
        %3864 = vmatprep.subr.bf16.mxu0 0
        %3865 = vmatpush1.bf16.msra.mxu0 0
        %3866 = vmatprep.subr.bf16.mxu0 0
        %3867 = vmatpush1.bf16.msra.mxu0 0
        %3868 = vmatprep.subr.bf16.mxu0 0
        %3869 = vmatpush1.bf16.msra.mxu0 0
        %3870 = vmatprep.mubr.bf16.mxu0 0
        %3871 = vmatmul.mubr.bf16.gmra.mrb[0].mxu0 %v3824
        %v3872 = vpop.f32.mrb[0].mxu0
        %v3873 = vadd.f32 0.0, %v3872
        %v3874 = vpop.f32.mrb[0].mxu0
        %v3875 = vpop.f32.mrb[0].mxu0
        %v3876 = vadd.f32 0.0, %v3875
        %v3877 = vpop.f32.mrb[0].mxu0
        %3878 = vmatprep.mubr.bf16.mxu0 0
        %3879 = vmatmul.mubr.bf16.gmra.mrb[0].mxu0 %v3827
        %v3880 = vpop.f32.mrb[0].mxu0
        %v3881 = vadd.f32 0.0, %v3880
        %v3882 = vpop.f32.mrb[0].mxu0
        %v3883 = vpop.f32.mrb[0].mxu0
        %v3884 = vadd.f32 0.0, %v3883
        %v3885 = vpop.f32.mrb[0].mxu0
        %3886 = vmatprep.mubr.bf16.mxu0 0
        %3887 = vmatmul.mubr.bf16.gmra.mrb[0].mxu0 %v3830
        %v3888 = vpop.f32.mrb[0].mxu0
        %v3889 = vadd.f32 0.0, %v3888
        %v3890 = vpop.f32.mrb[0].mxu0
        %v3891 = vpop.f32.mrb[0].mxu0
        %v3892 = vadd.f32 0.0, %v3891
        %v3893 = vpop.f32.mrb[0].mxu0
        %3894 = vmatprep.mubr.bf16.mxu0 0
        %3895 = vmatmul.mubr.bf16.gmra.mrb[0].mxu0 %v3833
        %v3896 = vpop.f32.mrb[0].mxu0
        %v3897 = vadd.f32 0.0, %v3896
        %v3898 = vpop.f32.mrb[0].mxu0
        %v3899 = vpop.f32.mrb[0].mxu0
        %v3900 = vadd.f32 0.0, %v3899
        %v3901 = vpop.f32.mrb[0].mxu0
        %3902 = vmatprep.mubr.bf16.mxu0 0
        %3903 = vmatmul.mubr.bf16.gmra.mrb[0].mxu0 %v3836
        %v3904 = vpop.f32.mrb[0].mxu0
        %v3905 = vadd.f32 0.0, %v3904
        %v3906 = vpop.f32.mrb[0].mxu0
        %v3907 = vpop.f32.mrb[0].mxu0
        %v3908 = vadd.f32 0.0, %v3907
        %v3909 = vpop.f32.mrb[0].mxu0
        %3910 = vdwg.mxu0
        %v3911 = vadd.f32 %v3798, %v3873
        %v3912 = vadd.f32 %v3799, %v3876
        %v3913 = vadd.f32 %v3800, %v3881
        %v3914 = vadd.f32 %v3801, %v3884
        %v3915 = vadd.f32 %v3802, %v3889
        %v3916 = vadd.f32 %v3803, %v3892
        %v3917 = vadd.f32 %v3804, %v3897
        %v3918 = vadd.f32 %v3805, %v3900
        %v3919 = vadd.f32 %v3806, %v3905
        %v3920 = vadd.f32 %v3807, %v3908
        %v3921 = vld [vmem:[#allocation2 + $0x104] sm:$0xff]
        %v3922 = vld [vmem:[#allocation2 + $0x10c] sm:$0xff]
        %v3923 = vld [vmem:[#allocation2 + $0x114] sm:$0xff]
        %v3924 = vld [vmem:[#allocation2 + $0x11c] sm:$0xff]
        %v3925 = vld [vmem:[#allocation2 + $0x124] sm:$0xff]
        %v3926 = vld [vmem:[#allocation2 + $0x12c] sm:$0xff]
        %v3927 = vld [vmem:[#allocation2 + $0x134] sm:$0xff]
        %v3928 = vld [vmem:[#allocation2 + $0x13c] sm:$0xff]
        %v3929 = vld [vmem:[#allocation2 + $0x144] sm:$0xff]
        %v3930 = vld [vmem:[#allocation2 + $0x14c] sm:$0xff]
        %v3931 = vpack.c.bf16 %v3922, %v3921
        %v3932 = vpack.c.bf16 %v3924, %v3923
        %v3933 = vpack.c.bf16 %v3926, %v3925
        %v3934 = vpack.c.bf16 %v3928, %v3927
        %v3935 = vpack.c.bf16 %v3930, %v3929
        %v3937 = vsel %vm378, %v3931, 0
        %v3940 = vsel %vm378, %v3932, 0
        %v3943 = vsel %vm378, %v3933, 0
        %v3946 = vsel %vm378, %v3934, 0
        %v3949 = vsel %vm378, %v3935, 0
        %3951 = vmatprep.subr.bf16.mxu0 0
        %3952 = vmatpush1.bf16.msra.mxu0 %v853
        %3953 = vmatprep.subr.bf16.mxu0 0
        %3954 = vmatpush1.bf16.msra.mxu0 0
        %3955 = vmatprep.subr.bf16.mxu0 0
        %3956 = vmatpush1.bf16.msra.mxu0 0
        %3957 = vmatprep.subr.bf16.mxu0 0
        %3958 = vmatpush1.bf16.msra.mxu0 0
        %3959 = vmatprep.subr.bf16.mxu0 0
        %3960 = vmatpush1.bf16.msra.mxu0 0
        %3961 = vmatprep.subr.bf16.mxu0 0
        %3962 = vmatpush1.bf16.msra.mxu0 0
        %3963 = vmatprep.subr.bf16.mxu0 0
        %3964 = vmatpush1.bf16.msra.mxu0 0
        %3965 = vmatprep.subr.bf16.mxu0 0
        %3966 = vmatpush1.bf16.msra.mxu0 0
        %3967 = vmatprep.subr.bf16.mxu0 0
        %3968 = vmatpush1.bf16.msra.mxu0 0
        %3969 = vmatprep.subr.bf16.mxu0 0
        %3970 = vmatpush1.bf16.msra.mxu0 0
        %3971 = vmatprep.subr.bf16.mxu0 0
        %3972 = vmatpush1.bf16.msra.mxu0 0
        %3973 = vmatprep.subr.bf16.mxu0 0
        %3974 = vmatpush1.bf16.msra.mxu0 0
        %3975 = vmatprep.subr.bf16.mxu0 0
        %3976 = vmatpush1.bf16.msra.mxu0 0
        %3977 = vmatprep.subr.bf16.mxu0 0
        %3978 = vmatpush1.bf16.msra.mxu0 0
        %3979 = vmatprep.subr.bf16.mxu0 0
        %3980 = vmatpush1.bf16.msra.mxu0 0
        %3981 = vmatprep.subr.bf16.mxu0 0
        %3982 = vmatpush1.bf16.msra.mxu0 0
        %3983 = vmatprep.mubr.bf16.mxu0 0
        %3984 = vmatmul.mubr.bf16.gmra.mrb[0].mxu0 %v3937
        %v3985 = vpop.f32.mrb[0].mxu0
        %v3986 = vadd.f32 0.0, %v3985
        %v3987 = vpop.f32.mrb[0].mxu0
        %v3988 = vpop.f32.mrb[0].mxu0
        %v3989 = vadd.f32 0.0, %v3988
        %v3990 = vpop.f32.mrb[0].mxu0
        %3991 = vmatprep.mubr.bf16.mxu0 0
        %3992 = vmatmul.mubr.bf16.gmra.mrb[0].mxu0 %v3940
        %v3993 = vpop.f32.mrb[0].mxu0
        %v3994 = vadd.f32 0.0, %v3993
        %v3995 = vpop.f32.mrb[0].mxu0
        %v3996 = vpop.f32.mrb[0].mxu0
        %v3997 = vadd.f32 0.0, %v3996
        %v3998 = vpop.f32.mrb[0].mxu0
        %3999 = vmatprep.mubr.bf16.mxu0 0
        %4000 = vmatmul.mubr.bf16.gmra.mrb[0].mxu0 %v3943
        %v4001 = vpop.f32.mrb[0].mxu0
        %v4002 = vadd.f32 0.0, %v4001
        %v4003 = vpop.f32.mrb[0].mxu0
        %v4004 = vpop.f32.mrb[0].mxu0
        %v4005 = vadd.f32 0.0, %v4004
        %v4006 = vpop.f32.mrb[0].mxu0
        %4007 = vmatprep.mubr.bf16.mxu0 0
        %4008 = vmatmul.mubr.bf16.gmra.mrb[0].mxu0 %v3946
        %v4009 = vpop.f32.mrb[0].mxu0
        %v4010 = vadd.f32 0.0, %v4009
        %v4011 = vpop.f32.mrb[0].mxu0
        %v4012 = vpop.f32.mrb[0].mxu0
        %v4013 = vadd.f32 0.0, %v4012
        %v4014 = vpop.f32.mrb[0].mxu0
        %4015 = vmatprep.mubr.bf16.mxu0 0
        %4016 = vmatmul.mubr.bf16.gmra.mrb[0].mxu0 %v3949
        %v4017 = vpop.f32.mrb[0].mxu0
        %v4018 = vadd.f32 0.0, %v4017
        %v4019 = vpop.f32.mrb[0].mxu0
        %v4020 = vpop.f32.mrb[0].mxu0
        %v4021 = vadd.f32 0.0, %v4020
        %v4022 = vpop.f32.mrb[0].mxu0
        %4023 = vdwg.mxu0
        %v4024 = vadd.f32 %v3911, %v3986
        %v4025 = vadd.f32 %v3912, %v3989
        %v4026 = vadd.f32 %v3913, %v3994
        %v4027 = vadd.f32 %v3914, %v3997
        %v4028 = vadd.f32 %v3915, %v4002
        %v4029 = vadd.f32 %v3916, %v4005
        %v4030 = vadd.f32 %v3917, %v4010
        %v4031 = vadd.f32 %v3918, %v4013
        %v4032 = vadd.f32 %v3919, %v4018
        %v4033 = vadd.f32 %v3920, %v4021
        %v4034 = vld [vmem:[#allocation2 + $0x105] sm:$0xff]
        %v4035 = vld [vmem:[#allocation2 + $0x10d] sm:$0xff]
        %v4036 = vld [vmem:[#allocation2 + $0x115] sm:$0xff]
        %v4037 = vld [vmem:[#allocation2 + $0x11d] sm:$0xff]
        %v4038 = vld [vmem:[#allocation2 + $0x125] sm:$0xff]
        %v4039 = vld [vmem:[#allocation2 + $0x12d] sm:$0xff]
        %v4040 = vld [vmem:[#allocation2 + $0x135] sm:$0xff]
        %v4041 = vld [vmem:[#allocation2 + $0x13d] sm:$0xff]
        %v4042 = vld [vmem:[#allocation2 + $0x145] sm:$0xff]
        %v4043 = vld [vmem:[#allocation2 + $0x14d] sm:$0xff]
        %v4044 = vpack.c.bf16 %v4035, %v4034
        %v4045 = vpack.c.bf16 %v4037, %v4036
        %v4046 = vpack.c.bf16 %v4039, %v4038
        %v4047 = vpack.c.bf16 %v4041, %v4040
        %v4048 = vpack.c.bf16 %v4043, %v4042
        %v4050 = vsel %vm378, %v4044, 0
        %v4053 = vsel %vm378, %v4045, 0
        %v4056 = vsel %vm378, %v4046, 0
        %v4059 = vsel %vm378, %v4047, 0
        %v4062 = vsel %vm378, %v4048, 0
        %4064 = vmatprep.subr.bf16.mxu0 0
        %4065 = vmatpush1.bf16.msra.mxu0 %v969
        %4066 = vmatprep.subr.bf16.mxu0 0
        %4067 = vmatpush1.bf16.msra.mxu0 0
        %4068 = vmatprep.subr.bf16.mxu0 0
        %4069 = vmatpush1.bf16.msra.mxu0 0
        %4070 = vmatprep.subr.bf16.mxu0 0
        %4071 = vmatpush1.bf16.msra.mxu0 0
        %4072 = vmatprep.subr.bf16.mxu0 0
        %4073 = vmatpush1.bf16.msra.mxu0 0
        %4074 = vmatprep.subr.bf16.mxu0 0
        %4075 = vmatpush1.bf16.msra.mxu0 0
        %4076 = vmatprep.subr.bf16.mxu0 0
        %4077 = vmatpush1.bf16.msra.mxu0 0
        %4078 = vmatprep.subr.bf16.mxu0 0
        %4079 = vmatpush1.bf16.msra.mxu0 0
        %4080 = vmatprep.subr.bf16.mxu0 0
        %4081 = vmatpush1.bf16.msra.mxu0 0
        %4082 = vmatprep.subr.bf16.mxu0 0
        %4083 = vmatpush1.bf16.msra.mxu0 0
        %4084 = vmatprep.subr.bf16.mxu0 0
        %4085 = vmatpush1.bf16.msra.mxu0 0
        %4086 = vmatprep.subr.bf16.mxu0 0
        %4087 = vmatpush1.bf16.msra.mxu0 0
        %4088 = vmatprep.subr.bf16.mxu0 0
        %4089 = vmatpush1.bf16.msra.mxu0 0
        %4090 = vmatprep.subr.bf16.mxu0 0
        %4091 = vmatpush1.bf16.msra.mxu0 0
        %4092 = vmatprep.subr.bf16.mxu0 0
        %4093 = vmatpush1.bf16.msra.mxu0 0
        %4094 = vmatprep.subr.bf16.mxu0 0
        %4095 = vmatpush1.bf16.msra.mxu0 0
        %4096 = vmatprep.mubr.bf16.mxu0 0
        %4097 = vmatmul.mubr.bf16.gmra.mrb[0].mxu0 %v4050
        %v4098 = vpop.f32.mrb[0].mxu0
        %v4099 = vadd.f32 0.0, %v4098
        %v4100 = vpop.f32.mrb[0].mxu0
        %v4101 = vpop.f32.mrb[0].mxu0
        %v4102 = vadd.f32 0.0, %v4101
        %v4103 = vpop.f32.mrb[0].mxu0
        %4104 = vmatprep.mubr.bf16.mxu0 0
        %4105 = vmatmul.mubr.bf16.gmra.mrb[0].mxu0 %v4053
        %v4106 = vpop.f32.mrb[0].mxu0
        %v4107 = vadd.f32 0.0, %v4106
        %v4108 = vpop.f32.mrb[0].mxu0
        %v4109 = vpop.f32.mrb[0].mxu0
        %v4110 = vadd.f32 0.0, %v4109
        %v4111 = vpop.f32.mrb[0].mxu0
        %4112 = vmatprep.mubr.bf16.mxu0 0
        %4113 = vmatmul.mubr.bf16.gmra.mrb[0].mxu0 %v4056
        %v4114 = vpop.f32.mrb[0].mxu0
        %v4115 = vadd.f32 0.0, %v4114
        %v4116 = vpop.f32.mrb[0].mxu0
        %v4117 = vpop.f32.mrb[0].mxu0
        %v4118 = vadd.f32 0.0, %v4117
        %v4119 = vpop.f32.mrb[0].mxu0
        %4120 = vmatprep.mubr.bf16.mxu0 0
        %4121 = vmatmul.mubr.bf16.gmra.mrb[0].mxu0 %v4059
        %v4122 = vpop.f32.mrb[0].mxu0
        %v4123 = vadd.f32 0.0, %v4122
        %v4124 = vpop.f32.mrb[0].mxu0
        %v4125 = vpop.f32.mrb[0].mxu0
        %v4126 = vadd.f32 0.0, %v4125
        %v4127 = vpop.f32.mrb[0].mxu0
        %4128 = vmatprep.mubr.bf16.mxu0 0
        %4129 = vmatmul.mubr.bf16.gmra.mrb[0].mxu0 %v4062
        %v4130 = vpop.f32.mrb[0].mxu0
        %v4131 = vadd.f32 0.0, %v4130
        %v4132 = vpop.f32.mrb[0].mxu0
        %v4133 = vpop.f32.mrb[0].mxu0
        %v4134 = vadd.f32 0.0, %v4133
        %v4135 = vpop.f32.mrb[0].mxu0
        %4136 = vdwg.mxu0
        %v4137 = vadd.f32 %v4024, %v4099
        %v4138 = vadd.f32 %v4025, %v4102
        %v4139 = vadd.f32 %v4026, %v4107
        %v4140 = vadd.f32 %v4027, %v4110
        %v4141 = vadd.f32 %v4028, %v4115
        %v4142 = vadd.f32 %v4029, %v4118
        %v4143 = vadd.f32 %v4030, %v4123
        %v4144 = vadd.f32 %v4031, %v4126
        %v4145 = vadd.f32 %v4032, %v4131
        %v4146 = vadd.f32 %v4033, %v4134
        %v4147 = vld [vmem:[#allocation2 + $0x106] sm:$0xff]
        %v4148 = vld [vmem:[#allocation2 + $0x10e] sm:$0xff]
        %v4149 = vld [vmem:[#allocation2 + $0x116] sm:$0xff]
        %v4150 = vld [vmem:[#allocation2 + $0x11e] sm:$0xff]
        %v4151 = vld [vmem:[#allocation2 + $0x126] sm:$0xff]
        %v4152 = vld [vmem:[#allocation2 + $0x12e] sm:$0xff]
        %v4153 = vld [vmem:[#allocation2 + $0x136] sm:$0xff]
        %v4154 = vld [vmem:[#allocation2 + $0x13e] sm:$0xff]
        %v4155 = vld [vmem:[#allocation2 + $0x146] sm:$0xff]
        %v4156 = vld [vmem:[#allocation2 + $0x14e] sm:$0xff]
        %v4157 = vpack.c.bf16 %v4148, %v4147
        %v4158 = vpack.c.bf16 %v4150, %v4149
        %v4159 = vpack.c.bf16 %v4152, %v4151
        %v4160 = vpack.c.bf16 %v4154, %v4153
        %v4161 = vpack.c.bf16 %v4156, %v4155
        %v4163 = vsel %vm378, %v4157, 0
        %v4166 = vsel %vm378, %v4158, 0
        %v4169 = vsel %vm378, %v4159, 0
        %v4172 = vsel %vm378, %v4160, 0
        %v4175 = vsel %vm378, %v4161, 0
        %4177 = vmatprep.subr.bf16.mxu0 0
        %4178 = vmatpush1.bf16.msra.mxu0 %v1085
        %4179 = vmatprep.subr.bf16.mxu0 0
        %4180 = vmatpush1.bf16.msra.mxu0 0
        %4181 = vmatprep.subr.bf16.mxu0 0
        %4182 = vmatpush1.bf16.msra.mxu0 0
        %4183 = vmatprep.subr.bf16.mxu0 0
        %4184 = vmatpush1.bf16.msra.mxu0 0
        %4185 = vmatprep.subr.bf16.mxu0 0
        %4186 = vmatpush1.bf16.msra.mxu0 0
        %4187 = vmatprep.subr.bf16.mxu0 0
        %4188 = vmatpush1.bf16.msra.mxu0 0
        %4189 = vmatprep.subr.bf16.mxu0 0
        %4190 = vmatpush1.bf16.msra.mxu0 0
        %4191 = vmatprep.subr.bf16.mxu0 0
        %4192 = vmatpush1.bf16.msra.mxu0 0
        %4193 = vmatprep.subr.bf16.mxu0 0
        %4194 = vmatpush1.bf16.msra.mxu0 0
        %4195 = vmatprep.subr.bf16.mxu0 0
        %4196 = vmatpush1.bf16.msra.mxu0 0
        %4197 = vmatprep.subr.bf16.mxu0 0
        %4198 = vmatpush1.bf16.msra.mxu0 0
        %4199 = vmatprep.subr.bf16.mxu0 0
        %4200 = vmatpush1.bf16.msra.mxu0 0
        %4201 = vmatprep.subr.bf16.mxu0 0
        %4202 = vmatpush1.bf16.msra.mxu0 0
        %4203 = vmatprep.subr.bf16.mxu0 0
        %4204 = vmatpush1.bf16.msra.mxu0 0
        %4205 = vmatprep.subr.bf16.mxu0 0
        %4206 = vmatpush1.bf16.msra.mxu0 0
        %4207 = vmatprep.subr.bf16.mxu0 0
        %4208 = vmatpush1.bf16.msra.mxu0 0
        %4209 = vmatprep.mubr.bf16.mxu0 0
        %4210 = vmatmul.mubr.bf16.gmra.mrb[0].mxu0 %v4163
        %v4211 = vpop.f32.mrb[0].mxu0
        %v4212 = vadd.f32 0.0, %v4211
        %v4213 = vpop.f32.mrb[0].mxu0
        %v4214 = vpop.f32.mrb[0].mxu0
        %v4215 = vadd.f32 0.0, %v4214
        %v4216 = vpop.f32.mrb[0].mxu0
        %4217 = vmatprep.mubr.bf16.mxu0 0
        %4218 = vmatmul.mubr.bf16.gmra.mrb[0].mxu0 %v4166
        %v4219 = vpop.f32.mrb[0].mxu0
        %v4220 = vadd.f32 0.0, %v4219
        %v4221 = vpop.f32.mrb[0].mxu0
        %v4222 = vpop.f32.mrb[0].mxu0
        %v4223 = vadd.f32 0.0, %v4222
        %v4224 = vpop.f32.mrb[0].mxu0
        %4225 = vmatprep.mubr.bf16.mxu0 0
        %4226 = vmatmul.mubr.bf16.gmra.mrb[0].mxu0 %v4169
        %v4227 = vpop.f32.mrb[0].mxu0
        %v4228 = vadd.f32 0.0, %v4227
        %v4229 = vpop.f32.mrb[0].mxu0
        %v4230 = vpop.f32.mrb[0].mxu0
        %v4231 = vadd.f32 0.0, %v4230
        %v4232 = vpop.f32.mrb[0].mxu0
        %4233 = vmatprep.mubr.bf16.mxu0 0
        %4234 = vmatmul.mubr.bf16.gmra.mrb[0].mxu0 %v4172
        %v4235 = vpop.f32.mrb[0].mxu0
        %v4236 = vadd.f32 0.0, %v4235
        %v4237 = vpop.f32.mrb[0].mxu0
        %v4238 = vpop.f32.mrb[0].mxu0
        %v4239 = vadd.f32 0.0, %v4238
        %v4240 = vpop.f32.mrb[0].mxu0
        %4241 = vmatprep.mubr.bf16.mxu0 0
        %4242 = vmatmul.mubr.bf16.gmra.mrb[0].mxu0 %v4175
        %v4243 = vpop.f32.mrb[0].mxu0
        %v4244 = vadd.f32 0.0, %v4243
        %v4245 = vpop.f32.mrb[0].mxu0
        %v4246 = vpop.f32.mrb[0].mxu0
        %v4247 = vadd.f32 0.0, %v4246
        %v4248 = vpop.f32.mrb[0].mxu0
        %4249 = vdwg.mxu0
        %v4250 = vadd.f32 %v4137, %v4212
        %v4251 = vadd.f32 %v4138, %v4215
        %v4252 = vadd.f32 %v4139, %v4220
        %v4253 = vadd.f32 %v4140, %v4223
        %v4254 = vadd.f32 %v4141, %v4228
        %v4255 = vadd.f32 %v4142, %v4231
        %v4256 = vadd.f32 %v4143, %v4236
        %v4257 = vadd.f32 %v4144, %v4239
        %v4258 = vadd.f32 %v4145, %v4244
        %v4259 = vadd.f32 %v4146, %v4247
        %v4260 = vld [vmem:[#allocation2 + $0x118] sm:$0xff]
        %v4261 = vld [vmem:[#allocation2 + $0x120] sm:$0xff]
        %v4262 = vld [vmem:[#allocation2 + $0x128] sm:$0xff]
        %v4263 = vld [vmem:[#allocation2 + $0x130] sm:$0xff]
        %v4264 = vld [vmem:[#allocation2 + $0x138] sm:$0xff]
        %v4265 = vld [vmem:[#allocation2 + $0x140] sm:$0xff]
        %v4266 = vld [vmem:[#allocation2 + $0x148] sm:$0xff]
        %v4267 = vld [vmem:[#allocation2 + $0x150] sm:$0xff]
        %v4268 = vld [vmem:[#allocation2 + $0x158] sm:$0xff]
        %v4269 = vld [vmem:[#allocation2 + $0x160] sm:$0xff]
        %v4270 = vpack.c.bf16 %v4261, %v4260
        %v4271 = vpack.c.bf16 %v4263, %v4262
        %v4272 = vpack.c.bf16 %v4265, %v4264
        %v4273 = vpack.c.bf16 %v4267, %v4266
        %v4274 = vpack.c.bf16 %v4269, %v4268
        %v4276 = vsel %vm378, %v4270, 0
        %v4279 = vsel %vm378, %v4271, 0
        %v4282 = vsel %vm378, %v4272, 0
        %v4285 = vsel %vm378, %v4273, 0
        %v4288 = vsel %vm378, %v4274, 0
        %4290 = vmatprep.subr.bf16.mxu0 0
        %4291 = vmatpush1.bf16.msra.mxu0 %v1201
        %4292 = vmatprep.subr.bf16.mxu0 0
        %4293 = vmatpush1.bf16.msra.mxu0 0
        %4294 = vmatprep.subr.bf16.mxu0 0
        %4295 = vmatpush1.bf16.msra.mxu0 0
        %4296 = vmatprep.subr.bf16.mxu0 0
        %4297 = vmatpush1.bf16.msra.mxu0 0
        %4298 = vmatprep.subr.bf16.mxu0 0
        %4299 = vmatpush1.bf16.msra.mxu0 0
        %4300 = vmatprep.subr.bf16.mxu0 0
        %4301 = vmatpush1.bf16.msra.mxu0 0
        %4302 = vmatprep.subr.bf16.mxu0 0
        %4303 = vmatpush1.bf16.msra.mxu0 0
        %4304 = vmatprep.subr.bf16.mxu0 0
        %4305 = vmatpush1.bf16.msra.mxu0 0
        %4306 = vmatprep.subr.bf16.mxu0 0
        %4307 = vmatpush1.bf16.msra.mxu0 0
        %4308 = vmatprep.subr.bf16.mxu0 0
        %4309 = vmatpush1.bf16.msra.mxu0 0
        %4310 = vmatprep.subr.bf16.mxu0 0
        %4311 = vmatpush1.bf16.msra.mxu0 0
        %4312 = vmatprep.subr.bf16.mxu0 0
        %4313 = vmatpush1.bf16.msra.mxu0 0
        %4314 = vmatprep.subr.bf16.mxu0 0
        %4315 = vmatpush1.bf16.msra.mxu0 0
        %4316 = vmatprep.subr.bf16.mxu0 0
        %4317 = vmatpush1.bf16.msra.mxu0 0
        %4318 = vmatprep.subr.bf16.mxu0 0
        %4319 = vmatpush1.bf16.msra.mxu0 0
        %4320 = vmatprep.subr.bf16.mxu0 0
        %4321 = vmatpush1.bf16.msra.mxu0 0
        %4322 = vmatprep.mubr.bf16.mxu0 0
        %4323 = vmatmul.mubr.bf16.gmra.mrb[0].mxu0 %v4276
        %v4324 = vpop.f32.mrb[0].mxu0
        %v4325 = vadd.f32 0.0, %v4324
        %v4326 = vpop.f32.mrb[0].mxu0
        %v4327 = vpop.f32.mrb[0].mxu0
        %v4328 = vadd.f32 0.0, %v4327
        %v4329 = vpop.f32.mrb[0].mxu0
        %4330 = vmatprep.mubr.bf16.mxu0 0
        %4331 = vmatmul.mubr.bf16.gmra.mrb[0].mxu0 %v4279
        %v4332 = vpop.f32.mrb[0].mxu0
        %v4333 = vadd.f32 0.0, %v4332
        %v4334 = vpop.f32.mrb[0].mxu0
        %v4335 = vpop.f32.mrb[0].mxu0
        %v4336 = vadd.f32 0.0, %v4335
        %v4337 = vpop.f32.mrb[0].mxu0
        %4338 = vmatprep.mubr.bf16.mxu0 0
        %4339 = vmatmul.mubr.bf16.gmra.mrb[0].mxu0 %v4282
        %v4340 = vpop.f32.mrb[0].mxu0
        %v4341 = vadd.f32 0.0, %v4340
        %v4342 = vpop.f32.mrb[0].mxu0
        %v4343 = vpop.f32.mrb[0].mxu0
        %v4344 = vadd.f32 0.0, %v4343
        %v4345 = vpop.f32.mrb[0].mxu0
        %4346 = vmatprep.mubr.bf16.mxu0 0
        %4347 = vmatmul.mubr.bf16.gmra.mrb[0].mxu0 %v4285
        %v4348 = vpop.f32.mrb[0].mxu0
        %v4349 = vadd.f32 0.0, %v4348
        %v4350 = vpop.f32.mrb[0].mxu0
        %v4351 = vpop.f32.mrb[0].mxu0
        %v4352 = vadd.f32 0.0, %v4351
        %v4353 = vpop.f32.mrb[0].mxu0
        %4354 = vmatprep.mubr.bf16.mxu0 0
        %4355 = vmatmul.mubr.bf16.gmra.mrb[0].mxu0 %v4288
        %v4356 = vpop.f32.mrb[0].mxu0
        %v4357 = vadd.f32 0.0, %v4356
        %v4358 = vpop.f32.mrb[0].mxu0
        %v4359 = vpop.f32.mrb[0].mxu0
        %v4360 = vadd.f32 0.0, %v4359
        %v4361 = vpop.f32.mrb[0].mxu0
        %4362 = vdwg.mxu0
        %v4363 = vadd.f32 %v4250, %v4325
        %v4364 = vadd.f32 %v4251, %v4328
        %v4365 = vadd.f32 %v4252, %v4333
        %v4366 = vadd.f32 %v4253, %v4336
        %v4367 = vadd.f32 %v4254, %v4341
        %v4368 = vadd.f32 %v4255, %v4344
        %v4369 = vadd.f32 %v4256, %v4349
        %v4370 = vadd.f32 %v4257, %v4352
        %v4371 = vadd.f32 %v4258, %v4357
        %v4372 = vadd.f32 %v4259, %v4360
        %v4373 = vld [vmem:[#allocation2 + $0x119] sm:$0xff]
        %v4374 = vld [vmem:[#allocation2 + $0x121] sm:$0xff]
        %v4375 = vld [vmem:[#allocation2 + $0x129] sm:$0xff]
        %v4376 = vld [vmem:[#allocation2 + $0x131] sm:$0xff]
        %v4377 = vld [vmem:[#allocation2 + $0x139] sm:$0xff]
        %v4378 = vld [vmem:[#allocation2 + $0x141] sm:$0xff]
        %v4379 = vld [vmem:[#allocation2 + $0x149] sm:$0xff]
        %v4380 = vld [vmem:[#allocation2 + $0x151] sm:$0xff]
        %v4381 = vld [vmem:[#allocation2 + $0x159] sm:$0xff]
        %v4382 = vld [vmem:[#allocation2 + $0x161] sm:$0xff]
        %v4383 = vpack.c.bf16 %v4374, %v4373
        %v4384 = vpack.c.bf16 %v4376, %v4375
        %v4385 = vpack.c.bf16 %v4378, %v4377
        %v4386 = vpack.c.bf16 %v4380, %v4379
        %v4387 = vpack.c.bf16 %v4382, %v4381
        %v4389 = vsel %vm378, %v4383, 0
        %v4392 = vsel %vm378, %v4384, 0
        %v4395 = vsel %vm378, %v4385, 0
        %v4398 = vsel %vm378, %v4386, 0
        %v4401 = vsel %vm378, %v4387, 0
        %4403 = vmatprep.subr.bf16.mxu0 0
        %4404 = vmatpush1.bf16.msra.mxu0 %v1317
        %4405 = vmatprep.subr.bf16.mxu0 0
        %4406 = vmatpush1.bf16.msra.mxu0 0
        %4407 = vmatprep.subr.bf16.mxu0 0
        %4408 = vmatpush1.bf16.msra.mxu0 0
        %4409 = vmatprep.subr.bf16.mxu0 0
        %4410 = vmatpush1.bf16.msra.mxu0 0
        %4411 = vmatprep.subr.bf16.mxu0 0
        %4412 = vmatpush1.bf16.msra.mxu0 0
        %4413 = vmatprep.subr.bf16.mxu0 0
        %4414 = vmatpush1.bf16.msra.mxu0 0
        %4415 = vmatprep.subr.bf16.mxu0 0
        %4416 = vmatpush1.bf16.msra.mxu0 0
        %4417 = vmatprep.subr.bf16.mxu0 0
        %4418 = vmatpush1.bf16.msra.mxu0 0
        %4419 = vmatprep.subr.bf16.mxu0 0
        %4420 = vmatpush1.bf16.msra.mxu0 0
        %4421 = vmatprep.subr.bf16.mxu0 0
        %4422 = vmatpush1.bf16.msra.mxu0 0
        %4423 = vmatprep.subr.bf16.mxu0 0
        %4424 = vmatpush1.bf16.msra.mxu0 0
        %4425 = vmatprep.subr.bf16.mxu0 0
        %4426 = vmatpush1.bf16.msra.mxu0 0
        %4427 = vmatprep.subr.bf16.mxu0 0
        %4428 = vmatpush1.bf16.msra.mxu0 0
        %4429 = vmatprep.subr.bf16.mxu0 0
        %4430 = vmatpush1.bf16.msra.mxu0 0
        %4431 = vmatprep.subr.bf16.mxu0 0
        %4432 = vmatpush1.bf16.msra.mxu0 0
        %4433 = vmatprep.subr.bf16.mxu0 0
        %4434 = vmatpush1.bf16.msra.mxu0 0
        %4435 = vmatprep.mubr.bf16.mxu0 0
        %4436 = vmatmul.mubr.bf16.gmra.mrb[0].mxu0 %v4389
        %v4437 = vpop.f32.mrb[0].mxu0
        %v4438 = vadd.f32 0.0, %v4437
        %v4439 = vpop.f32.mrb[0].mxu0
        %v4440 = vpop.f32.mrb[0].mxu0
        %v4441 = vadd.f32 0.0, %v4440
        %v4442 = vpop.f32.mrb[0].mxu0
        %4443 = vmatprep.mubr.bf16.mxu0 0
        %4444 = vmatmul.mubr.bf16.gmra.mrb[0].mxu0 %v4392
        %v4445 = vpop.f32.mrb[0].mxu0
        %v4446 = vadd.f32 0.0, %v4445
        %v4447 = vpop.f32.mrb[0].mxu0
        %v4448 = vpop.f32.mrb[0].mxu0
        %v4449 = vadd.f32 0.0, %v4448
        %v4450 = vpop.f32.mrb[0].mxu0
        %4451 = vmatprep.mubr.bf16.mxu0 0
        %4452 = vmatmul.mubr.bf16.gmra.mrb[0].mxu0 %v4395
        %v4453 = vpop.f32.mrb[0].mxu0
        %v4454 = vadd.f32 0.0, %v4453
        %v4455 = vpop.f32.mrb[0].mxu0
        %v4456 = vpop.f32.mrb[0].mxu0
        %v4457 = vadd.f32 0.0, %v4456
        %v4458 = vpop.f32.mrb[0].mxu0
        %4459 = vmatprep.mubr.bf16.mxu0 0
        %4460 = vmatmul.mubr.bf16.gmra.mrb[0].mxu0 %v4398
        %v4461 = vpop.f32.mrb[0].mxu0
        %v4462 = vadd.f32 0.0, %v4461
        %v4463 = vpop.f32.mrb[0].mxu0
        %v4464 = vpop.f32.mrb[0].mxu0
        %v4465 = vadd.f32 0.0, %v4464
        %v4466 = vpop.f32.mrb[0].mxu0
        %4467 = vmatprep.mubr.bf16.mxu0 0
        %4468 = vmatmul.mubr.bf16.gmra.mrb[0].mxu0 %v4401
        %v4469 = vpop.f32.mrb[0].mxu0
        %v4470 = vadd.f32 0.0, %v4469
        %v4471 = vpop.f32.mrb[0].mxu0
        %v4472 = vpop.f32.mrb[0].mxu0
        %v4473 = vadd.f32 0.0, %v4472
        %v4474 = vpop.f32.mrb[0].mxu0
        %4475 = vdwg.mxu0
        %v4476 = vadd.f32 %v4363, %v4438
        %v4477 = vadd.f32 %v4364, %v4441
        %v4478 = vadd.f32 %v4365, %v4446
        %v4479 = vadd.f32 %v4366, %v4449
        %v4480 = vadd.f32 %v4367, %v4454
        %v4481 = vadd.f32 %v4368, %v4457
        %v4482 = vadd.f32 %v4369, %v4462
        %v4483 = vadd.f32 %v4370, %v4465
        %v4484 = vadd.f32 %v4371, %v4470
        %v4485 = vadd.f32 %v4372, %v4473
        %v4486 = vld [vmem:[#allocation2 + $0x11a] sm:$0xff]
        %v4487 = vld [vmem:[#allocation2 + $0x122] sm:$0xff]
        %v4488 = vld [vmem:[#allocation2 + $0x12a] sm:$0xff]
        %v4489 = vld [vmem:[#allocation2 + $0x132] sm:$0xff]
        %v4490 = vld [vmem:[#allocation2 + $0x13a] sm:$0xff]
        %v4491 = vld [vmem:[#allocation2 + $0x142] sm:$0xff]
        %v4492 = vld [vmem:[#allocation2 + $0x14a] sm:$0xff]
        %v4493 = vld [vmem:[#allocation2 + $0x152] sm:$0xff]
        %v4494 = vld [vmem:[#allocation2 + $0x15a] sm:$0xff]
        %v4495 = vld [vmem:[#allocation2 + $0x162] sm:$0xff]
        %v4496 = vpack.c.bf16 %v4487, %v4486
        %v4497 = vpack.c.bf16 %v4489, %v4488
        %v4498 = vpack.c.bf16 %v4491, %v4490
        %v4499 = vpack.c.bf16 %v4493, %v4492
        %v4500 = vpack.c.bf16 %v4495, %v4494
        %v4502 = vsel %vm378, %v4496, 0
        %v4505 = vsel %vm378, %v4497, 0
        %v4508 = vsel %vm378, %v4498, 0
        %v4511 = vsel %vm378, %v4499, 0
        %v4514 = vsel %vm378, %v4500, 0
        %4516 = vmatprep.subr.bf16.mxu0 0
        %4517 = vmatpush1.bf16.msra.mxu0 %v1433
        %4518 = vmatprep.subr.bf16.mxu0 0
        %4519 = vmatpush1.bf16.msra.mxu0 0
        %4520 = vmatprep.subr.bf16.mxu0 0
        %4521 = vmatpush1.bf16.msra.mxu0 0
        %4522 = vmatprep.subr.bf16.mxu0 0
        %4523 = vmatpush1.bf16.msra.mxu0 0
        %4524 = vmatprep.subr.bf16.mxu0 0
        %4525 = vmatpush1.bf16.msra.mxu0 0
        %4526 = vmatprep.subr.bf16.mxu0 0
        %4527 = vmatpush1.bf16.msra.mxu0 0
        %4528 = vmatprep.subr.bf16.mxu0 0
        %4529 = vmatpush1.bf16.msra.mxu0 0
        %4530 = vmatprep.subr.bf16.mxu0 0
        %4531 = vmatpush1.bf16.msra.mxu0 0
        %4532 = vmatprep.subr.bf16.mxu0 0
        %4533 = vmatpush1.bf16.msra.mxu0 0
        %4534 = vmatprep.subr.bf16.mxu0 0
        %4535 = vmatpush1.bf16.msra.mxu0 0
        %4536 = vmatprep.subr.bf16.mxu0 0
        %4537 = vmatpush1.bf16.msra.mxu0 0
        %4538 = vmatprep.subr.bf16.mxu0 0
        %4539 = vmatpush1.bf16.msra.mxu0 0
        %4540 = vmatprep.subr.bf16.mxu0 0
        %4541 = vmatpush1.bf16.msra.mxu0 0
        %4542 = vmatprep.subr.bf16.mxu0 0
        %4543 = vmatpush1.bf16.msra.mxu0 0
        %4544 = vmatprep.subr.bf16.mxu0 0
        %4545 = vmatpush1.bf16.msra.mxu0 0
        %4546 = vmatprep.subr.bf16.mxu0 0
        %4547 = vmatpush1.bf16.msra.mxu0 0
        %4548 = vmatprep.mubr.bf16.mxu0 0
        %4549 = vmatmul.mubr.bf16.gmra.mrb[0].mxu0 %v4502
        %v4550 = vpop.f32.mrb[0].mxu0
        %v4551 = vadd.f32 0.0, %v4550
        %v4552 = vpop.f32.mrb[0].mxu0
        %v4553 = vpop.f32.mrb[0].mxu0
        %v4554 = vadd.f32 0.0, %v4553
        %v4555 = vpop.f32.mrb[0].mxu0
        %4556 = vmatprep.mubr.bf16.mxu0 0
        %4557 = vmatmul.mubr.bf16.gmra.mrb[0].mxu0 %v4505
        %v4558 = vpop.f32.mrb[0].mxu0
        %v4559 = vadd.f32 0.0, %v4558
        %v4560 = vpop.f32.mrb[0].mxu0
        %v4561 = vpop.f32.mrb[0].mxu0
        %v4562 = vadd.f32 0.0, %v4561
        %v4563 = vpop.f32.mrb[0].mxu0
        %4564 = vmatprep.mubr.bf16.mxu0 0
        %4565 = vmatmul.mubr.bf16.gmra.mrb[0].mxu0 %v4508
        %v4566 = vpop.f32.mrb[0].mxu0
        %v4567 = vadd.f32 0.0, %v4566
        %v4568 = vpop.f32.mrb[0].mxu0
        %v4569 = vpop.f32.mrb[0].mxu0
        %v4570 = vadd.f32 0.0, %v4569
        %v4571 = vpop.f32.mrb[0].mxu0
        %4572 = vmatprep.mubr.bf16.mxu0 0
        %4573 = vmatmul.mubr.bf16.gmra.mrb[0].mxu0 %v4511
        %v4574 = vpop.f32.mrb[0].mxu0
        %v4575 = vadd.f32 0.0, %v4574
        %v4576 = vpop.f32.mrb[0].mxu0
        %v4577 = vpop.f32.mrb[0].mxu0
        %v4578 = vadd.f32 0.0, %v4577
        %v4579 = vpop.f32.mrb[0].mxu0
        %4580 = vmatprep.mubr.bf16.mxu0 0
        %4581 = vmatmul.mubr.bf16.gmra.mrb[0].mxu0 %v4514
        %v4582 = vpop.f32.mrb[0].mxu0
        %v4583 = vadd.f32 0.0, %v4582
        %v4584 = vpop.f32.mrb[0].mxu0
        %v4585 = vpop.f32.mrb[0].mxu0
        %v4586 = vadd.f32 0.0, %v4585
        %v4587 = vpop.f32.mrb[0].mxu0
        %4588 = vdwg.mxu0
        %v4589 = vadd.f32 %v4476, %v4551
        %v4590 = vadd.f32 %v4477, %v4554
        %v4591 = vadd.f32 %v4478, %v4559
        %v4592 = vadd.f32 %v4479, %v4562
        %v4593 = vadd.f32 %v4480, %v4567
        %v4594 = vadd.f32 %v4481, %v4570
        %v4595 = vadd.f32 %v4482, %v4575
        %v4596 = vadd.f32 %v4483, %v4578
        %v4597 = vadd.f32 %v4484, %v4583
        %v4598 = vadd.f32 %v4485, %v4586
        %4599 = vst [vmem:[%s263 + $0xf0] sm:$0xff] %v4589
        %4600 = vst [vmem:[%s263 + $0xf8] sm:$0xff] %v4590
        %4601 = vst [vmem:[%s263 + $0x100] sm:$0xff] %v4591
        %4602 = vst [vmem:[%s263 + $0x108] sm:$0xff] %v4592
        %4603 = vst [vmem:[%s263 + $0x110] sm:$0xff] %v4593
        %4604 = vst [vmem:[%s263 + $0x118] sm:$0xff] %v4594
        %4605 = vst [vmem:[%s263 + $0x120] sm:$0xff] %v4595
        %4606 = vst [vmem:[%s263 + $0x128] sm:$0xff] %v4596
        %4607 = vst [vmem:[%s263 + $0x130] sm:$0xff] %v4597
        %4608 = vst [vmem:[%s263 + $0x138] sm:$0xff] %v4598
        %s4609 = sand.u32 %s142, 1
        %s4610 = scalar_lea.sflag [#allocation4], %s4609
        %s4611 = sand.u32 %s142, 1
        %s4612 = smul.addr %s4611, 320
        %s4613 = scalar_lea.vmem [#allocation3], %s4612
        // Predicated region
        $region37: #{tpu_custom_call.1} parent=35 // pred_check
          %p4614 = pneg %p152
        $region38: #{tpu_custom_call.1} parent=35 // pred_check_branch
          %4616 = sbr.rel (%p4614) target = $region40
        $region39: #{tpu_custom_call.1} parent=35 // pred_region
          %s4617 = smul.u32 40, %s23
          %s4619 = ssub.s32 5120, 5120
          %4620 = vsyncadd %s4610, %s4619
          %s4621 = smul.addr %s22, 40
          %s4622 = sadd.s32 %s4617, %s4621
          %s4623 = smul.addr %s4622, 128
          %s4624 = scalar_lea.hbm %s4, %s4623
          %s4625 = sshll.u32 %s4613, 4
          %s4626 = int_to_ptr.vmem [resolvable:$true] %s4625
          %4631 = dma.vmem_to_hbm [thread:$0]  %s4626, 5120, %s4624, %s4610, 128, 128, 8
        $region40: #{tpu_custom_call.1} parent=35 // pred_fallthru
          _
      $region36: #{tpu_custom_call.1} parent=5 // pred_fallthru
        _
      %p4632 = scmp.le.s32.totalorder 2, %s13
      // Predicated region
      $region41: #{tpu_custom_call.1} parent=5 // pred_check
        %p4633 = pneg %p4632
      $region42: #{tpu_custom_call.1} parent=5 // pred_check_branch
        %4635 = sbr.rel (%p4633) target = $region44
      $region43: #{tpu_custom_call.1} parent=5 // pred_region
        %s4636 = ssub.s32 %s13, 2
        // Predicated region
        $region45: #{tpu_custom_call.1} parent=43 // pred_check
          %p4637 = pneg %p158
        $region46: #{tpu_custom_call.1} parent=43 // pred_check_branch
          %4639 = sbr.rel (%p4637) target = $region48
        $region47: #{tpu_custom_call.1} parent=43 // pred_region
          %s4640 = sand.u32 %s143, 1
          %s4641 = scalar_lea.sflag [#allocation4], %s4640
          %s4642 = sand.u32 %s143, 1
          %s4643 = smul.addr %s4642, 320
          %s4644 = scalar_lea.vmem [#allocation3], %s4643
          %4645 = dma.done %s4641, 5120
        $region48: #{tpu_custom_call.1} parent=43 // pred_fallthru
          _
      $region44: #{tpu_custom_call.1} parent=5 // pred_fallthru
        _
    $region6: #{tpu_custom_call.1} parent=1 // loop_footer
      %s17 = sadd.s32 1, %s13
    $region7: #{tpu_custom_call.1} parent=1 // loop_footer_branch
      %12 = sbr.rel target = $region3
    $region8: #{tpu_custom_call.1} parent=1 // loop_exit
      _
    %4646 = vsyncpa [#allocation4], 1
    %s4647 = scalar_lea.sflag [#allocation4], 1
    %4648 = vsyncpa %s4647, 1

</llo_original>
